<compile_context>
chip_gen: v5e
topology: v5e:2x2
jax: 0.10.0
libtpu: 0.0.40
codegen_flags: <defaults>
</compile_context>

<pallas_src>
import functools
import math

import numpy as np
import jax
import jax.numpy as jnp
from jax.experimental import pallas as pl
from jax.experimental.pallas import tpu as pltpu


# ----------------------------------------------------------------------------
# Tiling helpers / compiler params
# ----------------------------------------------------------------------------
VMEM_LIMIT_BYTES = 32 * 1024 * 1024   # safe on v5e/v6e (128 MiB) and v7x (64 MiB)
MAX_ROW_TILE = 1024                   # row tile for matmul / LN kernels
MAX_ATTN_BATCH = 128                  # (batch*head) chunk for attention kernel
MAX_LANE_TILE = 4096                  # lane tile for the graph-propagation kernel
NEG_INF = -1e9                        # diagonal attention mask value


def _cparams(semantics):
    return pltpu.CompilerParams(dimension_semantics=semantics,
                                vmem_limit_bytes=VMEM_LIMIT_BYTES)


def _row_plan(M, max_rows):
    """Pick a row tile: full extent if small, else max_rows (multiple of 8/128)."""
    tile = min(M, max_rows)
    Mp = ((M + tile - 1) // tile) * tile
    return tile, Mp, Mp // tile


def _pad_rows(x, Mp):
    M = x.shape[0]
    if Mp == M:
        return x
    pad = [(0, Mp - M)] + [(0, 0)] * (x.ndim - 1)
    return jnp.pad(x, pad)


# ----------------------------------------------------------------------------
# In-kernel helpers
# ----------------------------------------------------------------------------
def _mm(a, b):
    """bf16 MXU matmul with f32 accumulation; degenerate K==1 stays on the VPU."""
    if a.shape[-1] == 1:
        return a * b.astype(jnp.float32)
    return jnp.dot(a.astype(jnp.bfloat16), b.astype(jnp.bfloat16),
                   preferred_element_type=jnp.float32)


def _activate(y, act):
    if act == "relu":
        return jnp.maximum(y, 0.0)
    if act == "elu":
        return jnp.where(y > 0.0, y, jnp.exp(jnp.minimum(y, 0.0)) - 1.0)
    return y


def _layer_norm(x, w, b, eps=1e-5):
    mu = jnp.mean(x, axis=-1, keepdims=True)
    xc = x - mu
    var = jnp.mean(xc * xc, axis=-1, keepdims=True)
    return xc * jax.lax.rsqrt(var + eps) * w + b


# ----------------------------------------------------------------------------
# Fused (LN) -> Linear -> act -> (residual) kernel
# ----------------------------------------------------------------------------
def _fused_linear_kernel(*refs, act, has_ln, res_mode):
    i = 0
    x = refs[i][...].astype(jnp.float32); i += 1
    if has_ln:
        x = _layer_norm(x, refs[i][...], refs[i + 1][...]); i += 2
    w_ref, b_ref = refs[i], refs[i + 1]; i += 2
    y = _mm(x, w_ref[...]) + b_ref[...]
    y = _activate(y, act)
    if res_mode == "add":
        y = y + refs[i][...].astype(jnp.float32); i += 1
    elif res_mode == "linear":
        rx = refs[i][...].astype(jnp.float32)
        y = y + _mm(rx, refs[i + 1][...]) + refs[i + 2][...]
        i += 3
    refs[-1][...] = y.astype(refs[-1].dtype)


def fused_linear(x, w, b, *, act="none", ln=None, res=None, res_linear=None):
    """y = act(LN?(x) @ w + b) [+ res] [+ res_x @ res_w + res_b]."""
    lead = x.shape[:-1]
    K = x.shape[-1]
    O = w.shape[1]
    M = int(np.prod(lead)) if lead else 1
    tile, Mp, ntiles = _row_plan(M, MAX_ROW_TILE)

    inputs = [_pad_rows(x.reshape(M, K), Mp)]
    in_specs = [pl.BlockSpec((tile, K), lambda i: (i, 0))]
    if ln is not None:
        lnw, lnb = ln
        inputs += [lnw.reshape(1, K), lnb.reshape(1, K)]
        in_specs += [pl.BlockSpec((1, K), lambda i: (0, 0)),
                     pl.BlockSpec((1, K), lambda i: (0, 0))]
    inputs += [w, b.reshape(1, O)]
    in_specs += [pl.BlockSpec((K, O), lambda i: (0, 0)),
                 pl.BlockSpec((1, O), lambda i: (0, 0))]

    res_mode = "none"
    if res is not None:
        res_mode = "add"
        inputs.append(_pad_rows(res.reshape(M, O), Mp))
        in_specs.append(pl.BlockSpec((tile, O), lambda i: (i, 0)))
    elif res_linear is not None:
        res_mode = "linear"
        rx, rw, rb = res_linear
        Kr = rx.shape[-1]
        inputs += [_pad_rows(rx.reshape(M, Kr), Mp), rw, rb.reshape(1, O)]
        in_specs += [pl.BlockSpec((tile, Kr), lambda i: (i, 0)),
                     pl.BlockSpec((Kr, O), lambda i: (0, 0)),
                     pl.BlockSpec((1, O), lambda i: (0, 0))]

    out = pl.pallas_call(
        functools.partial(_fused_linear_kernel, act=act, has_ln=ln is not None,
                          res_mode=res_mode),
        out_shape=jax.ShapeDtypeStruct((Mp, O), jnp.float32),
        grid=(ntiles,),
        in_specs=in_specs,
        out_specs=pl.BlockSpec((tile, O), lambda i: (i, 0)),
        compiler_params=_cparams(("parallel",)),
    )(*inputs)
    if Mp != M:
        out = out[:M]
    return out.reshape(*lead, O)


# ----------------------------------------------------------------------------
# Chained MLP kernel (h_enc, u_enc, readout) — one pallas_call per MLP
# ----------------------------------------------------------------------------
def _mlp_kernel(*refs, acts):
    y = refs[0][...].astype(jnp.float32)
    for li, act in enumerate(acts):
        w_ref, b_ref = refs[1 + 2 * li], refs[2 + 2 * li]
        y = _activate(_mm(y, w_ref[...]) + b_ref[...], act)
    refs[-1][...] = y.astype(refs[-1].dtype)


def mlp(x, layers, acts):
    """Apply a chain of (Linear -> activation) layers in a single fused kernel.
    layers: [(w, b), ...] with w: [in, out]; acts: per-layer activation."""
    lead = x.shape[:-1]
    K = x.shape[-1]
    O = layers[-1][0].shape[1]
    M = int(np.prod(lead)) if lead else 1
    tile, Mp, ntiles = _row_plan(M, MAX_ROW_TILE)

    inputs = [_pad_rows(x.reshape(M, K), Mp)]
    in_specs = [pl.BlockSpec((tile, K), lambda i: (i, 0))]
    for (w, bvec) in layers:
        Ki, Oi = w.shape
        inputs += [w, bvec.reshape(1, Oi)]
        in_specs += [pl.BlockSpec((Ki, Oi), lambda i: (0, 0)),
                     pl.BlockSpec((1, Oi), lambda i: (0, 0))]

    out = pl.pallas_call(
        functools.partial(_mlp_kernel, acts=tuple(acts)),
        out_shape=jax.ShapeDtypeStruct((Mp, O), jnp.float32),
        grid=(ntiles,),
        in_specs=in_specs,
        out_specs=pl.BlockSpec((tile, O), lambda i: (i, 0)),
        compiler_params=_cparams(("parallel",)),
    )(*inputs)
    if Mp != M:
        out = out[:M]
    return out.reshape(*lead, O)


# ----------------------------------------------------------------------------
# Batched scaled-dot-product attention kernel
# ----------------------------------------------------------------------------
def _attn_kernel(*refs, scale, has_mask):
    q_ref, k_ref, v_ref = refs[0], refs[1], refs[2]
    o_ref = refs[-1]
    s = jnp.einsum("bqd,bkd->bqk",
                   q_ref[...].astype(jnp.bfloat16),
                   k_ref[...].astype(jnp.bfloat16),
                   preferred_element_type=jnp.float32) * scale
    if has_mask:
        s = s + refs[3][...]                      # additive bias [L, L]
    s = s - jnp.max(s, axis=-1, keepdims=True)
    p = jnp.exp(s)
    p = p * pl.reciprocal(jnp.sum(p, axis=-1, keepdims=True), approx=True)
    o = jnp.einsum("bqk,bkd->bqd",
                   p.astype(jnp.bfloat16),
                   v_ref[...].astype(jnp.bfloat16),
                   preferred_element_type=jnp.float32)
    o_ref[...] = o.astype(o_ref.dtype)


def scaled_dot_attention(q, k, v, mask_bias=None):
    """q, k, v: [BH, L, hd]; mask_bias: optional additive float bias [L, L]."""
    BH, L, hd = q.shape
    tile, BHp, ntiles = _row_plan(BH, MAX_ATTN_BATCH)
    blk = pl.BlockSpec((tile, L, hd), lambda i: (i, 0, 0))
    inputs = [_pad_rows(q, BHp), _pad_rows(k, BHp), _pad_rows(v, BHp)]
    in_specs = [blk, blk, blk]
    if mask_bias is not None:
        inputs.append(mask_bias)
        in_specs.append(pl.BlockSpec((L, L), lambda i: (0, 0)))
    out = pl.pallas_call(
        functools.partial(_attn_kernel, scale=1.0 / math.sqrt(hd),
                          has_mask=mask_bias is not None),
        out_shape=jax.ShapeDtypeStruct((BHp, L, hd), jnp.float32),
        grid=(ntiles,),
        in_specs=in_specs,
        out_specs=pl.BlockSpec((tile, L, hd), lambda i: (i, 0, 0)),
        compiler_params=_cparams(("parallel",)),
    )(*inputs)
    if BHp != BH:
        out = out[:BH]
    return out


# ----------------------------------------------------------------------------
# Learned adjacency: softmax(relu(src @ tgt^T), axis=-1)
# ----------------------------------------------------------------------------
def _adj_kernel(s_ref, t_ref, o_ref):
    logits = jax.lax.dot_general(s_ref[...], t_ref[...],
                                 (((1,), (1,)), ((), ())),
                                 preferred_element_type=jnp.float32)
    logits = jnp.maximum(logits, 0.0)
    logits = logits - jnp.max(logits, axis=-1, keepdims=True)
    p = jnp.exp(logits)
    o_ref[...] = p * pl.reciprocal(jnp.sum(p, axis=-1, keepdims=True), approx=True)


def learned_adj(src, tgt):
    n, e = src.shape
    return pl.pallas_call(
        _adj_kernel,
        out_shape=jax.ShapeDtypeStruct((n, n), jnp.float32),
        grid=(1,),
        in_specs=[pl.BlockSpec((n, e), lambda i: (0, 0)),
                  pl.BlockSpec((n, e), lambda i: (0, 0))],
        out_specs=pl.BlockSpec((n, n), lambda i: (0, 0)),
        compiler_params=_cparams(("arbitrary",)),
    )(src, tgt)


# ----------------------------------------------------------------------------
# Dense graph convolution of order 2 (lane-dense A @ H matmuls + channel mix)
# ----------------------------------------------------------------------------
def _gprop_kernel(a_ref, h_ref, x1_ref, x2_ref):
    a = a_ref[...].astype(jnp.bfloat16)
    x1 = jnp.dot(a, h_ref[...].astype(jnp.bfloat16),
                 preferred_element_type=jnp.float32)
    x2 = jnp.dot(a, x1.astype(jnp.bfloat16),
                 preferred_element_type=jnp.float32)
    x1_ref[...] = x1
    x2_ref[...] = x2


def graph_propagate(adj, h_nf):
    """x1 = A @ H, x2 = A @ x1 with H laid out as [n, b*s*f] (lane-dense)."""
    n, BF = h_nf.shape
    tile, BFp, ntiles = _row_plan(BF, MAX_LANE_TILE)
    if BFp != BF:
        h_nf = jnp.pad(h_nf, ((0, 0), (0, BFp - BF)))
    x1, x2 = pl.pallas_call(
        _gprop_kernel,
        out_shape=(jax.ShapeDtypeStruct((n, BFp), jnp.float32),
                   jax.ShapeDtypeStruct((n, BFp), jnp.float32)),
        grid=(ntiles,),
        in_specs=[pl.BlockSpec((n, n), lambda i: (0, 0)),
                  pl.BlockSpec((n, tile), lambda i: (0, i))],
        out_specs=(pl.BlockSpec((n, tile), lambda i: (0, i)),
                   pl.BlockSpec((n, tile), lambda i: (0, i))),
        compiler_params=_cparams(("parallel",)),
    )(adj, h_nf)
    if BFp != BF:
        x1, x2 = x1[:, :BF], x2[:, :BF]
    return x1, x2


def dense_graph_conv_order2(h, adj, w, b):
    """DenseGraphConvOrderK(order=2, support_len=1, include_self=True,
    channel_last=True): out = concat([h, A h, A^2 h], ch) @ W + b."""
    bsz, s, n, f = h.shape
    BF = bsz * s * f
    h_nf = jnp.transpose(h, (2, 0, 1, 3)).reshape(n, BF)      # [n, b*s*f]
    x1, x2 = graph_propagate(adj, h_nf)

    def back(t):
        return jnp.transpose(t.reshape(n, bsz, s, f), (1, 2, 0, 3))

    hc = jnp.concatenate([h, back(x1), back(x2)], axis=-1)    # [b, s, n, 3f]
    return fused_linear(hc, w, b)                             # 1x1 conv channel mix


# ----------------------------------------------------------------------------
# Model glue (plain JAX, composes the Pallas kernels)
# ----------------------------------------------------------------------------
def sinusoidal_pe(steps, d_model):
    position = np.arange(steps, dtype=np.float32)[:, None]
    div_term = np.exp(np.arange(0, d_model, 2, dtype=np.float32)
                      * (-math.log(10000.0) / d_model))
    pe = np.zeros((steps, d_model), dtype=np.float32)
    pe[:, 0::2] = np.sin(position * div_term)
    pe[:, 1::2] = np.cos(position * div_term)
    return jnp.asarray(pe)


def multi_head_attention(h, p, heads, mask_bias, axis, ln):
    """Fused LN + QKV projection, batched attention along `axis`.  Returns the
    concatenated head outputs; the output projection is fused with the residual
    by the caller."""
    b, s, n, H = h.shape
    hd = H // heads
    qkv = fused_linear(h, p["wqkv"], p["bqkv"], ln=ln)        # LN -> [.., 3H]
    q, k, v = qkv[..., :H], qkv[..., H:2 * H], qkv[..., 2 * H:]

    if axis == "steps":
        L = s
        perm_in, perm_out = (0, 2, 3, 1, 4), (0, 3, 1, 2, 4)
        batch_shape = (b, n, heads)
    else:  # 'nodes'
        L = n
        perm_in, perm_out = (0, 1, 3, 2, 4), (0, 1, 3, 2, 4)
        batch_shape = (b, s, heads)

    def split(t):
        return jnp.transpose(t.reshape(b, s, n, heads, hd), perm_in).reshape(-1, L, hd)

    o = scaled_dot_attention(split(q), split(k), split(v), mask_bias)
    o = o.reshape(*batch_shape, L, hd)
    return jnp.transpose(o, perm_out).reshape(b, s, n, H)


def st_transformer_layer(h, p, mask_time, heads):
    # x = skip(x) + temporal_att(norm1(x), mask_time)       (out-proj + skip fused)
    att = multi_head_attention(h, p["t_att"], heads, mask_time, "steps",
                               ln=(p["ln1_w"], p["ln1_b"]))
    h = fused_linear(att, p["t_att"]["wo"], p["t_att"]["bo"],
                     res_linear=(h, p["skip_w"], p["skip_b"]))
    # x = x + spatial_att(norm2(x))                         (out-proj + residual fused)
    att = multi_head_attention(h, p["s_att"], heads, None, "nodes",
                               ln=(p["ln2_w"], p["ln2_b"]))
    h = fused_linear(att, p["s_att"]["wo"], p["s_att"]["bo"], res=h)
    # x = x + Linear(ELU(Linear(LN(x))))                    (LN + first FF fused; residual fused)
    z = fused_linear(h, p["ff_w1"], p["ff_b1"], act="elu",
                     ln=(p["ln3_w"], p["ln3_b"]))
    h = fused_linear(z, p["ff_w2"], p["ff_b2"], res=h)
    return h


def gconv_transformer_forward(params, x, u, mask, *, heads):
    """x: [b, steps, nodes, input_size], u: [b, steps, u_size],
    mask: [b, steps, nodes, input_size] (float 0/1).  edge_index/edge_weight are
    unused by the PyTorch forward (only the learned adjacency is used)."""
    b, s, n, _ = x.shape
    H = params["mask_token"].shape[-1]

    x = x * mask
    he = params["h_enc"]
    h = mlp(x, [(he["w0"], he["b0"]), (he["w1"], he["b1"])], ("relu", "relu"))
    h = mask * h + (1.0 - mask) * params["mask_token"][None, None, :, :]

    ue_p = params["u_enc"]
    ue = mlp(u, [(ue_p["w0"], ue_p["b0"]), (ue_p["w1"], ue_p["b1"])], ("relu", "relu"))
    h = h + ue[:, :, None, :]                      # condition_on_u

    h = h + sinusoidal_pe(s, H)[None, :, None, :]  # positional encoding

    adj = learned_adj(params["src_emb"], params["tgt_emb"])
    # diagonal_attention_mask: forbid attending to the same time step
    # (large negative additive bias on the diagonal, per review correctness note).
    mask_time = NEG_INF * jnp.eye(s, dtype=jnp.float32)

    outs = []
    for lyr in params["layers"]:
        h = st_transformer_layer(h, lyr["t"], mask_time, heads)
        h = dense_graph_conv_order2(h, adj, lyr["gc_w"], lyr["gc_b"])
        ro = lyr["ro"]
        o = mlp(h, [(ro["w0"], ro["b0"]), (ro["w1"], ro["b1"]), (ro["wr"], ro["br"])],
                ("relu", "relu", "none"))
        outs.append(o)
    x_hat = outs.pop(-1)
    return x_hat, outs


# ----------------------------------------------------------------------------
# Deterministic parameter initialization (synthetic weights, torch-like init)
# ----------------------------------------------------------------------------
def _init_linear(key, fan_in, fan_out):
    kw, kb = jax.random.split(key)
    bound = 1.0 / math.sqrt(fan_in)
    w = jax.random.uniform(kw, (fan_in, fan_out), jnp.float32, -bound, bound)
    b = jax.random.uniform(kb, (fan_out,), jnp.float32, -bound, bound)
    return w, b


def init_params(key, *, input_size, hidden, output_size, n_nodes, ff, u_size,
                n_layers, emb_size):
    keys = iter(jax.random.split(key, 128))
    nk = lambda: next(keys)
    p = {}

    w0, b0 = _init_linear(nk(), input_size, hidden)
    w1, b1 = _init_linear(nk(), hidden, hidden)
    p["h_enc"] = {"w0": w0, "b0": b0, "w1": w1, "b1": b1}

    w0, b0 = _init_linear(nk(), u_size, hidden)
    w1, b1 = _init_linear(nk(), hidden, hidden)
    p["u_enc"] = {"w0": w0, "b0": b0, "w1": w1, "b1": b1}

    p["mask_token"] = 0.1 * jax.random.normal(nk(), (1, hidden), jnp.float32)
    p["src_emb"] = jax.random.normal(nk(), (n_nodes, emb_size), jnp.float32)
    p["tgt_emb"] = jax.random.normal(nk(), (n_nodes, emb_size), jnp.float32)

    def mha_params():
        wqkv, bqkv = _init_linear(nk(), hidden, 3 * hidden)   # fused Q|K|V
        wo, bo = _init_linear(nk(), hidden, hidden)
        return {"wqkv": wqkv, "bqkv": bqkv, "wo": wo, "bo": bo}

    layers = []
    for _ in range(n_layers):
        t = {"t_att": mha_params(), "s_att": mha_params()}
        t["skip_w"], t["skip_b"] = _init_linear(nk(), hidden, hidden)
        for name in ("ln1", "ln2", "ln3"):
            t[name + "_w"] = jnp.ones((hidden,), jnp.float32)
            t[name + "_b"] = jnp.zeros((hidden,), jnp.float32)
        t["ff_w1"], t["ff_b1"] = _init_linear(nk(), hidden, ff)
        t["ff_w2"], t["ff_b2"] = _init_linear(nk(), ff, hidden)

        gc_w, gc_b = _init_linear(nk(), 3 * hidden, hidden)
        ro = {}
        ro["w0"], ro["b0"] = _init_linear(nk(), hidden, ff)
        ro["w1"], ro["b1"] = _init_linear(nk(), ff, ff)
        ro["wr"], ro["br"] = _init_linear(nk(), ff, output_size)

        layers.append({"t": t, "gc_w": gc_w, "gc_b": gc_b, "ro": ro})
    p["layers"] = layers
    return p


# ----------------------------------------------------------------------------
if __name__ == "__main__":
    B, S, N = 2, 8, 4                 # batch, steps, nodes
    INPUT, HIDDEN, OUTPUT = 1, 32, 1
    FF, U_SIZE, HEADS, N_LAYERS, EMB = 32, 4, 2, 2, 8

    key = jax.random.PRNGKey(0)
    kp, kx, ku, km = jax.random.split(key, 4)

    params = init_params(kp, input_size=INPUT, hidden=HIDDEN, output_size=OUTPUT,
                         n_nodes=N, ff=FF, u_size=U_SIZE, n_layers=N_LAYERS,
                         emb_size=EMB)

    x = jax.random.normal(kx, (B, S, N, INPUT), jnp.float32)
    u = jax.random.normal(ku, (B, S, U_SIZE), jnp.float32)
    mask = (jax.random.uniform(km, (B, S, N, INPUT)) > 0.25).astype(jnp.float32)

    fwd = jax.jit(functools.partial(gconv_transformer_forward, heads=HEADS))
    x_hat, outs = fwd(params, x, u, mask)
    x_hat = jax.block_until_ready(x_hat)
    for o in outs:
        jax.block_until_ready(o)

    assert x_hat.shape == (B, S, N, OUTPUT)
    assert len(outs) == N_LAYERS - 1
    assert bool(jnp.all(jnp.isfinite(x_hat)))
    for o in outs:
        assert bool(jnp.all(jnp.isfinite(o)))
    print("KERNEL_OK")
</pallas_src>

<mosaic_0001>
module attributes {stable_mosaic.version = 11 : i64} {
  func.func @_mlp_kernel(%arg0: i32, %arg1: memref<64x1xf32, #tpu.memory_space<vmem>>, %arg2: memref<1x32xf32, #tpu.memory_space<vmem>>, %arg3: memref<1x32xf32, #tpu.memory_space<vmem>>, %arg4: memref<32x32xf32, #tpu.memory_space<vmem>>, %arg5: memref<1x32xf32, #tpu.memory_space<vmem>>, %arg6: memref<64x32xf32, #tpu.memory_space<vmem>>) attributes {dimension_semantics = [#tpu.dimension_semantics<parallel>], iteration_bounds = array<i64: 1>, scalar_prefetch = 0 : i64, scratch_operands = 0 : i64, tpu.core_type = #tpu.core_type<tc>, window_params = [{transform_indices = @transform_0, window_bounds = array<i64: 64, 1>}, {pipeline_mode = #tpu.pipeline_mode<synchronous>, transform_indices = @transform_1, window_bounds = array<i64: 1, 32>}, {pipeline_mode = #tpu.pipeline_mode<synchronous>, transform_indices = @transform_2, window_bounds = array<i64: 1, 32>}, {pipeline_mode = #tpu.pipeline_mode<synchronous>, transform_indices = @transform_3, window_bounds = array<i64: 32, 32>}, {pipeline_mode = #tpu.pipeline_mode<synchronous>, transform_indices = @transform_4, window_bounds = array<i64: 1, 32>}, {transform_indices = @transform_5, window_bounds = array<i64: 64, 32>}]} {
    %c0 = arith.constant 0 : index
    %c0_0 = arith.constant 0 : index
    %0 = vector.load %arg1[%c0, %c0_0] : memref<64x1xf32, #tpu.memory_space<vmem>>, vector<64x1xf32>
    %c0_1 = arith.constant 0 : index
    %c0_2 = arith.constant 0 : index
    %1 = vector.load %arg2[%c0_1, %c0_2] : memref<1x32xf32, #tpu.memory_space<vmem>>, vector<1x32xf32>
    %2 = vector.broadcast %0 : vector<64x1xf32> to vector<64x32xf32>
    %3 = vector.broadcast %1 : vector<1x32xf32> to vector<64x32xf32>
    %4 = arith.mulf %2, %3 : vector<64x32xf32>
    %c0_3 = arith.constant 0 : index
    %c0_4 = arith.constant 0 : index
    %5 = vector.load %arg3[%c0_3, %c0_4] : memref<1x32xf32, #tpu.memory_space<vmem>>, vector<1x32xf32>
    %6 = vector.broadcast %5 : vector<1x32xf32> to vector<64x32xf32>
    %7 = arith.addf %4, %6 : vector<64x32xf32>
    %cst = arith.constant 0.000000e+00 : f32
    %8 = vector.broadcast %cst : f32 to vector<64x32xf32>
    %9 = arith.maximumf %7, %8 : vector<64x32xf32>
    %c0_5 = arith.constant 0 : index
    %c0_6 = arith.constant 0 : index
    %10 = vector.load %arg4[%c0_5, %c0_6] : memref<32x32xf32, #tpu.memory_space<vmem>>, vector<32x32xf32>
    %11 = arith.truncf %9 : vector<64x32xf32> to vector<64x32xbf16>
    %12 = arith.truncf %10 : vector<32x32xf32> to vector<32x32xbf16>
    %cst_7 = arith.constant dense<0.000000e+00> : vector<64x32xf32>
    %13 = tpu.matmul %11, %12, %cst_7 {dimension_numbers = #tpu.dot_dimension_numbers<[1], [0], [0], [1], [0, 0, 1, 1], [], []>} : vector<64x32xbf16>, vector<32x32xbf16>, vector<64x32xf32> -> vector<64x32xf32>
    %c0_8 = arith.constant 0 : index
    %c0_9 = arith.constant 0 : index
    %14 = vector.load %arg5[%c0_8, %c0_9] : memref<1x32xf32, #tpu.memory_space<vmem>>, vector<1x32xf32>
    %15 = vector.broadcast %14 : vector<1x32xf32> to vector<64x32xf32>
    %16 = arith.addf %13, %15 : vector<64x32xf32>
    %cst_10 = arith.constant 0.000000e+00 : f32
    %17 = vector.broadcast %cst_10 : f32 to vector<64x32xf32>
    %18 = arith.maximumf %16, %17 : vector<64x32xf32>
    %c0_11 = arith.constant 0 : index
    %c0_12 = arith.constant 0 : index
    %19 = vector.load %arg6[%c0_11, %c0_12] : memref<64x32xf32, #tpu.memory_space<vmem>>, vector<64x32xf32>
    tpu.vector_store %arg6[%c0_11, %c0_12], %18 {strides = array<i32>} : memref<64x32xf32, #tpu.memory_space<vmem>>, vector<64x32xf32>,
    return
  }
  func.func @transform_0(%arg0: i32) -> (i32, i32) {
    %c0_i32 = arith.constant 0 : i32
    %c0_i32_0 = arith.constant 0 : i32
    return %arg0, %c0_i32 : i32, i32
  }
  func.func @transform_1(%arg0: i32) -> (i32, i32) {
    %c0_i32 = arith.constant 0 : i32
    %c0_i32_0 = arith.constant 0 : i32
    %c0_i32_1 = arith.constant 0 : i32
    return %c0_i32, %c0_i32_0 : i32, i32
  }
  func.func @transform_2(%arg0: i32) -> (i32, i32) {
    %c0_i32 = arith.constant 0 : i32
    %c0_i32_0 = arith.constant 0 : i32
    %c0_i32_1 = arith.constant 0 : i32
    return %c0_i32, %c0_i32_0 : i32, i32
  }
  func.func @transform_3(%arg0: i32) -> (i32, i32) {
    %c0_i32 = arith.constant 0 : i32
    %c0_i32_0 = arith.constant 0 : i32
    %c0_i32_1 = arith.constant 0 : i32
    return %c0_i32, %c0_i32_0 : i32, i32
  }
  func.func @transform_4(%arg0: i32) -> (i32, i32) {
    %c0_i32 = arith.constant 0 : i32
    %c0_i32_0 = arith.constant 0 : i32
    %c0_i32_1 = arith.constant 0 : i32
    return %c0_i32, %c0_i32_0 : i32, i32
  }
  func.func @transform_5(%arg0: i32) -> (i32, i32) {
    %c0_i32 = arith.constant 0 : i32
    %c0_i32_0 = arith.constant 0 : i32
    return %arg0, %c0_i32 : i32, i32
  }
}

module attributes {stable_mosaic.version = 11 : i64} {
  func.func @_mlp_kernel(%arg0: i32, %arg1: memref<16x4xf32, #tpu.memory_space<vmem>>, %arg2: memref<4x32xf32, #tpu.memory_space<vmem>>, %arg3: memref<1x32xf32, #tpu.memory_space<vmem>>, %arg4: memref<32x32xf32, #tpu.memory_space<vmem>>, %arg5: memref<1x32xf32, #tpu.memory_space<vmem>>, %arg6: memref<16x32xf32, #tpu.memory_space<vmem>>) attributes {dimension_semantics = [#tpu.dimension_semantics<parallel>], iteration_bounds = array<i64: 1>, scalar_prefetch = 0 : i64, scratch_operands = 0 : i64, tpu.core_type = #tpu.core_type<tc>, window_params = [{transform_indices = @transform_0, window_bounds = array<i64: 16, 4>}, {pipeline_mode = #tpu.pipeline_mode<synchronous>, transform_indices = @transform_1, window_bounds = array<i64: 4, 32>}, {pipeline_mode = #tpu.pipeline_mode<synchronous>, transform_indices = @transform_2, window_bounds = array<i64: 1, 32>}, {pipeline_mode = #tpu.pipeline_mode<synchronous>, transform_indices = @transform_3, window_bounds = array<i64: 32, 32>}, {pipeline_mode = #tpu.pipeline_mode<synchronous>, transform_indices = @transform_4, window_bounds = array<i64: 1, 32>}, {transform_indices = @transform_5, window_bounds = array<i64: 16, 32>}]} {
    %c0 = arith.constant 0 : index
    %c0_0 = arith.constant 0 : index
    %0 = vector.load %arg1[%c0, %c0_0] : memref<16x4xf32, #tpu.memory_space<vmem>>, vector<16x4xf32>
    %c0_1 = arith.constant 0 : index
    %c0_2 = arith.constant 0 : index
    %1 = vector.load %arg2[%c0_1, %c0_2] : memref<4x32xf32, #tpu.memory_space<vmem>>, vector<4x32xf32>
    %2 = arith.truncf %0 : vector<16x4xf32> to vector<16x4xbf16>
    %3 = arith.truncf %1 : vector<4x32xf32> to vector<4x32xbf16>
    %cst = arith.constant dense<0.000000e+00> : vector<16x32xf32>
    %4 = tpu.matmul %2, %3, %cst {dimension_numbers = #tpu.dot_dimension_numbers<[1], [0], [0], [1], [0, 0, 1, 1], [], []>} : vector<16x4xbf16>, vector<4x32xbf16>, vector<16x32xf32> -> vector<16x32xf32>
    %c0_3 = arith.constant 0 : index
    %c0_4 = arith.constant 0 : index
    %5 = vector.load %arg3[%c0_3, %c0_4] : memref<1x32xf32, #tpu.memory_space<vmem>>, vector<1x32xf32>
    %6 = vector.broadcast %5 : vector<1x32xf32> to vector<16x32xf32>
    %7 = arith.addf %4, %6 : vector<16x32xf32>
    %cst_5 = arith.constant 0.000000e+00 : f32
    %8 = vector.broadcast %cst_5 : f32 to vector<16x32xf32>
    %9 = arith.maximumf %7, %8 : vector<16x32xf32>
    %c0_6 = arith.constant 0 : index
    %c0_7 = arith.constant 0 : index
    %10 = vector.load %arg4[%c0_6, %c0_7] : memref<32x32xf32, #tpu.memory_space<vmem>>, vector<32x32xf32>
    %11 = arith.truncf %9 : vector<16x32xf32> to vector<16x32xbf16>
    %12 = arith.truncf %10 : vector<32x32xf32> to vector<32x32xbf16>
    %cst_8 = arith.constant dense<0.000000e+00> : vector<16x32xf32>
    %13 = tpu.matmul %11, %12, %cst_8 {dimension_numbers = #tpu.dot_dimension_numbers<[1], [0], [0], [1], [0, 0, 1, 1], [], []>} : vector<16x32xbf16>, vector<32x32xbf16>, vector<16x32xf32> -> vector<16x32xf32>
    %c0_9 = arith.constant 0 : index
    %c0_10 = arith.constant 0 : index
    %14 = vector.load %arg5[%c0_9, %c0_10] : memref<1x32xf32, #tpu.memory_space<vmem>>, vector<1x32xf32>
    %15 = vector.broadcast %14 : vector<1x32xf32> to vector<16x32xf32>
    %16 = arith.addf %13, %15 : vector<16x32xf32>
    %cst_11 = arith.constant 0.000000e+00 : f32
    %17 = vector.broadcast %cst_11 : f32 to vector<16x32xf32>
    %18 = arith.maximumf %16, %17 : vector<16x32xf32>
    %c0_12 = arith.constant 0 : index
    %c0_13 = arith.constant 0 : index
    %19 = vector.load %arg6[%c0_12, %c0_13] : memref<16x32xf32, #tpu.memory_space<vmem>>, vector<16x32xf32>
    tpu.vector_store %arg6[%c0_12, %c0_13], %18 {strides = array<i32>} : memref<16x32xf32, #tpu.memory_space<vmem>>, vector<16x32xf32>,
    return
  }
  func.func @transform_0(%arg0: i32) -> (i32, i32) {
    %c0_i32 = arith.constant 0 : i32
    %c0_i32_0 = arith.constant 0 : i32
    return %arg0, %c0_i32 : i32, i32
  }
  func.func @transform_1(%arg0: i32) -> (i32, i32) {
    %c0_i32 = arith.constant 0 : i32
    %c0_i32_0 = arith.constant 0 : i32
    %c0_i32_1 = arith.constant 0 : i32
    return %c0_i32, %c0_i32_0 : i32, i32
  }
  func.func @transform_2(%arg0: i32) -> (i32, i32) {
    %c0_i32 = arith.constant 0 : i32
    %c0_i32_0 = arith.constant 0 : i32
    %c0_i32_1 = arith.constant 0 : i32
    return %c0_i32, %c0_i32_0 : i32, i32
  }
  func.func @transform_3(%arg0: i32) -> (i32, i32) {
    %c0_i32 = arith.constant 0 : i32
    %c0_i32_0 = arith.constant 0 : i32
    %c0_i32_1 = arith.constant 0 : i32
    return %c0_i32, %c0_i32_0 : i32, i32
  }
  func.func @transform_4(%arg0: i32) -> (i32, i32) {
    %c0_i32 = arith.constant 0 : i32
    %c0_i32_0 = arith.constant 0 : i32
    %c0_i32_1 = arith.constant 0 : i32
    return %c0_i32, %c0_i32_0 : i32, i32
  }
  func.func @transform_5(%arg0: i32) -> (i32, i32) {
    %c0_i32 = arith.constant 0 : i32
    %c0_i32_0 = arith.constant 0 : i32
    return %arg0, %c0_i32 : i32, i32
  }
}

module attributes {stable_mosaic.version = 11 : i64} {
  func.func @_fused_linear_kernel(%arg0: i32, %arg1: memref<64x32xf32, #tpu.memory_space<vmem>>, %arg2: memref<1x32xf32, #tpu.memory_space<vmem>>, %arg3: memref<1x32xf32, #tpu.memory_space<vmem>>, %arg4: memref<32x96xf32, #tpu.memory_space<vmem>>, %arg5: memref<1x96xf32, #tpu.memory_space<vmem>>, %arg6: memref<64x96xf32, #tpu.memory_space<vmem>>) attributes {dimension_semantics = [#tpu.dimension_semantics<parallel>], iteration_bounds = array<i64: 1>, scalar_prefetch = 0 : i64, scratch_operands = 0 : i64, tpu.core_type = #tpu.core_type<tc>, window_params = [{transform_indices = @transform_0, window_bounds = array<i64: 64, 32>}, {pipeline_mode = #tpu.pipeline_mode<synchronous>, transform_indices = @transform_1, window_bounds = array<i64: 1, 32>}, {pipeline_mode = #tpu.pipeline_mode<synchronous>, transform_indices = @transform_2, window_bounds = array<i64: 1, 32>}, {pipeline_mode = #tpu.pipeline_mode<synchronous>, transform_indices = @transform_3, window_bounds = array<i64: 32, 96>}, {pipeline_mode = #tpu.pipeline_mode<synchronous>, transform_indices = @transform_4, window_bounds = array<i64: 1, 96>}, {transform_indices = @transform_5, window_bounds = array<i64: 64, 96>}]} {
    %c0 = arith.constant 0 : index
    %c0_0 = arith.constant 0 : index
    %0 = vector.load %arg1[%c0, %c0_0] : memref<64x32xf32, #tpu.memory_space<vmem>>, vector<64x32xf32>
    %c0_1 = arith.constant 0 : index
    %c0_2 = arith.constant 0 : index
    %1 = vector.load %arg2[%c0_1, %c0_2] : memref<1x32xf32, #tpu.memory_space<vmem>>, vector<1x32xf32>
    %c0_3 = arith.constant 0 : index
    %c0_4 = arith.constant 0 : index
    %2 = vector.load %arg3[%c0_3, %c0_4] : memref<1x32xf32, #tpu.memory_space<vmem>>, vector<1x32xf32>
    %cst = arith.constant dense<0.000000e+00> : vector<64xf32>
    %3 = vector.multi_reduction <add>, %0, %cst [1] : vector<64x32xf32> to vector<64xf32>
    %4 = vector.shape_cast %3 : vector<64xf32> to vector<64x1xf32>
    %cst_5 = arith.constant 3.200000e+01 : f32
    %5 = vector.broadcast %cst_5 : f32 to vector<64x1xf32>
    %6 = arith.divf %4, %5 : vector<64x1xf32>
    %7 = vector.broadcast %6 : vector<64x1xf32> to vector<64x32xf32>
    %8 = arith.subf %0, %7 : vector<64x32xf32>
    %9 = arith.mulf %8, %8 : vector<64x32xf32>
    %cst_6 = arith.constant dense<0.000000e+00> : vector<64xf32>
    %10 = vector.multi_reduction <add>, %9, %cst_6 [1] : vector<64x32xf32> to vector<64xf32>
    %11 = vector.shape_cast %10 : vector<64xf32> to vector<64x1xf32>
    %cst_7 = arith.constant 3.200000e+01 : f32
    %12 = vector.broadcast %cst_7 : f32 to vector<64x1xf32>
    %13 = arith.divf %11, %12 : vector<64x1xf32>
    %cst_8 = arith.constant 9.99999974E-6 : f32
    %14 = vector.broadcast %cst_8 : f32 to vector<64x1xf32>
    %15 = arith.addf %13, %14 : vector<64x1xf32>
    %16 = math.rsqrt %15 : vector<64x1xf32>
    %17 = vector.broadcast %16 : vector<64x1xf32> to vector<64x32xf32>
    %18 = arith.mulf %8, %17 : vector<64x32xf32>
    %19 = vector.broadcast %1 : vector<1x32xf32> to vector<64x32xf32>
    %20 = arith.mulf %18, %19 : vector<64x32xf32>
    %21 = vector.broadcast %2 : vector<1x32xf32> to vector<64x32xf32>
    %22 = arith.addf %20, %21 : vector<64x32xf32>
    %c0_9 = arith.constant 0 : index
    %c0_10 = arith.constant 0 : index
    %23 = vector.load %arg4[%c0_9, %c0_10] : memref<32x96xf32, #tpu.memory_space<vmem>>, vector<32x96xf32>
    %24 = arith.truncf %22 : vector<64x32xf32> to vector<64x32xbf16>
    %25 = arith.truncf %23 : vector<32x96xf32> to vector<32x96xbf16>
    %cst_11 = arith.constant dense<0.000000e+00> : vector<64x96xf32>
    %26 = tpu.matmul %24, %25, %cst_11 {dimension_numbers = #tpu.dot_dimension_numbers<[1], [0], [0], [1], [0, 0, 1, 1], [], []>} : vector<64x32xbf16>, vector<32x96xbf16>, vector<64x96xf32> -> vector<64x96xf32>
    %c0_12 = arith.constant 0 : index
    %c0_13 = arith.constant 0 : index
    %27 = vector.load %arg5[%c0_12, %c0_13] : memref<1x96xf32, #tpu.memory_space<vmem>>, vector<1x96xf32>
    %28 = vector.broadcast %27 : vector<1x96xf32> to vector<64x96xf32>
    %29 = arith.addf %26, %28 : vector<64x96xf32>
    %c0_14 = arith.constant 0 : index
    %c0_15 = arith.constant 0 : index
    %30 = vector.load %arg6[%c0_14, %c0_15] : memref<64x96xf32, #tpu.memory_space<vmem>>, vector<64x96xf32>
    tpu.vector_store %arg6[%c0_14, %c0_15], %29 {strides = array<i32>} : memref<64x96xf32, #tpu.memory_space<vmem>>, vector<64x96xf32>,
    return
  }
  func.func @transform_0(%arg0: i32) -> (i32, i32) {
    %c0_i32 = arith.constant 0 : i32
    %c0_i32_0 = arith.constant 0 : i32
    return %arg0, %c0_i32 : i32, i32
  }
  func.func @transform_1(%arg0: i32) -> (i32, i32) {
    %c0_i32 = arith.constant 0 : i32
    %c0_i32_0 = arith.constant 0 : i32
    %c0_i32_1 = arith.constant 0 : i32
    return %c0_i32, %c0_i32_0 : i32, i32
  }
  func.func @transform_2(%arg0: i32) -> (i32, i32) {
    %c0_i32 = arith.constant 0 : i32
    %c0_i32_0 = arith.constant 0 : i32
    %c0_i32_1 = arith.constant 0 : i32
    return %c0_i32, %c0_i32_0 : i32, i32
  }
  func.func @transform_3(%arg0: i32) -> (i32, i32) {
    %c0_i32 = arith.constant 0 : i32
    %c0_i32_0 = arith.constant 0 : i32
    %c0_i32_1 = arith.constant 0 : i32
    return %c0_i32, %c0_i32_0 : i32, i32
  }
  func.func @transform_4(%arg0: i32) -> (i32, i32) {
    %c0_i32 = arith.constant 0 : i32
    %c0_i32_0 = arith.constant 0 : i32
    %c0_i32_1 = arith.constant 0 : i32
    return %c0_i32, %c0_i32_0 : i32, i32
  }
  func.func @transform_5(%arg0: i32) -> (i32, i32) {
    %c0_i32 = arith.constant 0 : i32
    %c0_i32_0 = arith.constant 0 : i32
    return %arg0, %c0_i32 : i32, i32
  }
}

module attributes {stable_mosaic.version = 11 : i64} {
  func.func @_attn_kernel(%arg0: i32, %arg1: memref<16x8x16xf32, #tpu.memory_space<vmem>>, %arg2: memref<16x8x16xf32, #tpu.memory_space<vmem>>, %arg3: memref<16x8x16xf32, #tpu.memory_space<vmem>>, %arg4: memref<8x8xf32, #tpu.memory_space<vmem>>, %arg5: memref<16x8x16xf32, #tpu.memory_space<vmem>>) attributes {dimension_semantics = [#tpu.dimension_semantics<parallel>], iteration_bounds = array<i64: 1>, scalar_prefetch = 0 : i64, scratch_operands = 0 : i64, tpu.core_type = #tpu.core_type<tc>, window_params = [{transform_indices = @transform_0, window_bounds = array<i64: 16, 8, 16>}, {transform_indices = @transform_1, window_bounds = array<i64: 16, 8, 16>}, {transform_indices = @transform_2, window_bounds = array<i64: 16, 8, 16>}, {pipeline_mode = #tpu.pipeline_mode<synchronous>, transform_indices = @transform_3, window_bounds = array<i64: 8, 8>}, {transform_indices = @transform_4, window_bounds = array<i64: 16, 8, 16>}]} {
    %c0 = arith.constant 0 : index
    %c0_0 = arith.constant 0 : index
    %c0_1 = arith.constant 0 : index
    %0 = vector.load %arg1[%c0, %c0_0, %c0_1] : memref<16x8x16xf32, #tpu.memory_space<vmem>>, vector<16x8x16xf32>
    %1 = arith.truncf %0 : vector<16x8x16xf32> to vector<16x8x16xbf16>
    %c0_2 = arith.constant 0 : index
    %c0_3 = arith.constant 0 : index
    %c0_4 = arith.constant 0 : index
    %2 = vector.load %arg2[%c0_2, %c0_3, %c0_4] : memref<16x8x16xf32, #tpu.memory_space<vmem>>, vector<16x8x16xf32>
    %3 = arith.truncf %2 : vector<16x8x16xf32> to vector<16x8x16xbf16>
    "tpu.trace_start"() <{level = 10 : i32, message = "bqd,bkd->bqk"}> : () -> ()
    %cst = arith.constant dense<0.000000e+00> : vector<16x8x8xf32>
    %4 = tpu.matmul %1, %3, %cst {dimension_numbers = #tpu.dot_dimension_numbers<[2], [2], [1], [1], [0, 0, 0, 1, 1, 1], [0], [0]>} : vector<16x8x16xbf16>, vector<16x8x16xbf16>, vector<16x8x8xf32> -> vector<16x8x8xf32>
    "tpu.trace_stop"() : () -> ()
    %cst_5 = arith.constant 2.500000e-01 : f32
    %5 = vector.broadcast %cst_5 : f32 to vector<16x8x8xf32>
    %6 = arith.mulf %4, %5 : vector<16x8x8xf32>
    %c0_6 = arith.constant 0 : index
    %c0_7 = arith.constant 0 : index
    %7 = vector.load %arg4[%c0_6, %c0_7] : memref<8x8xf32, #tpu.memory_space<vmem>>, vector<8x8xf32>
    %8 = vector.shape_cast %7 : vector<8x8xf32> to vector<1x8x8xf32>
    %9 = vector.broadcast %8 : vector<1x8x8xf32> to vector<16x8x8xf32>
    %10 = arith.addf %6, %9 : vector<16x8x8xf32>
    %cst_8 = arith.constant dense<0xFF800000> : vector<16x8xf32>
    %11 = vector.multi_reduction <maximumf>, %10, %cst_8 [2] : vector<16x8x8xf32> to vector<16x8xf32>
    %12 = vector.shape_cast %11 : vector<16x8xf32> to vector<16x8x1xf32>
    %13 = vector.broadcast %12 : vector<16x8x1xf32> to vector<16x8x8xf32>
    %14 = arith.subf %10, %13 : vector<16x8x8xf32>
    %15 = math.exp %14 : vector<16x8x8xf32>
    %cst_9 = arith.constant dense<0.000000e+00> : vector<16x8xf32>
    %16 = vector.multi_reduction <add>, %15, %cst_9 [2] : vector<16x8x8xf32> to vector<16x8xf32>
    %17 = vector.shape_cast %16 : vector<16x8xf32> to vector<16x8x1xf32>
    %18 = tpu.reciprocal %17 {approx = true} : vector<16x8x1xf32> -> vector<16x8x1xf32>
    %19 = vector.broadcast %18 : vector<16x8x1xf32> to vector<16x8x8xf32>
    %20 = arith.mulf %15, %19 : vector<16x8x8xf32>
    %21 = arith.truncf %20 : vector<16x8x8xf32> to vector<16x8x8xbf16>
    %c0_10 = arith.constant 0 : index
    %c0_11 = arith.constant 0 : index
    %c0_12 = arith.constant 0 : index
    %22 = vector.load %arg3[%c0_10, %c0_11, %c0_12] : memref<16x8x16xf32, #tpu.memory_space<vmem>>, vector<16x8x16xf32>
    %23 = arith.truncf %22 : vector<16x8x16xf32> to vector<16x8x16xbf16>
    "tpu.trace_start"() <{level = 10 : i32, message = "bqk,bkd->bqd"}> : () -> ()
    %cst_13 = arith.constant dense<0.000000e+00> : vector<16x8x16xf32>
    %24 = tpu.matmul %21, %23, %cst_13 {dimension_numbers = #tpu.dot_dimension_numbers<[2], [1], [1], [2], [0, 0, 0, 1, 1, 2], [0], [0]>} : vector<16x8x8xbf16>, vector<16x8x16xbf16>, vector<16x8x16xf32> -> vector<16x8x16xf32>
    "tpu.trace_stop"() : () -> ()
    %c0_14 = arith.constant 0 : index
    %c0_15 = arith.constant 0 : index
    %c0_16 = arith.constant 0 : index
    %25 = vector.load %arg5[%c0_14, %c0_15, %c0_16] : memref<16x8x16xf32, #tpu.memory_space<vmem>>, vector<16x8x16xf32>
    tpu.vector_store %arg5[%c0_14, %c0_15, %c0_16], %24 {strides = array<i32>} : memref<16x8x16xf32, #tpu.memory_space<vmem>>, vector<16x8x16xf32>,
    return
  }
  func.func @transform_0(%arg0: i32) -> (i32, i32, i32) {
    %c0_i32 = arith.constant 0 : i32
    %c0_i32_0 = arith.constant 0 : i32
    %c0_i32_1 = arith.constant 0 : i32
    return %arg0, %c0_i32, %c0_i32_0 : i32, i32, i32
  }
  func.func @transform_1(%arg0: i32) -> (i32, i32, i32) {
    %c0_i32 = arith.constant 0 : i32
    %c0_i32_0 = arith.constant 0 : i32
    %c0_i32_1 = arith.constant 0 : i32
    return %arg0, %c0_i32, %c0_i32_0 : i32, i32, i32
  }
  func.func @transform_2(%arg0: i32) -> (i32, i32, i32) {
    %c0_i32 = arith.constant 0 : i32
    %c0_i32_0 = arith.constant 0 : i32
    %c0_i32_1 = arith.constant 0 : i32
    return %arg0, %c0_i32, %c0_i32_0 : i32, i32, i32
  }
  func.func @transform_3(%arg0: i32) -> (i32, i32) {
    %c0_i32 = arith.constant 0 : i32
    %c0_i32_0 = arith.constant 0 : i32
    %c0_i32_1 = arith.constant 0 : i32
    return %c0_i32, %c0_i32_0 : i32, i32
  }
  func.func @transform_4(%arg0: i32) -> (i32, i32, i32) {
    %c0_i32 = arith.constant 0 : i32
    %c0_i32_0 = arith.constant 0 : i32
    %c0_i32_1 = arith.constant 0 : i32
    return %arg0, %c0_i32, %c0_i32_0 : i32, i32, i32
  }
}

module attributes {stable_mosaic.version = 11 : i64} {
  func.func @_fused_linear_kernel(%arg0: i32, %arg1: memref<64x32xf32, #tpu.memory_space<vmem>>, %arg2: memref<32x32xf32, #tpu.memory_space<vmem>>, %arg3: memref<1x32xf32, #tpu.memory_space<vmem>>, %arg4: memref<64x32xf32, #tpu.memory_space<vmem>>, %arg5: memref<32x32xf32, #tpu.memory_space<vmem>>, %arg6: memref<1x32xf32, #tpu.memory_space<vmem>>, %arg7: memref<64x32xf32, #tpu.memory_space<vmem>>) attributes {dimension_semantics = [#tpu.dimension_semantics<parallel>], iteration_bounds = array<i64: 1>, scalar_prefetch = 0 : i64, scratch_operands = 0 : i64, tpu.core_type = #tpu.core_type<tc>, window_params = [{transform_indices = @transform_0, window_bounds = array<i64: 64, 32>}, {pipeline_mode = #tpu.pipeline_mode<synchronous>, transform_indices = @transform_1, window_bounds = array<i64: 32, 32>}, {pipeline_mode = #tpu.pipeline_mode<synchronous>, transform_indices = @transform_2, window_bounds = array<i64: 1, 32>}, {transform_indices = @transform_3, window_bounds = array<i64: 64, 32>}, {pipeline_mode = #tpu.pipeline_mode<synchronous>, transform_indices = @transform_4, window_bounds = array<i64: 32, 32>}, {pipeline_mode = #tpu.pipeline_mode<synchronous>, transform_indices = @transform_5, window_bounds = array<i64: 1, 32>}, {transform_indices = @transform_6, window_bounds = array<i64: 64, 32>}]} {
    %c0 = arith.constant 0 : index
    %c0_0 = arith.constant 0 : index
    %0 = vector.load %arg1[%c0, %c0_0] : memref<64x32xf32, #tpu.memory_space<vmem>>, vector<64x32xf32>
    %c0_1 = arith.constant 0 : index
    %c0_2 = arith.constant 0 : index
    %1 = vector.load %arg2[%c0_1, %c0_2] : memref<32x32xf32, #tpu.memory_space<vmem>>, vector<32x32xf32>
    %2 = arith.truncf %0 : vector<64x32xf32> to vector<64x32xbf16>
    %3 = arith.truncf %1 : vector<32x32xf32> to vector<32x32xbf16>
    %cst = arith.constant dense<0.000000e+00> : vector<64x32xf32>
    %4 = tpu.matmul %2, %3, %cst {dimension_numbers = #tpu.dot_dimension_numbers<[1], [0], [0], [1], [0, 0, 1, 1], [], []>} : vector<64x32xbf16>, vector<32x32xbf16>, vector<64x32xf32> -> vector<64x32xf32>
    %c0_3 = arith.constant 0 : index
    %c0_4 = arith.constant 0 : index
    %5 = vector.load %arg3[%c0_3, %c0_4] : memref<1x32xf32, #tpu.memory_space<vmem>>, vector<1x32xf32>
    %6 = vector.broadcast %5 : vector<1x32xf32> to vector<64x32xf32>
    %7 = arith.addf %4, %6 : vector<64x32xf32>
    %c0_5 = arith.constant 0 : index
    %c0_6 = arith.constant 0 : index
    %8 = vector.load %arg4[%c0_5, %c0_6] : memref<64x32xf32, #tpu.memory_space<vmem>>, vector<64x32xf32>
    %c0_7 = arith.constant 0 : index
    %c0_8 = arith.constant 0 : index
    %9 = vector.load %arg5[%c0_7, %c0_8] : memref<32x32xf32, #tpu.memory_space<vmem>>, vector<32x32xf32>
    %10 = arith.truncf %8 : vector<64x32xf32> to vector<64x32xbf16>
    %11 = arith.truncf %9 : vector<32x32xf32> to vector<32x32xbf16>
    %cst_9 = arith.constant dense<0.000000e+00> : vector<64x32xf32>
    %12 = tpu.matmul %10, %11, %cst_9 {dimension_numbers = #tpu.dot_dimension_numbers<[1], [0], [0], [1], [0, 0, 1, 1], [], []>} : vector<64x32xbf16>, vector<32x32xbf16>, vector<64x32xf32> -> vector<64x32xf32>
    %13 = arith.addf %7, %12 : vector<64x32xf32>
    %c0_10 = arith.constant 0 : index
    %c0_11 = arith.constant 0 : index
    %14 = vector.load %arg6[%c0_10, %c0_11] : memref<1x32xf32, #tpu.memory_space<vmem>>, vector<1x32xf32>
    %15 = vector.broadcast %14 : vector<1x32xf32> to vector<64x32xf32>
    %16 = arith.addf %13, %15 : vector<64x32xf32>
    %c0_12 = arith.constant 0 : index
    %c0_13 = arith.constant 0 : index
    %17 = vector.load %arg7[%c0_12, %c0_13] : memref<64x32xf32, #tpu.memory_space<vmem>>, vector<64x32xf32>
    tpu.vector_store %arg7[%c0_12, %c0_13], %16 {strides = array<i32>} : memref<64x32xf32, #tpu.memory_space<vmem>>, vector<64x32xf32>,
    return
  }
  func.func @transform_0(%arg0: i32) -> (i32, i32) {
    %c0_i32 = arith.constant 0 : i32
    %c0_i32_0 = arith.constant 0 : i32
    return %arg0, %c0_i32 : i32, i32
  }
  func.func @transform_1(%arg0: i32) -> (i32, i32) {
    %c0_i32 = arith.constant 0 : i32
    %c0_i32_0 = arith.constant 0 : i32
    %c0_i32_1 = arith.constant 0 : i32
    return %c0_i32, %c0_i32_0 : i32, i32
  }
  func.func @transform_2(%arg0: i32) -> (i32, i32) {
    %c0_i32 = arith.constant 0 : i32
    %c0_i32_0 = arith.constant 0 : i32
    %c0_i32_1 = arith.constant 0 : i32
    return %c0_i32, %c0_i32_0 : i32, i32
  }
  func.func @transform_3(%arg0: i32) -> (i32, i32) {
    %c0_i32 = arith.constant 0 : i32
    %c0_i32_0 = arith.constant 0 : i32
    return %arg0, %c0_i32 : i32, i32
  }
  func.func @transform_4(%arg0: i32) -> (i32, i32) {
    %c0_i32 = arith.constant 0 : i32
    %c0_i32_0 = arith.constant 0 : i32
    %c0_i32_1 = arith.constant 0 : i32
    return %c0_i32, %c0_i32_0 : i32, i32
  }
  func.func @transform_5(%arg0: i32) -> (i32, i32) {
    %c0_i32 = arith.constant 0 : i32
    %c0_i32_0 = arith.constant 0 : i32
    %c0_i32_1 = arith.constant 0 : i32
    return %c0_i32, %c0_i32_0 : i32, i32
  }
  func.func @transform_6(%arg0: i32) -> (i32, i32) {
    %c0_i32 = arith.constant 0 : i32
    %c0_i32_0 = arith.constant 0 : i32
    return %arg0, %c0_i32 : i32, i32
  }
}

module attributes {stable_mosaic.version = 11 : i64} {
  func.func @_fused_linear_kernel(%arg0: i32, %arg1: memref<64x32xf32, #tpu.memory_space<vmem>>, %arg2: memref<32x32xf32, #tpu.memory_space<vmem>>, %arg3: memref<1x32xf32, #tpu.memory_space<vmem>>, %arg4: memref<64x32xf32, #tpu.memory_space<vmem>>, %arg5: memref<64x32xf32, #tpu.memory_space<vmem>>) attributes {dimension_semantics = [#tpu.dimension_semantics<parallel>], iteration_bounds = array<i64: 1>, scalar_prefetch = 0 : i64, scratch_operands = 0 : i64, tpu.core_type = #tpu.core_type<tc>, window_params = [{transform_indices = @transform_0, window_bounds = array<i64: 64, 32>}, {pipeline_mode = #tpu.pipeline_mode<synchronous>, transform_indices = @transform_1, window_bounds = array<i64: 32, 32>}, {pipeline_mode = #tpu.pipeline_mode<synchronous>, transform_indices = @transform_2, window_bounds = array<i64: 1, 32>}, {transform_indices = @transform_3, window_bounds = array<i64: 64, 32>}, {transform_indices = @transform_4, window_bounds = array<i64: 64, 32>}]} {
    %c0 = arith.constant 0 : index
    %c0_0 = arith.constant 0 : index
    %0 = vector.load %arg1[%c0, %c0_0] : memref<64x32xf32, #tpu.memory_space<vmem>>, vector<64x32xf32>
    %c0_1 = arith.constant 0 : index
    %c0_2 = arith.constant 0 : index
    %1 = vector.load %arg2[%c0_1, %c0_2] : memref<32x32xf32, #tpu.memory_space<vmem>>, vector<32x32xf32>
    %2 = arith.truncf %0 : vector<64x32xf32> to vector<64x32xbf16>
    %3 = arith.truncf %1 : vector<32x32xf32> to vector<32x32xbf16>
    %cst = arith.constant dense<0.000000e+00> : vector<64x32xf32>
    %4 = tpu.matmul %2, %3, %cst {dimension_numbers = #tpu.dot_dimension_numbers<[1], [0], [0], [1], [0, 0, 1, 1], [], []>} : vector<64x32xbf16>, vector<32x32xbf16>, vector<64x32xf32> -> vector<64x32xf32>
    %c0_3 = arith.constant 0 : index
    %c0_4 = arith.constant 0 : index
    %5 = vector.load %arg3[%c0_3, %c0_4] : memref<1x32xf32, #tpu.memory_space<vmem>>, vector<1x32xf32>
    %6 = vector.broadcast %5 : vector<1x32xf32> to vector<64x32xf32>
    %7 = arith.addf %4, %6 : vector<64x32xf32>
    %c0_5 = arith.constant 0 : index
    %c0_6 = arith.constant 0 : index
    %8 = vector.load %arg4[%c0_5, %c0_6] : memref<64x32xf32, #tpu.memory_space<vmem>>, vector<64x32xf32>
    %9 = arith.addf %7, %8 : vector<64x32xf32>
    %c0_7 = arith.constant 0 : index
    %c0_8 = arith.constant 0 : index
    %10 = vector.load %arg5[%c0_7, %c0_8] : memref<64x32xf32, #tpu.memory_space<vmem>>, vector<64x32xf32>
    tpu.vector_store %arg5[%c0_7, %c0_8], %9 {strides = array<i32>} : memref<64x32xf32, #tpu.memory_space<vmem>>, vector<64x32xf32>,
    return
  }
  func.func @transform_0(%arg0: i32) -> (i32, i32) {
    %c0_i32 = arith.constant 0 : i32
    %c0_i32_0 = arith.constant 0 : i32
    return %arg0, %c0_i32 : i32, i32
  }
  func.func @transform_1(%arg0: i32) -> (i32, i32) {
    %c0_i32 = arith.constant 0 : i32
    %c0_i32_0 = arith.constant 0 : i32
    %c0_i32_1 = arith.constant 0 : i32
    return %c0_i32, %c0_i32_0 : i32, i32
  }
  func.func @transform_2(%arg0: i32) -> (i32, i32) {
    %c0_i32 = arith.constant 0 : i32
    %c0_i32_0 = arith.constant 0 : i32
    %c0_i32_1 = arith.constant 0 : i32
    return %c0_i32, %c0_i32_0 : i32, i32
  }
  func.func @transform_3(%arg0: i32) -> (i32, i32) {
    %c0_i32 = arith.constant 0 : i32
    %c0_i32_0 = arith.constant 0 : i32
    return %arg0, %c0_i32 : i32, i32
  }
  func.func @transform_4(%arg0: i32) -> (i32, i32) {
    %c0_i32 = arith.constant 0 : i32
    %c0_i32_0 = arith.constant 0 : i32
    return %arg0, %c0_i32 : i32, i32
  }
}

module attributes {stable_mosaic.version = 11 : i64} {
  func.func @_fused_linear_kernel(%arg0: i32, %arg1: memref<64x32xf32, #tpu.memory_space<vmem>>, %arg2: memref<1x32xf32, #tpu.memory_space<vmem>>, %arg3: memref<1x32xf32, #tpu.memory_space<vmem>>, %arg4: memref<32x32xf32, #tpu.memory_space<vmem>>, %arg5: memref<1x32xf32, #tpu.memory_space<vmem>>, %arg6: memref<64x32xf32, #tpu.memory_space<vmem>>) attributes {dimension_semantics = [#tpu.dimension_semantics<parallel>], iteration_bounds = array<i64: 1>, scalar_prefetch = 0 : i64, scratch_operands = 0 : i64, tpu.core_type = #tpu.core_type<tc>, window_params = [{transform_indices = @transform_0, window_bounds = array<i64: 64, 32>}, {pipeline_mode = #tpu.pipeline_mode<synchronous>, transform_indices = @transform_1, window_bounds = array<i64: 1, 32>}, {pipeline_mode = #tpu.pipeline_mode<synchronous>, transform_indices = @transform_2, window_bounds = array<i64: 1, 32>}, {pipeline_mode = #tpu.pipeline_mode<synchronous>, transform_indices = @transform_3, window_bounds = array<i64: 32, 32>}, {pipeline_mode = #tpu.pipeline_mode<synchronous>, transform_indices = @transform_4, window_bounds = array<i64: 1, 32>}, {transform_indices = @transform_5, window_bounds = array<i64: 64, 32>}]} {
    %c0 = arith.constant 0 : index
    %c0_0 = arith.constant 0 : index
    %0 = vector.load %arg1[%c0, %c0_0] : memref<64x32xf32, #tpu.memory_space<vmem>>, vector<64x32xf32>
    %c0_1 = arith.constant 0 : index
    %c0_2 = arith.constant 0 : index
    %1 = vector.load %arg2[%c0_1, %c0_2] : memref<1x32xf32, #tpu.memory_space<vmem>>, vector<1x32xf32>
    %c0_3 = arith.constant 0 : index
    %c0_4 = arith.constant 0 : index
    %2 = vector.load %arg3[%c0_3, %c0_4] : memref<1x32xf32, #tpu.memory_space<vmem>>, vector<1x32xf32>
    %cst = arith.constant dense<0.000000e+00> : vector<64xf32>
    %3 = vector.multi_reduction <add>, %0, %cst [1] : vector<64x32xf32> to vector<64xf32>
    %4 = vector.shape_cast %3 : vector<64xf32> to vector<64x1xf32>
    %cst_5 = arith.constant 3.200000e+01 : f32
    %5 = vector.broadcast %cst_5 : f32 to vector<64x1xf32>
    %6 = arith.divf %4, %5 : vector<64x1xf32>
    %7 = vector.broadcast %6 : vector<64x1xf32> to vector<64x32xf32>
    %8 = arith.subf %0, %7 : vector<64x32xf32>
    %9 = arith.mulf %8, %8 : vector<64x32xf32>
    %cst_6 = arith.constant dense<0.000000e+00> : vector<64xf32>
    %10 = vector.multi_reduction <add>, %9, %cst_6 [1] : vector<64x32xf32> to vector<64xf32>
    %11 = vector.shape_cast %10 : vector<64xf32> to vector<64x1xf32>
    %cst_7 = arith.constant 3.200000e+01 : f32
    %12 = vector.broadcast %cst_7 : f32 to vector<64x1xf32>
    %13 = arith.divf %11, %12 : vector<64x1xf32>
    %cst_8 = arith.constant 9.99999974E-6 : f32
    %14 = vector.broadcast %cst_8 : f32 to vector<64x1xf32>
    %15 = arith.addf %13, %14 : vector<64x1xf32>
    %16 = math.rsqrt %15 : vector<64x1xf32>
    %17 = vector.broadcast %16 : vector<64x1xf32> to vector<64x32xf32>
    %18 = arith.mulf %8, %17 : vector<64x32xf32>
    %19 = vector.broadcast %1 : vector<1x32xf32> to vector<64x32xf32>
    %20 = arith.mulf %18, %19 : vector<64x32xf32>
    %21 = vector.broadcast %2 : vector<1x32xf32> to vector<64x32xf32>
    %22 = arith.addf %20, %21 : vector<64x32xf32>
    %c0_9 = arith.constant 0 : index
    %c0_10 = arith.constant 0 : index
    %23 = vector.load %arg4[%c0_9, %c0_10] : memref<32x32xf32, #tpu.memory_space<vmem>>, vector<32x32xf32>
    %24 = arith.truncf %22 : vector<64x32xf32> to vector<64x32xbf16>
    %25 = arith.truncf %23 : vector<32x32xf32> to vector<32x32xbf16>
    %cst_11 = arith.constant dense<0.000000e+00> : vector<64x32xf32>
    %26 = tpu.matmul %24, %25, %cst_11 {dimension_numbers = #tpu.dot_dimension_numbers<[1], [0], [0], [1], [0, 0, 1, 1], [], []>} : vector<64x32xbf16>, vector<32x32xbf16>, vector<64x32xf32> -> vector<64x32xf32>
    %c0_12 = arith.constant 0 : index
    %c0_13 = arith.constant 0 : index
    %27 = vector.load %arg5[%c0_12, %c0_13] : memref<1x32xf32, #tpu.memory_space<vmem>>, vector<1x32xf32>
    %28 = vector.broadcast %27 : vector<1x32xf32> to vector<64x32xf32>
    %29 = arith.addf %26, %28 : vector<64x32xf32>
    %cst_14 = arith.constant 0.000000e+00 : f32
    %30 = vector.broadcast %cst_14 : f32 to vector<64x32xf32>
    %31 = arith.cmpf ogt, %29, %30 : vector<64x32xf32>
    %cst_15 = arith.constant 0.000000e+00 : f32
    %32 = vector.broadcast %cst_15 : f32 to vector<64x32xf32>
    %33 = arith.minimumf %29, %32 : vector<64x32xf32>
    %34 = math.exp %33 : vector<64x32xf32>
    %cst_16 = arith.constant 1.000000e+00 : f32
    %35 = vector.broadcast %cst_16 : f32 to vector<64x32xf32>
    %36 = arith.subf %34, %35 : vector<64x32xf32>
    %37 = arith.select %31, %29, %36 : vector<64x32xi1>, vector<64x32xf32>
    %c0_17 = arith.constant 0 : index
    %c0_18 = arith.constant 0 : index
    %38 = vector.load %arg6[%c0_17, %c0_18] : memref<64x32xf32, #tpu.memory_space<vmem>>, vector<64x32xf32>
    tpu.vector_store %arg6[%c0_17, %c0_18], %37 {strides = array<i32>} : memref<64x32xf32, #tpu.memory_space<vmem>>, vector<64x32xf32>,
    return
  }
  func.func @transform_0(%arg0: i32) -> (i32, i32) {
    %c0_i32 = arith.constant 0 : i32
    %c0_i32_0 = arith.constant 0 : i32
    return %arg0, %c0_i32 : i32, i32
  }
  func.func @transform_1(%arg0: i32) -> (i32, i32) {
    %c0_i32 = arith.constant 0 : i32
    %c0_i32_0 = arith.constant 0 : i32
    %c0_i32_1 = arith.constant 0 : i32
    return %c0_i32, %c0_i32_0 : i32, i32
  }
  func.func @transform_2(%arg0: i32) -> (i32, i32) {
    %c0_i32 = arith.constant 0 : i32
    %c0_i32_0 = arith.constant 0 : i32
    %c0_i32_1 = arith.constant 0 : i32
    return %c0_i32, %c0_i32_0 : i32, i32
  }
  func.func @transform_3(%arg0: i32) -> (i32, i32) {
    %c0_i32 = arith.constant 0 : i32
    %c0_i32_0 = arith.constant 0 : i32
    %c0_i32_1 = arith.constant 0 : i32
    return %c0_i32, %c0_i32_0 : i32, i32
  }
  func.func @transform_4(%arg0: i32) -> (i32, i32) {
    %c0_i32 = arith.constant 0 : i32
    %c0_i32_0 = arith.constant 0 : i32
    %c0_i32_1 = arith.constant 0 : i32
    return %c0_i32, %c0_i32_0 : i32, i32
  }
  func.func @transform_5(%arg0: i32) -> (i32, i32) {
    %c0_i32 = arith.constant 0 : i32
    %c0_i32_0 = arith.constant 0 : i32
    return %arg0, %c0_i32 : i32, i32
  }
}

module attributes {stable_mosaic.version = 11 : i64} {
  func.func @_attn_kernel(%arg0: i32, %arg1: memref<32x4x16xf32, #tpu.memory_space<vmem>>, %arg2: memref<32x4x16xf32, #tpu.memory_space<vmem>>, %arg3: memref<32x4x16xf32, #tpu.memory_space<vmem>>, %arg4: memref<32x4x16xf32, #tpu.memory_space<vmem>>) attributes {dimension_semantics = [#tpu.dimension_semantics<parallel>], iteration_bounds = array<i64: 1>, scalar_prefetch = 0 : i64, scratch_operands = 0 : i64, tpu.core_type = #tpu.core_type<tc>, window_params = [{transform_indices = @transform_0, window_bounds = array<i64: 32, 4, 16>}, {transform_indices = @transform_1, window_bounds = array<i64: 32, 4, 16>}, {transform_indices = @transform_2, window_bounds = array<i64: 32, 4, 16>}, {transform_indices = @transform_3, window_bounds = array<i64: 32, 4, 16>}]} {
    %c0 = arith.constant 0 : index
    %c0_0 = arith.constant 0 : index
    %c0_1 = arith.constant 0 : index
    %0 = vector.load %arg1[%c0, %c0_0, %c0_1] : memref<32x4x16xf32, #tpu.memory_space<vmem>>, vector<32x4x16xf32>
    %1 = arith.truncf %0 : vector<32x4x16xf32> to vector<32x4x16xbf16>
    %c0_2 = arith.constant 0 : index
    %c0_3 = arith.constant 0 : index
    %c0_4 = arith.constant 0 : index
    %2 = vector.load %arg2[%c0_2, %c0_3, %c0_4] : memref<32x4x16xf32, #tpu.memory_space<vmem>>, vector<32x4x16xf32>
    %3 = arith.truncf %2 : vector<32x4x16xf32> to vector<32x4x16xbf16>
    "tpu.trace_start"() <{level = 10 : i32, message = "bqd,bkd->bqk"}> : () -> ()
    %cst = arith.constant dense<0.000000e+00> : vector<32x4x4xf32>
    %4 = tpu.matmul %1, %3, %cst {dimension_numbers = #tpu.dot_dimension_numbers<[2], [2], [1], [1], [0, 0, 0, 1, 1, 1], [0], [0]>} : vector<32x4x16xbf16>, vector<32x4x16xbf16>, vector<32x4x4xf32> -> vector<32x4x4xf32>
    "tpu.trace_stop"() : () -> ()
    %cst_5 = arith.constant 2.500000e-01 : f32
    %5 = vector.broadcast %cst_5 : f32 to vector<32x4x4xf32>
    %6 = arith.mulf %4, %5 : vector<32x4x4xf32>
    %cst_6 = arith.constant dense<0xFF800000> : vector<32x4xf32>
    %7 = vector.multi_reduction <maximumf>, %6, %cst_6 [2] : vector<32x4x4xf32> to vector<32x4xf32>
    %8 = vector.shape_cast %7 : vector<32x4xf32> to vector<32x4x1xf32>
    %9 = vector.broadcast %8 : vector<32x4x1xf32> to vector<32x4x4xf32>
    %10 = arith.subf %6, %9 : vector<32x4x4xf32>
    %11 = math.exp %10 : vector<32x4x4xf32>
    %cst_7 = arith.constant dense<0.000000e+00> : vector<32x4xf32>
    %12 = vector.multi_reduction <add>, %11, %cst_7 [2] : vector<32x4x4xf32> to vector<32x4xf32>
    %13 = vector.shape_cast %12 : vector<32x4xf32> to vector<32x4x1xf32>
    %14 = tpu.reciprocal %13 {approx = true} : vector<32x4x1xf32> -> vector<32x4x1xf32>
    %15 = vector.broadcast %14 : vector<32x4x1xf32> to vector<32x4x4xf32>
    %16 = arith.mulf %11, %15 : vector<32x4x4xf32>
    %17 = arith.truncf %16 : vector<32x4x4xf32> to vector<32x4x4xbf16>
    %c0_8 = arith.constant 0 : index
    %c0_9 = arith.constant 0 : index
    %c0_10 = arith.constant 0 : index
    %18 = vector.load %arg3[%c0_8, %c0_9, %c0_10] : memref<32x4x16xf32, #tpu.memory_space<vmem>>, vector<32x4x16xf32>
    %19 = arith.truncf %18 : vector<32x4x16xf32> to vector<32x4x16xbf16>
    "tpu.trace_start"() <{level = 10 : i32, message = "bqk,bkd->bqd"}> : () -> ()
    %cst_11 = arith.constant dense<0.000000e+00> : vector<32x4x16xf32>
    %20 = tpu.matmul %17, %19, %cst_11 {dimension_numbers = #tpu.dot_dimension_numbers<[2], [1], [1], [2], [0, 0, 0, 1, 1, 2], [0], [0]>} : vector<32x4x4xbf16>, vector<32x4x16xbf16>, vector<32x4x16xf32> -> vector<32x4x16xf32>
    "tpu.trace_stop"() : () -> ()
    %c0_12 = arith.constant 0 : index
    %c0_13 = arith.constant 0 : index
    %c0_14 = arith.constant 0 : index
    %21 = vector.load %arg4[%c0_12, %c0_13, %c0_14] : memref<32x4x16xf32, #tpu.memory_space<vmem>>, vector<32x4x16xf32>
    tpu.vector_store %arg4[%c0_12, %c0_13, %c0_14], %20 {strides = array<i32>} : memref<32x4x16xf32, #tpu.memory_space<vmem>>, vector<32x4x16xf32>,
    return
  }
  func.func @transform_0(%arg0: i32) -> (i32, i32, i32) {
    %c0_i32 = arith.constant 0 : i32
    %c0_i32_0 = arith.constant 0 : i32
    %c0_i32_1 = arith.constant 0 : i32
    return %arg0, %c0_i32, %c0_i32_0 : i32, i32, i32
  }
  func.func @transform_1(%arg0: i32) -> (i32, i32, i32) {
    %c0_i32 = arith.constant 0 : i32
    %c0_i32_0 = arith.constant 0 : i32
    %c0_i32_1 = arith.constant 0 : i32
    return %arg0, %c0_i32, %c0_i32_0 : i32, i32, i32
  }
  func.func @transform_2(%arg0: i32) -> (i32, i32, i32) {
    %c0_i32 = arith.constant 0 : i32
    %c0_i32_0 = arith.constant 0 : i32
    %c0_i32_1 = arith.constant 0 : i32
    return %arg0, %c0_i32, %c0_i32_0 : i32, i32, i32
  }
  func.func @transform_3(%arg0: i32) -> (i32, i32, i32) {
    %c0_i32 = arith.constant 0 : i32
    %c0_i32_0 = arith.constant 0 : i32
    %c0_i32_1 = arith.constant 0 : i32
    return %arg0, %c0_i32, %c0_i32_0 : i32, i32, i32
  }
}

module attributes {stable_mosaic.version = 11 : i64} {
  func.func @_adj_kernel(%arg0: i32, %arg1: memref<4x8xf32, #tpu.memory_space<vmem>>, %arg2: memref<4x8xf32, #tpu.memory_space<vmem>>, %arg3: memref<4x4xf32, #tpu.memory_space<vmem>>) attributes {dimension_semantics = [#tpu.dimension_semantics<arbitrary>], iteration_bounds = array<i64: 1>, scalar_prefetch = 0 : i64, scratch_operands = 0 : i64, tpu.core_type = #tpu.core_type<tc>, window_params = [{pipeline_mode = #tpu.pipeline_mode<synchronous>, transform_indices = @transform_0, window_bounds = array<i64: 4, 8>}, {pipeline_mode = #tpu.pipeline_mode<synchronous>, transform_indices = @transform_1, window_bounds = array<i64: 4, 8>}, {pipeline_mode = #tpu.pipeline_mode<synchronous>, transform_indices = @transform_2, window_bounds = array<i64: 4, 4>}]} {
    %c0 = arith.constant 0 : index
    %c0_0 = arith.constant 0 : index
    %0 = vector.load %arg1[%c0, %c0_0] : memref<4x8xf32, #tpu.memory_space<vmem>>, vector<4x8xf32>
    %c0_1 = arith.constant 0 : index
    %c0_2 = arith.constant 0 : index
    %1 = vector.load %arg2[%c0_1, %c0_2] : memref<4x8xf32, #tpu.memory_space<vmem>>, vector<4x8xf32>
    %cst = arith.constant dense<0.000000e+00> : vector<4x4xf32>
    %2 = tpu.matmul %0, %1, %cst {dimension_numbers = #tpu.dot_dimension_numbers<[1], [1], [0], [0], [0, 0, 1, 0], [], []>} : vector<4x8xf32>, vector<4x8xf32>, vector<4x4xf32> -> vector<4x4xf32>
    %cst_3 = arith.constant 0.000000e+00 : f32
    %3 = vector.broadcast %cst_3 : f32 to vector<4x4xf32>
    %4 = arith.maximumf %2, %3 : vector<4x4xf32>
    %cst_4 = arith.constant dense<0xFF800000> : vector<4xf32>
    %5 = vector.multi_reduction <maximumf>, %4, %cst_4 [1] : vector<4x4xf32> to vector<4xf32>
    %6 = vector.shape_cast %5 : vector<4xf32> to vector<4x1xf32>
    %7 = vector.broadcast %6 : vector<4x1xf32> to vector<4x4xf32>
    %8 = arith.subf %4, %7 : vector<4x4xf32>
    %9 = math.exp %8 : vector<4x4xf32>
    %cst_5 = arith.constant dense<0.000000e+00> : vector<4xf32>
    %10 = vector.multi_reduction <add>, %9, %cst_5 [1] : vector<4x4xf32> to vector<4xf32>
    %11 = vector.shape_cast %10 : vector<4xf32> to vector<4x1xf32>
    %12 = tpu.reciprocal %11 {approx = true} : vector<4x1xf32> -> vector<4x1xf32>
    %13 = vector.broadcast %12 : vector<4x1xf32> to vector<4x4xf32>
    %14 = arith.mulf %9, %13 : vector<4x4xf32>
    %c0_6 = arith.constant 0 : index
    %c0_7 = arith.constant 0 : index
    %15 = vector.load %arg3[%c0_6, %c0_7] : memref<4x4xf32, #tpu.memory_space<vmem>>, vector<4x4xf32>
    tpu.vector_store %arg3[%c0_6, %c0_7], %14 {strides = array<i32>} : memref<4x4xf32, #tpu.memory_space<vmem>>, vector<4x4xf32>,
    return
  }
  func.func @transform_0(%arg0: i32) -> (i32, i32) {
    %c0_i32 = arith.constant 0 : i32
    %c0_i32_0 = arith.constant 0 : i32
    %c0_i32_1 = arith.constant 0 : i32
    return %c0_i32, %c0_i32_0 : i32, i32
  }
  func.func @transform_1(%arg0: i32) -> (i32, i32) {
    %c0_i32 = arith.constant 0 : i32
    %c0_i32_0 = arith.constant 0 : i32
    %c0_i32_1 = arith.constant 0 : i32
    return %c0_i32, %c0_i32_0 : i32, i32
  }
  func.func @transform_2(%arg0: i32) -> (i32, i32) {
    %c0_i32 = arith.constant 0 : i32
    %c0_i32_0 = arith.constant 0 : i32
    %c0_i32_1 = arith.constant 0 : i32
    return %c0_i32, %c0_i32_0 : i32, i32
  }
}

module attributes {stable_mosaic.version = 11 : i64} {
  func.func @_gprop_kernel(%arg0: i32, %arg1: memref<4x4xf32, #tpu.memory_space<vmem>>, %arg2: memref<4x512xf32, #tpu.memory_space<vmem>>, %arg3: memref<4x512xf32, #tpu.memory_space<vmem>>, %arg4: memref<4x512xf32, #tpu.memory_space<vmem>>) attributes {dimension_semantics = [#tpu.dimension_semantics<parallel>], iteration_bounds = array<i64: 1>, scalar_prefetch = 0 : i64, scratch_operands = 0 : i64, tpu.core_type = #tpu.core_type<tc>, window_params = [{pipeline_mode = #tpu.pipeline_mode<synchronous>, transform_indices = @transform_0, window_bounds = array<i64: 4, 4>}, {transform_indices = @transform_1, window_bounds = array<i64: 4, 512>}, {transform_indices = @transform_2, window_bounds = array<i64: 4, 512>}, {transform_indices = @transform_3, window_bounds = array<i64: 4, 512>}]} {
    %c0 = arith.constant 0 : index
    %c0_0 = arith.constant 0 : index
    %0 = vector.load %arg1[%c0, %c0_0] : memref<4x4xf32, #tpu.memory_space<vmem>>, vector<4x4xf32>
    %1 = arith.truncf %0 : vector<4x4xf32> to vector<4x4xbf16>
    %c0_1 = arith.constant 0 : index
    %c0_2 = arith.constant 0 : index
    %2 = vector.load %arg2[%c0_1, %c0_2] : memref<4x512xf32, #tpu.memory_space<vmem>>, vector<4x512xf32>
    %3 = arith.truncf %2 : vector<4x512xf32> to vector<4x512xbf16>
    %cst = arith.constant dense<0.000000e+00> : vector<4x512xf32>
    %4 = tpu.matmul %1, %3, %cst {dimension_numbers = #tpu.dot_dimension_numbers<[1], [0], [0], [1], [0, 0, 1, 1], [], []>} : vector<4x4xbf16>, vector<4x512xbf16>, vector<4x512xf32> -> vector<4x512xf32>
    %5 = arith.truncf %4 : vector<4x512xf32> to vector<4x512xbf16>
    %cst_3 = arith.constant dense<0.000000e+00> : vector<4x512xf32>
    %6 = tpu.matmul %1, %5, %cst_3 {dimension_numbers = #tpu.dot_dimension_numbers<[1], [0], [0], [1], [0, 0, 1, 1], [], []>} : vector<4x4xbf16>, vector<4x512xbf16>, vector<4x512xf32> -> vector<4x512xf32>
    %c0_4 = arith.constant 0 : index
    %c0_5 = arith.constant 0 : index
    %7 = vector.load %arg3[%c0_4, %c0_5] : memref<4x512xf32, #tpu.memory_space<vmem>>, vector<4x512xf32>
    tpu.vector_store %arg3[%c0_4, %c0_5], %4 {strides = array<i32>} : memref<4x512xf32, #tpu.memory_space<vmem>>, vector<4x512xf32>,
    %c0_6 = arith.constant 0 : index
    %c0_7 = arith.constant 0 : index
    %8 = vector.load %arg4[%c0_6, %c0_7] : memref<4x512xf32, #tpu.memory_space<vmem>>, vector<4x512xf32>
    tpu.vector_store %arg4[%c0_6, %c0_7], %6 {strides = array<i32>} : memref<4x512xf32, #tpu.memory_space<vmem>>, vector<4x512xf32>,
    return
  }
  func.func @transform_0(%arg0: i32) -> (i32, i32) {
    %c0_i32 = arith.constant 0 : i32
    %c0_i32_0 = arith.constant 0 : i32
    %c0_i32_1 = arith.constant 0 : i32
    return %c0_i32, %c0_i32_0 : i32, i32
  }
  func.func @transform_1(%arg0: i32) -> (i32, i32) {
    %c0_i32 = arith.constant 0 : i32
    %c0_i32_0 = arith.constant 0 : i32
    return %c0_i32, %arg0 : i32, i32
  }
  func.func @transform_2(%arg0: i32) -> (i32, i32) {
    %c0_i32 = arith.constant 0 : i32
    %c0_i32_0 = arith.constant 0 : i32
    return %c0_i32, %arg0 : i32, i32
  }
  func.func @transform_3(%arg0: i32) -> (i32, i32) {
    %c0_i32 = arith.constant 0 : i32
    %c0_i32_0 = arith.constant 0 : i32
    return %c0_i32, %arg0 : i32, i32
  }
}

module attributes {stable_mosaic.version = 11 : i64} {
  func.func @_fused_linear_kernel(%arg0: i32, %arg1: memref<64x96xf32, #tpu.memory_space<vmem>>, %arg2: memref<96x32xf32, #tpu.memory_space<vmem>>, %arg3: memref<1x32xf32, #tpu.memory_space<vmem>>, %arg4: memref<64x32xf32, #tpu.memory_space<vmem>>) attributes {dimension_semantics = [#tpu.dimension_semantics<parallel>], iteration_bounds = array<i64: 1>, scalar_prefetch = 0 : i64, scratch_operands = 0 : i64, tpu.core_type = #tpu.core_type<tc>, window_params = [{transform_indices = @transform_0, window_bounds = array<i64: 64, 96>}, {pipeline_mode = #tpu.pipeline_mode<synchronous>, transform_indices = @transform_1, window_bounds = array<i64: 96, 32>}, {pipeline_mode = #tpu.pipeline_mode<synchronous>, transform_indices = @transform_2, window_bounds = array<i64: 1, 32>}, {transform_indices = @transform_3, window_bounds = array<i64: 64, 32>}]} {
    %c0 = arith.constant 0 : index
    %c0_0 = arith.constant 0 : index
    %0 = vector.load %arg1[%c0, %c0_0] : memref<64x96xf32, #tpu.memory_space<vmem>>, vector<64x96xf32>
    %c0_1 = arith.constant 0 : index
    %c0_2 = arith.constant 0 : index
    %1 = vector.load %arg2[%c0_1, %c0_2] : memref<96x32xf32, #tpu.memory_space<vmem>>, vector<96x32xf32>
    %2 = arith.truncf %0 : vector<64x96xf32> to vector<64x96xbf16>
    %3 = arith.truncf %1 : vector<96x32xf32> to vector<96x32xbf16>
    %cst = arith.constant dense<0.000000e+00> : vector<64x32xf32>
    %4 = tpu.matmul %2, %3, %cst {dimension_numbers = #tpu.dot_dimension_numbers<[1], [0], [0], [1], [0, 0, 1, 1], [], []>} : vector<64x96xbf16>, vector<96x32xbf16>, vector<64x32xf32> -> vector<64x32xf32>
    %c0_3 = arith.constant 0 : index
    %c0_4 = arith.constant 0 : index
    %5 = vector.load %arg3[%c0_3, %c0_4] : memref<1x32xf32, #tpu.memory_space<vmem>>, vector<1x32xf32>
    %6 = vector.broadcast %5 : vector<1x32xf32> to vector<64x32xf32>
    %7 = arith.addf %4, %6 : vector<64x32xf32>
    %c0_5 = arith.constant 0 : index
    %c0_6 = arith.constant 0 : index
    %8 = vector.load %arg4[%c0_5, %c0_6] : memref<64x32xf32, #tpu.memory_space<vmem>>, vector<64x32xf32>
    tpu.vector_store %arg4[%c0_5, %c0_6], %7 {strides = array<i32>} : memref<64x32xf32, #tpu.memory_space<vmem>>, vector<64x32xf32>,
    return
  }
  func.func @transform_0(%arg0: i32) -> (i32, i32) {
    %c0_i32 = arith.constant 0 : i32
    %c0_i32_0 = arith.constant 0 : i32
    return %arg0, %c0_i32 : i32, i32
  }
  func.func @transform_1(%arg0: i32) -> (i32, i32) {
    %c0_i32 = arith.constant 0 : i32
    %c0_i32_0 = arith.constant 0 : i32
    %c0_i32_1 = arith.constant 0 : i32
    return %c0_i32, %c0_i32_0 : i32, i32
  }
  func.func @transform_2(%arg0: i32) -> (i32, i32) {
    %c0_i32 = arith.constant 0 : i32
    %c0_i32_0 = arith.constant 0 : i32
    %c0_i32_1 = arith.constant 0 : i32
    return %c0_i32, %c0_i32_0 : i32, i32
  }
  func.func @transform_3(%arg0: i32) -> (i32, i32) {
    %c0_i32 = arith.constant 0 : i32
    %c0_i32_0 = arith.constant 0 : i32
    return %arg0, %c0_i32 : i32, i32
  }
}

module attributes {stable_mosaic.version = 11 : i64} {
  func.func @_mlp_kernel(%arg0: i32, %arg1: memref<64x32xf32, #tpu.memory_space<vmem>>, %arg2: memref<32x32xf32, #tpu.memory_space<vmem>>, %arg3: memref<1x32xf32, #tpu.memory_space<vmem>>, %arg4: memref<32x32xf32, #tpu.memory_space<vmem>>, %arg5: memref<1x32xf32, #tpu.memory_space<vmem>>, %arg6: memref<32x1xf32, #tpu.memory_space<vmem>>, %arg7: memref<1x1xf32, #tpu.memory_space<vmem>>, %arg8: memref<64x1xf32, #tpu.memory_space<vmem>>) attributes {dimension_semantics = [#tpu.dimension_semantics<parallel>], iteration_bounds = array<i64: 1>, scalar_prefetch = 0 : i64, scratch_operands = 0 : i64, tpu.core_type = #tpu.core_type<tc>, window_params = [{transform_indices = @transform_0, window_bounds = array<i64: 64, 32>}, {pipeline_mode = #tpu.pipeline_mode<synchronous>, transform_indices = @transform_1, window_bounds = array<i64: 32, 32>}, {pipeline_mode = #tpu.pipeline_mode<synchronous>, transform_indices = @transform_2, window_bounds = array<i64: 1, 32>}, {pipeline_mode = #tpu.pipeline_mode<synchronous>, transform_indices = @transform_3, window_bounds = array<i64: 32, 32>}, {pipeline_mode = #tpu.pipeline_mode<synchronous>, transform_indices = @transform_4, window_bounds = array<i64: 1, 32>}, {pipeline_mode = #tpu.pipeline_mode<synchronous>, transform_indices = @transform_5, window_bounds = array<i64: 32, 1>}, {pipeline_mode = #tpu.pipeline_mode<synchronous>, transform_indices = @transform_6, window_bounds = array<i64: 1, 1>}, {transform_indices = @transform_7, window_bounds = array<i64: 64, 1>}]} {
    %c0 = arith.constant 0 : index
    %c0_0 = arith.constant 0 : index
    %0 = vector.load %arg1[%c0, %c0_0] : memref<64x32xf32, #tpu.memory_space<vmem>>, vector<64x32xf32>
    %c0_1 = arith.constant 0 : index
    %c0_2 = arith.constant 0 : index
    %1 = vector.load %arg2[%c0_1, %c0_2] : memref<32x32xf32, #tpu.memory_space<vmem>>, vector<32x32xf32>
    %2 = arith.truncf %0 : vector<64x32xf32> to vector<64x32xbf16>
    %3 = arith.truncf %1 : vector<32x32xf32> to vector<32x32xbf16>
    %cst = arith.constant dense<0.000000e+00> : vector<64x32xf32>
    %4 = tpu.matmul %2, %3, %cst {dimension_numbers = #tpu.dot_dimension_numbers<[1], [0], [0], [1], [0, 0, 1, 1], [], []>} : vector<64x32xbf16>, vector<32x32xbf16>, vector<64x32xf32> -> vector<64x32xf32>
    %c0_3 = arith.constant 0 : index
    %c0_4 = arith.constant 0 : index
    %5 = vector.load %arg3[%c0_3, %c0_4] : memref<1x32xf32, #tpu.memory_space<vmem>>, vector<1x32xf32>
    %6 = vector.broadcast %5 : vector<1x32xf32> to vector<64x32xf32>
    %7 = arith.addf %4, %6 : vector<64x32xf32>
    %cst_5 = arith.constant 0.000000e+00 : f32
    %8 = vector.broadcast %cst_5 : f32 to vector<64x32xf32>
    %9 = arith.maximumf %7, %8 : vector<64x32xf32>
    %c0_6 = arith.constant 0 : index
    %c0_7 = arith.constant 0 : index
    %10 = vector.load %arg4[%c0_6, %c0_7] : memref<32x32xf32, #tpu.memory_space<vmem>>, vector<32x32xf32>
    %11 = arith.truncf %9 : vector<64x32xf32> to vector<64x32xbf16>
    %12 = arith.truncf %10 : vector<32x32xf32> to vector<32x32xbf16>
    %cst_8 = arith.constant dense<0.000000e+00> : vector<64x32xf32>
    %13 = tpu.matmul %11, %12, %cst_8 {dimension_numbers = #tpu.dot_dimension_numbers<[1], [0], [0], [1], [0, 0, 1, 1], [], []>} : vector<64x32xbf16>, vector<32x32xbf16>, vector<64x32xf32> -> vector<64x32xf32>
    %c0_9 = arith.constant 0 : index
    %c0_10 = arith.constant 0 : index
    %14 = vector.load %arg5[%c0_9, %c0_10] : memref<1x32xf32, #tpu.memory_space<vmem>>, vector<1x32xf32>
    %15 = vector.broadcast %14 : vector<1x32xf32> to vector<64x32xf32>
    %16 = arith.addf %13, %15 : vector<64x32xf32>
    %cst_11 = arith.constant 0.000000e+00 : f32
    %17 = vector.broadcast %cst_11 : f32 to vector<64x32xf32>
    %18 = arith.maximumf %16, %17 : vector<64x32xf32>
    %c0_12 = arith.constant 0 : index
    %c0_13 = arith.constant 0 : index
    %19 = vector.load %arg6[%c0_12, %c0_13] : memref<32x1xf32, #tpu.memory_space<vmem>>, vector<32x1xf32>
    %20 = arith.truncf %18 : vector<64x32xf32> to vector<64x32xbf16>
    %21 = arith.truncf %19 : vector<32x1xf32> to vector<32x1xbf16>
    %cst_14 = arith.constant dense<0.000000e+00> : vector<64x1xf32>
    %22 = tpu.matmul %20, %21, %cst_14 {dimension_numbers = #tpu.dot_dimension_numbers<[1], [0], [0], [1], [0, 0, 1, 1], [], []>} : vector<64x32xbf16>, vector<32x1xbf16>, vector<64x1xf32> -> vector<64x1xf32>
    %c0_15 = arith.constant 0 : index
    %c0_16 = arith.constant 0 : index
    %23 = vector.load %arg7[%c0_15, %c0_16] : memref<1x1xf32, #tpu.memory_space<vmem>>, vector<1x1xf32>
    %24 = vector.broadcast %23 : vector<1x1xf32> to vector<64x1xf32>
    %25 = arith.addf %22, %24 : vector<64x1xf32>
    %c0_17 = arith.constant 0 : index
    %c0_18 = arith.constant 0 : index
    %26 = vector.load %arg8[%c0_17, %c0_18] : memref<64x1xf32, #tpu.memory_space<vmem>>, vector<64x1xf32>
    tpu.vector_store %arg8[%c0_17, %c0_18], %25 {strides = array<i32>} : memref<64x1xf32, #tpu.memory_space<vmem>>, vector<64x1xf32>,
    return
  }
  func.func @transform_0(%arg0: i32) -> (i32, i32) {
    %c0_i32 = arith.constant 0 : i32
    %c0_i32_0 = arith.constant 0 : i32
    return %arg0, %c0_i32 : i32, i32
  }
  func.func @transform_1(%arg0: i32) -> (i32, i32) {
    %c0_i32 = arith.constant 0 : i32
    %c0_i32_0 = arith.constant 0 : i32
    %c0_i32_1 = arith.constant 0 : i32
    return %c0_i32, %c0_i32_0 : i32, i32
  }
  func.func @transform_2(%arg0: i32) -> (i32, i32) {
    %c0_i32 = arith.constant 0 : i32
    %c0_i32_0 = arith.constant 0 : i32
    %c0_i32_1 = arith.constant 0 : i32
    return %c0_i32, %c0_i32_0 : i32, i32
  }
  func.func @transform_3(%arg0: i32) -> (i32, i32) {
    %c0_i32 = arith.constant 0 : i32
    %c0_i32_0 = arith.constant 0 : i32
    %c0_i32_1 = arith.constant 0 : i32
    return %c0_i32, %c0_i32_0 : i32, i32
  }
  func.func @transform_4(%arg0: i32) -> (i32, i32) {
    %c0_i32 = arith.constant 0 : i32
    %c0_i32_0 = arith.constant 0 : i32
    %c0_i32_1 = arith.constant 0 : i32
    return %c0_i32, %c0_i32_0 : i32, i32
  }
  func.func @transform_5(%arg0: i32) -> (i32, i32) {
    %c0_i32 = arith.constant 0 : i32
    %c0_i32_0 = arith.constant 0 : i32
    %c0_i32_1 = arith.constant 0 : i32
    return %c0_i32, %c0_i32_0 : i32, i32
  }
  func.func @transform_6(%arg0: i32) -> (i32, i32) {
    %c0_i32 = arith.constant 0 : i32
    %c0_i32_0 = arith.constant 0 : i32
    %c0_i32_1 = arith.constant 0 : i32
    return %c0_i32, %c0_i32_0 : i32, i32
  }
  func.func @transform_7(%arg0: i32) -> (i32, i32) {
    %c0_i32 = arith.constant 0 : i32
    %c0_i32_0 = arith.constant 0 : i32
    return %arg0, %c0_i32 : i32, i32
  }
}

</mosaic_0001>

<llo_original>
// kernel: gconv_transformer_forward.26
$region0: #{gconv_transformer_forward.26}
  #allocation0 [shape = 'u32[]', space=smem, size = 0x4, offset = 0x4, fixed_abs, tag = 'smem constant byte address 0x4 - core index']
  #allocation1 [shape = 'u32[72,128]{1,0:T(1,128)}', space=vmem, size = 0x9000, scoped, tag = 'internal scratch']
  %s0 = inlined_call_operand.vmem [shape: f32[16,4], index: 0, kind: input, shape index: {}]
  %s1 = inlined_call_operand.vmem [shape: f32[4,32], index: 1, kind: input, shape index: {}]
  %s2 = inlined_call_operand.vmem [shape: f32[1,32], index: 2, kind: input, shape index: {}]
  %s3 = inlined_call_operand.vmem [shape: f32[32,32], index: 3, kind: input, shape index: {}]
  %s4 = inlined_call_operand.vmem [shape: f32[1,32], index: 4, kind: input, shape index: {}]
  %s5 = inlined_call_operand.vmem [shape: f32[16,32], index: 5, kind: output, shape index: {}]
  %s6 = sld [smem:[#allocation0]]
  $region30: #{gconv_transformer_forward.26} parent=0
    _
  %s8 = ssub.s32 1, %s6
  %s9 = scalar_select 0, %s8, %s6
  // Predicated region
  $region2: #{gconv_transformer_forward.26} parent=0 // pred_check
    _
  $region3: #{gconv_transformer_forward.26} parent=0 // pred_check_branch
    %11 = sbr.rel (0) target = $region5
  $region4: #{gconv_transformer_forward.26} parent=0 // pred_region
    _
  $region5: #{gconv_transformer_forward.26} parent=0 // pred_fallthru
    _
  // Predicated region
  $region6: #{gconv_transformer_forward.26} parent=0 // pred_check
    _
  $region7: #{gconv_transformer_forward.26} parent=0 // pred_check_branch
    %13 = sbr.rel (0) target = $region9
  $region8: #{gconv_transformer_forward.26} parent=0 // pred_region
    _
  $region9: #{gconv_transformer_forward.26} parent=0 // pred_fallthru
    _
  // Predicated region
  $region10: #{gconv_transformer_forward.26} parent=0 // pred_check
    _
  $region11: #{gconv_transformer_forward.26} parent=0 // pred_check_branch
    %15 = sbr.rel (0) target = $region13
  $region12: #{gconv_transformer_forward.26} parent=0 // pred_region
    _
  $region13: #{gconv_transformer_forward.26} parent=0 // pred_fallthru
    _
  // Predicated region
  $region14: #{gconv_transformer_forward.26} parent=0 // pred_check
    _
  $region15: #{gconv_transformer_forward.26} parent=0 // pred_check_branch
    %17 = sbr.rel (0) target = $region17
  $region16: #{gconv_transformer_forward.26} parent=0 // pred_region
    _
  $region17: #{gconv_transformer_forward.26} parent=0 // pred_fallthru
    _
  // Predicated region
  $region18: #{gconv_transformer_forward.26} parent=0 // pred_check
    _
  $region19: #{gconv_transformer_forward.26} parent=0 // pred_check_branch
    %19 = sbr.rel (0) target = $region21
  $region20: #{gconv_transformer_forward.26} parent=0 // pred_region
    _
  $region21: #{gconv_transformer_forward.26} parent=0 // pred_fallthru
    _
  %v21 = vld [vmem:[%s0] sm:$0xff]
  %v22 = vld [vmem:[%s0 + $0x8] sm:$0xff]
  %v23 = vld [vmem:[%s1] sm:$0xf]
  %v24 = vpack.c.bf16 %v22, %v21
  %v25 = vpack.c.bf16 %v23, %v23
  %v26 = vld [vmem:[%s2] sm:$0x1]
  %v28 = vperm.slane %v26, 0
  %vm30 = vcmask 31744
  %v32 = vsel %vm30, %v24, 0
  %vm34 = vcmask 1041408
  %v36 = vsel %vm34, %v25, 0
  %38 = vmatpush.bf16.msra.mxu0 0
  %39 = vmatpush.bf16.msra.mxu0 0
  %40 = vmatpush.bf16.msra.mxu0 0
  %41 = vmatpush.bf16.msra.mxu0 0
  %42 = vmatpush.bf16.msra.mxu0 0
  %43 = vmatpush.bf16.msra.mxu0 0
  %44 = vmatpush.bf16.msra.mxu0 0
  %45 = vmatpush.bf16.msra.mxu0 %v36
  %46 = vmatmul.bf16.gmra.mxu0 %v32
  %v47 = vpop.f32.mrf.mxu0
  %v48 = vadd.f32 %v28, %v47
  %v49 = vpop.f32.mrf.mxu0
  %v50 = vadd.f32 %v28, %v49
  %51 = vdwg.mxu0
  %v52 = vmax.f32 %v48, 0.0
  %v53 = vmax.f32 %v50, 0.0
  %v54 = vld [vmem:[%s3] sm:$0xff]
  %v55 = vld [vmem:[%s3 + $0x8] sm:$0xff]
  %v56 = vld [vmem:[%s3 + $0x10] sm:$0xff]
  %v57 = vld [vmem:[%s3 + $0x18] sm:$0xff]
  %v58 = vpack.c.bf16 %v53, %v52
  %v59 = vpack.c.bf16 %v55, %v54
  %v60 = vpack.c.bf16 %v57, %v56
  %v61 = vld [vmem:[%s4] sm:$0x1]
  %v63 = vperm.slane %v61, 0
  %vm65 = vcmask 261120
  %v67 = vsel %vm65, %v58, 0
  %69 = vmatpush.bf16.msra.mxu0 0
  %70 = vmatpush.bf16.msra.mxu0 0
  %71 = vmatpush.bf16.msra.mxu0 0
  %72 = vmatpush.bf16.msra.mxu0 0
  %73 = vmatpush.bf16.msra.mxu0 0
  %74 = vmatpush.bf16.msra.mxu0 0
  %75 = vmatpush.bf16.msra.mxu0 %v60
  %76 = vmatpush.bf16.msra.mxu0 %v59
  %77 = vmatmul.bf16.gmra.mxu0 %v67
  %v78 = vpop.f32.mrf.mxu0
  %v79 = vadd.f32 %v63, %v78
  %v80 = vpop.f32.mrf.mxu0
  %v81 = vadd.f32 %v63, %v80
  %82 = vdwg.mxu0
  %v83 = vmax.f32 %v79, 0.0
  %v84 = vmax.f32 %v81, 0.0
  %85 = vst.msk [vmem:[%s5] sm:$0xff] %vm65, %v83
  %86 = vst.msk [vmem:[%s5 + $0x8] sm:$0xff] %vm65, %v84
  // Predicated region
  $region22: #{gconv_transformer_forward.26} parent=0 // pred_check
    _
  $region23: #{gconv_transformer_forward.26} parent=0 // pred_check_branch
    %88 = sbr.rel (0) target = $region25
  $region24: #{gconv_transformer_forward.26} parent=0 // pred_region
    _
  $region25: #{gconv_transformer_forward.26} parent=0 // pred_fallthru
    _
  // Predicated region
  $region26: #{gconv_transformer_forward.26} parent=0 // pred_check
    _
  $region27: #{gconv_transformer_forward.26} parent=0 // pred_check_branch
    %90 = sbr.rel (0) target = $region29
  $region28: #{gconv_transformer_forward.26} parent=0 // pred_region
    _
  $region29: #{gconv_transformer_forward.26} parent=0 // pred_fallthru
    _

// kernel: gconv_transformer_forward.25
$region0: #{gconv_transformer_forward.25}
  #allocation0 [shape = 'u32[]', space=smem, size = 0x4, offset = 0x4, fixed_abs, tag = 'smem constant byte address 0x4 - core index']
  #allocation1 [shape = 'u32[72,128]{1,0:T(1,128)}', space=vmem, size = 0x9000, scoped, tag = 'internal scratch']
  %s0 = inlined_call_operand.vmem [shape: f32[64,1], index: 0, kind: input, shape index: {}]
  %s1 = inlined_call_operand.vmem [shape: f32[1,32], index: 1, kind: input, shape index: {}]
  %s2 = inlined_call_operand.vmem [shape: f32[1,32], index: 2, kind: input, shape index: {}]
  %s3 = inlined_call_operand.vmem [shape: f32[32,32], index: 3, kind: input, shape index: {}]
  %s4 = inlined_call_operand.vmem [shape: f32[1,32], index: 4, kind: input, shape index: {}]
  %s5 = inlined_call_operand.vmem [shape: f32[64,32], index: 5, kind: output, shape index: {}]
  %s6 = sld [smem:[#allocation0]]
  $region30: #{gconv_transformer_forward.25} parent=0
    _
  %s8 = ssub.s32 1, %s6
  %s9 = scalar_select 0, %s8, %s6
  // Predicated region
  $region2: #{gconv_transformer_forward.25} parent=0 // pred_check
    _
  $region3: #{gconv_transformer_forward.25} parent=0 // pred_check_branch
    %11 = sbr.rel (0) target = $region5
  $region4: #{gconv_transformer_forward.25} parent=0 // pred_region
    _
  $region5: #{gconv_transformer_forward.25} parent=0 // pred_fallthru
    _
  // Predicated region
  $region6: #{gconv_transformer_forward.25} parent=0 // pred_check
    _
  $region7: #{gconv_transformer_forward.25} parent=0 // pred_check_branch
    %13 = sbr.rel (0) target = $region9
  $region8: #{gconv_transformer_forward.25} parent=0 // pred_region
    _
  $region9: #{gconv_transformer_forward.25} parent=0 // pred_fallthru
    _
  // Predicated region
  $region10: #{gconv_transformer_forward.25} parent=0 // pred_check
    _
  $region11: #{gconv_transformer_forward.25} parent=0 // pred_check_branch
    %15 = sbr.rel (0) target = $region13
  $region12: #{gconv_transformer_forward.25} parent=0 // pred_region
    _
  $region13: #{gconv_transformer_forward.25} parent=0 // pred_fallthru
    _
  // Predicated region
  $region14: #{gconv_transformer_forward.25} parent=0 // pred_check
    _
  $region15: #{gconv_transformer_forward.25} parent=0 // pred_check_branch
    %17 = sbr.rel (0) target = $region17
  $region16: #{gconv_transformer_forward.25} parent=0 // pred_region
    _
  $region17: #{gconv_transformer_forward.25} parent=0 // pred_fallthru
    _
  // Predicated region
  $region18: #{gconv_transformer_forward.25} parent=0 // pred_check
    _
  $region19: #{gconv_transformer_forward.25} parent=0 // pred_check_branch
    %19 = sbr.rel (0) target = $region21
  $region20: #{gconv_transformer_forward.25} parent=0 // pred_region
    _
  $region21: #{gconv_transformer_forward.25} parent=0 // pred_fallthru
    _
  %v21 = vld [vmem:[%s0] sm:$0xff]
  %v22 = vld [vmem:[%s0 + $0x8] sm:$0xff]
  %v23 = vld [vmem:[%s0 + $0x10] sm:$0xff]
  %v24 = vld [vmem:[%s0 + $0x18] sm:$0xff]
  %v25 = vld [vmem:[%s0 + $0x20] sm:$0xff]
  %v26 = vld [vmem:[%s0 + $0x28] sm:$0xff]
  %v27 = vld [vmem:[%s0 + $0x30] sm:$0xff]
  %v28 = vld [vmem:[%s0 + $0x38] sm:$0xff]
  %v29 = vld [vmem:[%s1] sm:$0x1]
  %31 = vset.pattern.permute.xlu0 0
  %32 = vperm.xlu0 %31, %v21
  %v33 = vpop.permute.xlu0 %32
  %36 = vset.pattern.permute.xlu0 0
  %37 = vperm.xlu0 %36, %v22
  %v38 = vpop.permute.xlu0 %37
  %41 = vset.pattern.permute.xlu0 0
  %42 = vperm.xlu0 %41, %v23
  %v43 = vpop.permute.xlu0 %42
  %46 = vset.pattern.permute.xlu0 0
  %47 = vperm.xlu0 %46, %v24
  %v48 = vpop.permute.xlu0 %47
  %51 = vset.pattern.permute.xlu0 0
  %52 = vperm.xlu0 %51, %v25
  %v53 = vpop.permute.xlu0 %52
  %56 = vset.pattern.permute.xlu0 0
  %57 = vperm.xlu0 %56, %v26
  %v58 = vpop.permute.xlu0 %57
  %61 = vset.pattern.permute.xlu0 0
  %62 = vperm.xlu0 %61, %v27
  %v63 = vpop.permute.xlu0 %62
  %66 = vset.pattern.permute.xlu0 0
  %67 = vperm.xlu0 %66, %v28
  %v68 = vpop.permute.xlu0 %67
  %v71 = vperm.slane %v29, 0
  %v73 = vmul.f32 %v33, %v71
  %v74 = vmul.f32 %v38, %v71
  %v75 = vmul.f32 %v43, %v71
  %v76 = vmul.f32 %v48, %v71
  %v77 = vmul.f32 %v53, %v71
  %v78 = vmul.f32 %v58, %v71
  %v79 = vmul.f32 %v63, %v71
  %v80 = vmul.f32 %v68, %v71
  %v81 = vld [vmem:[%s2] sm:$0x1]
  %v83 = vperm.slane %v81, 0
  %v85 = vadd.f32 %v73, %v83
  %v86 = vadd.f32 %v74, %v83
  %v87 = vadd.f32 %v75, %v83
  %v88 = vadd.f32 %v76, %v83
  %v89 = vadd.f32 %v77, %v83
  %v90 = vadd.f32 %v78, %v83
  %v91 = vadd.f32 %v79, %v83
  %v92 = vadd.f32 %v80, %v83
  %v93 = vmax.f32 %v85, 0.0
  %v94 = vmax.f32 %v86, 0.0
  %v95 = vmax.f32 %v87, 0.0
  %v96 = vmax.f32 %v88, 0.0
  %v97 = vmax.f32 %v89, 0.0
  %v98 = vmax.f32 %v90, 0.0
  %v99 = vmax.f32 %v91, 0.0
  %v100 = vmax.f32 %v92, 0.0
  %v101 = vld [vmem:[%s3] sm:$0xff]
  %v102 = vld [vmem:[%s3 + $0x8] sm:$0xff]
  %v103 = vld [vmem:[%s3 + $0x10] sm:$0xff]
  %v104 = vld [vmem:[%s3 + $0x18] sm:$0xff]
  %v105 = vpack.c.bf16 %v94, %v93
  %v106 = vpack.c.bf16 %v96, %v95
  %v107 = vpack.c.bf16 %v98, %v97
  %v108 = vpack.c.bf16 %v100, %v99
  %v109 = vpack.c.bf16 %v102, %v101
  %v110 = vpack.c.bf16 %v104, %v103
  %v111 = vld [vmem:[%s4] sm:$0x1]
  %v113 = vperm.slane %v111, 0
  %vm115 = vcmask 261120
  %v117 = vsel %vm115, %v105, 0
  %v120 = vsel %vm115, %v106, 0
  %v123 = vsel %vm115, %v107, 0
  %v126 = vsel %vm115, %v108, 0
  %128 = vmatpush.bf16.msra.mxu0 0
  %129 = vmatpush.bf16.msra.mxu0 0
  %130 = vmatpush.bf16.msra.mxu0 0
  %131 = vmatpush.bf16.msra.mxu0 0
  %132 = vmatpush.bf16.msra.mxu0 0
  %133 = vmatpush.bf16.msra.mxu0 0
  %134 = vmatpush.bf16.msra.mxu0 %v110
  %135 = vmatpush.bf16.msra.mxu0 %v109
  %136 = vmatmul.bf16.gmra.mxu0 %v117
  %v137 = vpop.f32.mrf.mxu0
  %v138 = vadd.f32 %v113, %v137
  %v139 = vpop.f32.mrf.mxu0
  %v140 = vadd.f32 %v113, %v139
  %141 = vmatmul.bf16.gmra.mxu0 %v120
  %v142 = vpop.f32.mrf.mxu0
  %v143 = vadd.f32 %v113, %v142
  %v144 = vpop.f32.mrf.mxu0
  %v145 = vadd.f32 %v113, %v144
  %146 = vmatmul.bf16.gmra.mxu0 %v123
  %v147 = vpop.f32.mrf.mxu0
  %v148 = vadd.f32 %v113, %v147
  %v149 = vpop.f32.mrf.mxu0
  %v150 = vadd.f32 %v113, %v149
  %151 = vmatmul.bf16.gmra.mxu0 %v126
  %v152 = vpop.f32.mrf.mxu0
  %v153 = vadd.f32 %v113, %v152
  %v154 = vpop.f32.mrf.mxu0
  %v155 = vadd.f32 %v113, %v154
  %156 = vdwg.mxu0
  %v157 = vmax.f32 %v138, 0.0
  %v158 = vmax.f32 %v140, 0.0
  %v159 = vmax.f32 %v143, 0.0
  %v160 = vmax.f32 %v145, 0.0
  %v161 = vmax.f32 %v148, 0.0
  %v162 = vmax.f32 %v150, 0.0
  %v163 = vmax.f32 %v153, 0.0
  %v164 = vmax.f32 %v155, 0.0
  %165 = vst.msk [vmem:[%s5] sm:$0xff] %vm115, %v157
  %166 = vst.msk [vmem:[%s5 + $0x8] sm:$0xff] %vm115, %v158
  %167 = vst.msk [vmem:[%s5 + $0x10] sm:$0xff] %vm115, %v159
  %168 = vst.msk [vmem:[%s5 + $0x18] sm:$0xff] %vm115, %v160
  %169 = vst.msk [vmem:[%s5 + $0x20] sm:$0xff] %vm115, %v161
  %170 = vst.msk [vmem:[%s5 + $0x28] sm:$0xff] %vm115, %v162
  %171 = vst.msk [vmem:[%s5 + $0x30] sm:$0xff] %vm115, %v163
  %172 = vst.msk [vmem:[%s5 + $0x38] sm:$0xff] %vm115, %v164
  // Predicated region
  $region22: #{gconv_transformer_forward.25} parent=0 // pred_check
    _
  $region23: #{gconv_transformer_forward.25} parent=0 // pred_check_branch
    %174 = sbr.rel (0) target = $region25
  $region24: #{gconv_transformer_forward.25} parent=0 // pred_region
    _
  $region25: #{gconv_transformer_forward.25} parent=0 // pred_fallthru
    _
  // Predicated region
  $region26: #{gconv_transformer_forward.25} parent=0 // pred_check
    _
  $region27: #{gconv_transformer_forward.25} parent=0 // pred_check_branch
    %176 = sbr.rel (0) target = $region29
  $region28: #{gconv_transformer_forward.25} parent=0 // pred_region
    _
  $region29: #{gconv_transformer_forward.25} parent=0 // pred_fallthru
    _

// kernel: gconv_transformer_forward.28
$region0: #{gconv_transformer_forward.28}
  #allocation0 [shape = 'u32[]', space=smem, size = 0x4, offset = 0x4, fixed_abs, tag = 'smem constant byte address 0x4 - core index']
  #allocation1 [shape = 'u32[72,128]{1,0:T(1,128)}', space=vmem, size = 0x9000, scoped, tag = 'internal scratch']
  %s0 = inlined_call_operand.vmem [shape: f32[64,32], index: 0, kind: input, shape index: {}]
  %s1 = inlined_call_operand.vmem [shape: f32[1,32], index: 1, kind: input, shape index: {}]
  %s2 = inlined_call_operand.vmem [shape: f32[1,32], index: 2, kind: input, shape index: {}]
  %s3 = inlined_call_operand.vmem [shape: f32[32,96], index: 3, kind: input, shape index: {}]
  %s4 = inlined_call_operand.vmem [shape: f32[1,96], index: 4, kind: input, shape index: {}]
  %s5 = inlined_call_operand.vmem [shape: f32[64,96], index: 5, kind: output, shape index: {}]
  %s6 = sld [smem:[#allocation0]]
  $region30: #{gconv_transformer_forward.28} parent=0
    _
  %s8 = ssub.s32 1, %s6
  %s9 = scalar_select 0, %s8, %s6
  // Predicated region
  $region2: #{gconv_transformer_forward.28} parent=0 // pred_check
    _
  $region3: #{gconv_transformer_forward.28} parent=0 // pred_check_branch
    %11 = sbr.rel (0) target = $region5
  $region4: #{gconv_transformer_forward.28} parent=0 // pred_region
    _
  $region5: #{gconv_transformer_forward.28} parent=0 // pred_fallthru
    _
  // Predicated region
  $region6: #{gconv_transformer_forward.28} parent=0 // pred_check
    _
  $region7: #{gconv_transformer_forward.28} parent=0 // pred_check_branch
    %13 = sbr.rel (0) target = $region9
  $region8: #{gconv_transformer_forward.28} parent=0 // pred_region
    _
  $region9: #{gconv_transformer_forward.28} parent=0 // pred_fallthru
    _
  // Predicated region
  $region10: #{gconv_transformer_forward.28} parent=0 // pred_check
    _
  $region11: #{gconv_transformer_forward.28} parent=0 // pred_check_branch
    %15 = sbr.rel (0) target = $region13
  $region12: #{gconv_transformer_forward.28} parent=0 // pred_region
    _
  $region13: #{gconv_transformer_forward.28} parent=0 // pred_fallthru
    _
  // Predicated region
  $region14: #{gconv_transformer_forward.28} parent=0 // pred_check
    _
  $region15: #{gconv_transformer_forward.28} parent=0 // pred_check_branch
    %17 = sbr.rel (0) target = $region17
  $region16: #{gconv_transformer_forward.28} parent=0 // pred_region
    _
  $region17: #{gconv_transformer_forward.28} parent=0 // pred_fallthru
    _
  // Predicated region
  $region18: #{gconv_transformer_forward.28} parent=0 // pred_check
    _
  $region19: #{gconv_transformer_forward.28} parent=0 // pred_check_branch
    %19 = sbr.rel (0) target = $region21
  $region20: #{gconv_transformer_forward.28} parent=0 // pred_region
    _
  $region21: #{gconv_transformer_forward.28} parent=0 // pred_fallthru
    _
  %v21 = vld [vmem:[%s0] sm:$0xff]
  %v22 = vld [vmem:[%s0 + $0x8] sm:$0xff]
  %v23 = vld [vmem:[%s0 + $0x10] sm:$0xff]
  %v24 = vld [vmem:[%s0 + $0x18] sm:$0xff]
  %v25 = vld [vmem:[%s0 + $0x20] sm:$0xff]
  %v26 = vld [vmem:[%s0 + $0x28] sm:$0xff]
  %v27 = vld [vmem:[%s0 + $0x30] sm:$0xff]
  %v28 = vld [vmem:[%s0 + $0x38] sm:$0xff]
  %v29 = vld [vmem:[%s1] sm:$0x1]
  %v30 = vld [vmem:[%s2] sm:$0x1]
  %vm31 = vcmask 261120
  %v32 = vsel %vm31, %v21, 0.0
  %33 = vadd.xlane.f32.xlu0 %v32
  %v34 = vpop.xlane.xlu0 %33
  %v35 = vsel %vm31, %v22, 0.0
  %36 = vadd.xlane.f32.xlu0 %v35
  %v37 = vpop.xlane.xlu0 %36
  %v38 = vsel %vm31, %v23, 0.0
  %39 = vadd.xlane.f32.xlu0 %v38
  %v40 = vpop.xlane.xlu0 %39
  %v41 = vsel %vm31, %v24, 0.0
  %42 = vadd.xlane.f32.xlu0 %v41
  %v43 = vpop.xlane.xlu0 %42
  %v44 = vsel %vm31, %v25, 0.0
  %45 = vadd.xlane.f32.xlu0 %v44
  %v46 = vpop.xlane.xlu0 %45
  %v47 = vsel %vm31, %v26, 0.0
  %48 = vadd.xlane.f32.xlu0 %v47
  %v49 = vpop.xlane.xlu0 %48
  %v50 = vsel %vm31, %v27, 0.0
  %51 = vadd.xlane.f32.xlu0 %v50
  %v52 = vpop.xlane.xlu0 %51
  %v53 = vsel %vm31, %v28, 0.0
  %54 = vadd.xlane.f32.xlu0 %v53
  %v55 = vpop.xlane.xlu0 %54
  %v56 = vrcp.pop 32.0
  %v57 = vmul.f32 32.0, %v56
  %v58 = vsub.f32 1.0, %v57
  %v59 = vmul.f32 %v56, %v58
  %v60 = vadd.f32 %v56, %v59
  %vm61 = vweird.f32 %v56
  %v62 = vsel %vm61, %v56, %v60
  %v63 = vmul.f32 %v34, %v62
  %v64 = vmul.f32 %v37, %v62
  %v65 = vmul.f32 %v40, %v62
  %v66 = vmul.f32 %v43, %v62
  %v67 = vmul.f32 %v46, %v62
  %v68 = vmul.f32 %v49, %v62
  %v69 = vmul.f32 %v52, %v62
  %v70 = vmul.f32 %v55, %v62
  %v71 = vsub.f32 %v21, %v63
  %v72 = vsub.f32 %v22, %v64
  %v73 = vsub.f32 %v23, %v65
  %v74 = vsub.f32 %v24, %v66
  %v75 = vsub.f32 %v25, %v67
  %v76 = vsub.f32 %v26, %v68
  %v77 = vsub.f32 %v27, %v69
  %v78 = vsub.f32 %v28, %v70
  %v79 = vmul.f32 %v71, %v71
  %v80 = vmul.f32 %v72, %v72
  %v81 = vmul.f32 %v73, %v73
  %v82 = vmul.f32 %v74, %v74
  %v83 = vmul.f32 %v75, %v75
  %v84 = vmul.f32 %v76, %v76
  %v85 = vmul.f32 %v77, %v77
  %v86 = vmul.f32 %v78, %v78
  %v87 = vsel %vm31, %v79, 0.0
  %88 = vadd.xlane.f32.xlu0 %v87
  %v89 = vpop.xlane.xlu0 %88
  %v90 = vsel %vm31, %v80, 0.0
  %91 = vadd.xlane.f32.xlu0 %v90
  %v92 = vpop.xlane.xlu0 %91
  %v93 = vsel %vm31, %v81, 0.0
  %94 = vadd.xlane.f32.xlu0 %v93
  %v95 = vpop.xlane.xlu0 %94
  %v96 = vsel %vm31, %v82, 0.0
  %97 = vadd.xlane.f32.xlu0 %v96
  %v98 = vpop.xlane.xlu0 %97
  %v99 = vsel %vm31, %v83, 0.0
  %100 = vadd.xlane.f32.xlu0 %v99
  %v101 = vpop.xlane.xlu0 %100
  %v102 = vsel %vm31, %v84, 0.0
  %103 = vadd.xlane.f32.xlu0 %v102
  %v104 = vpop.xlane.xlu0 %103
  %v105 = vsel %vm31, %v85, 0.0
  %106 = vadd.xlane.f32.xlu0 %v105
  %v107 = vpop.xlane.xlu0 %106
  %v108 = vsel %vm31, %v86, 0.0
  %109 = vadd.xlane.f32.xlu0 %v108
  %v110 = vpop.xlane.xlu0 %109
  %v111 = vmul.f32 %v89, %v62
  %v112 = vmul.f32 %v92, %v62
  %v113 = vmul.f32 %v95, %v62
  %v114 = vmul.f32 %v98, %v62
  %v115 = vmul.f32 %v101, %v62
  %v116 = vmul.f32 %v104, %v62
  %v117 = vmul.f32 %v107, %v62
  %v118 = vmul.f32 %v110, %v62
  %v119 = vadd.f32 %v111, 1e-05
  %v120 = vadd.f32 %v112, 1e-05
  %v121 = vadd.f32 %v113, 1e-05
  %v122 = vadd.f32 %v114, 1e-05
  %v123 = vadd.f32 %v115, 1e-05
  %v124 = vadd.f32 %v116, 1e-05
  %v125 = vadd.f32 %v117, 1e-05
  %v126 = vadd.f32 %v118, 1e-05
  %v127 = vrsqrt.pop %v119
  %v128 = vmul.f32 %v127, %v119
  %v129 = vmul.f32 %v128, %v127
  %v130 = vmul.f32 0.5, %v129
  %v131 = vsub.f32 1.5, %v130
  %v132 = vmul.f32 %v127, %v131
  %vm133 = vweird.f32 %v119
  %vm134 = vweird.f32 %v127
  %vm135 = vmor %vm133, %vm134
  %v136 = vsel %vm135, %v127, %v132
  %v137 = vrsqrt.pop %v120
  %v138 = vmul.f32 %v137, %v120
  %v139 = vmul.f32 %v138, %v137
  %v140 = vmul.f32 0.5, %v139
  %v141 = vsub.f32 1.5, %v140
  %v142 = vmul.f32 %v137, %v141
  %vm143 = vweird.f32 %v120
  %vm144 = vweird.f32 %v137
  %vm145 = vmor %vm143, %vm144
  %v146 = vsel %vm145, %v137, %v142
  %v147 = vrsqrt.pop %v121
  %v148 = vmul.f32 %v147, %v121
  %v149 = vmul.f32 %v148, %v147
  %v150 = vmul.f32 0.5, %v149
  %v151 = vsub.f32 1.5, %v150
  %v152 = vmul.f32 %v147, %v151
  %vm153 = vweird.f32 %v121
  %vm154 = vweird.f32 %v147
  %vm155 = vmor %vm153, %vm154
  %v156 = vsel %vm155, %v147, %v152
  %v157 = vrsqrt.pop %v122
  %v158 = vmul.f32 %v157, %v122
  %v159 = vmul.f32 %v158, %v157
  %v160 = vmul.f32 0.5, %v159
  %v161 = vsub.f32 1.5, %v160
  %v162 = vmul.f32 %v157, %v161
  %vm163 = vweird.f32 %v122
  %vm164 = vweird.f32 %v157
  %vm165 = vmor %vm163, %vm164
  %v166 = vsel %vm165, %v157, %v162
  %v167 = vrsqrt.pop %v123
  %v168 = vmul.f32 %v167, %v123
  %v169 = vmul.f32 %v168, %v167
  %v170 = vmul.f32 0.5, %v169
  %v171 = vsub.f32 1.5, %v170
  %v172 = vmul.f32 %v167, %v171
  %vm173 = vweird.f32 %v123
  %vm174 = vweird.f32 %v167
  %vm175 = vmor %vm173, %vm174
  %v176 = vsel %vm175, %v167, %v172
  %v177 = vrsqrt.pop %v124
  %v178 = vmul.f32 %v177, %v124
  %v179 = vmul.f32 %v178, %v177
  %v180 = vmul.f32 0.5, %v179
  %v181 = vsub.f32 1.5, %v180
  %v182 = vmul.f32 %v177, %v181
  %vm183 = vweird.f32 %v124
  %vm184 = vweird.f32 %v177
  %vm185 = vmor %vm183, %vm184
  %v186 = vsel %vm185, %v177, %v182
  %v187 = vrsqrt.pop %v125
  %v188 = vmul.f32 %v187, %v125
  %v189 = vmul.f32 %v188, %v187
  %v190 = vmul.f32 0.5, %v189
  %v191 = vsub.f32 1.5, %v190
  %v192 = vmul.f32 %v187, %v191
  %vm193 = vweird.f32 %v125
  %vm194 = vweird.f32 %v187
  %vm195 = vmor %vm193, %vm194
  %v196 = vsel %vm195, %v187, %v192
  %v197 = vrsqrt.pop %v126
  %v198 = vmul.f32 %v197, %v126
  %v199 = vmul.f32 %v198, %v197
  %v200 = vmul.f32 0.5, %v199
  %v201 = vsub.f32 1.5, %v200
  %v202 = vmul.f32 %v197, %v201
  %vm203 = vweird.f32 %v126
  %vm204 = vweird.f32 %v197
  %vm205 = vmor %vm203, %vm204
  %v206 = vsel %vm205, %v197, %v202
  %v207 = vmul.f32 %v71, %v136
  %v208 = vmul.f32 %v72, %v146
  %v209 = vmul.f32 %v73, %v156
  %v210 = vmul.f32 %v74, %v166
  %v211 = vmul.f32 %v75, %v176
  %v212 = vmul.f32 %v76, %v186
  %v213 = vmul.f32 %v77, %v196
  %v214 = vmul.f32 %v78, %v206
  %v216 = vperm.slane %v29, 0
  %v218 = vmul.f32 %v207, %v216
  %v219 = vmul.f32 %v208, %v216
  %v220 = vmul.f32 %v209, %v216
  %v221 = vmul.f32 %v210, %v216
  %v222 = vmul.f32 %v211, %v216
  %v223 = vmul.f32 %v212, %v216
  %v224 = vmul.f32 %v213, %v216
  %v225 = vmul.f32 %v214, %v216
  %v227 = vperm.slane %v30, 0
  %v229 = vadd.f32 %v218, %v227
  %v230 = vadd.f32 %v219, %v227
  %v231 = vadd.f32 %v220, %v227
  %v232 = vadd.f32 %v221, %v227
  %v233 = vadd.f32 %v222, %v227
  %v234 = vadd.f32 %v223, %v227
  %v235 = vadd.f32 %v224, %v227
  %v236 = vadd.f32 %v225, %v227
  %v237 = vld [vmem:[%s3] sm:$0xff]
  %v238 = vld [vmem:[%s3 + $0x8] sm:$0xff]
  %v239 = vld [vmem:[%s3 + $0x10] sm:$0xff]
  %v240 = vld [vmem:[%s3 + $0x18] sm:$0xff]
  %v241 = vpack.c.bf16 %v230, %v229
  %v242 = vpack.c.bf16 %v232, %v231
  %v243 = vpack.c.bf16 %v234, %v233
  %v244 = vpack.c.bf16 %v236, %v235
  %v245 = vpack.c.bf16 %v238, %v237
  %v246 = vpack.c.bf16 %v240, %v239
  %v247 = vld [vmem:[%s4] sm:$0x1]
  %v249 = vperm.slane %v247, 0
  %v252 = vsel %vm31, %v241, 0
  %v255 = vsel %vm31, %v242, 0
  %v258 = vsel %vm31, %v243, 0
  %v261 = vsel %vm31, %v244, 0
  %263 = vmatpush.bf16.msra.mxu0 0
  %264 = vmatpush.bf16.msra.mxu0 0
  %265 = vmatpush.bf16.msra.mxu0 0
  %266 = vmatpush.bf16.msra.mxu0 0
  %267 = vmatpush.bf16.msra.mxu0 0
  %268 = vmatpush.bf16.msra.mxu0 0
  %269 = vmatpush.bf16.msra.mxu0 %v246
  %270 = vmatpush.bf16.msra.mxu0 %v245
  %271 = vmatmul.bf16.gmra.mxu0 %v252
  %v272 = vpop.f32.mrf.mxu0
  %v273 = vadd.f32 %v249, %v272
  %v274 = vpop.f32.mrf.mxu0
  %v275 = vadd.f32 %v249, %v274
  %276 = vmatmul.bf16.gmra.mxu0 %v255
  %v277 = vpop.f32.mrf.mxu0
  %v278 = vadd.f32 %v249, %v277
  %v279 = vpop.f32.mrf.mxu0
  %v280 = vadd.f32 %v249, %v279
  %281 = vmatmul.bf16.gmra.mxu0 %v258
  %v282 = vpop.f32.mrf.mxu0
  %v283 = vadd.f32 %v249, %v282
  %v284 = vpop.f32.mrf.mxu0
  %v285 = vadd.f32 %v249, %v284
  %286 = vmatmul.bf16.gmra.mxu0 %v261
  %v287 = vpop.f32.mrf.mxu0
  %v288 = vadd.f32 %v249, %v287
  %v289 = vpop.f32.mrf.mxu0
  %v290 = vadd.f32 %v249, %v289
  %291 = vdwg.mxu0
  %vm292 = vcmask 785408
  %293 = vst.msk [vmem:[%s5] sm:$0xff] %vm292, %v273
  %294 = vst.msk [vmem:[%s5 + $0x8] sm:$0xff] %vm292, %v275
  %295 = vst.msk [vmem:[%s5 + $0x10] sm:$0xff] %vm292, %v278
  %296 = vst.msk [vmem:[%s5 + $0x18] sm:$0xff] %vm292, %v280
  %297 = vst.msk [vmem:[%s5 + $0x20] sm:$0xff] %vm292, %v283
  %298 = vst.msk [vmem:[%s5 + $0x28] sm:$0xff] %vm292, %v285
  %299 = vst.msk [vmem:[%s5 + $0x30] sm:$0xff] %vm292, %v288
  %300 = vst.msk [vmem:[%s5 + $0x38] sm:$0xff] %vm292, %v290
  // Predicated region
  $region22: #{gconv_transformer_forward.28} parent=0 // pred_check
    _
  $region23: #{gconv_transformer_forward.28} parent=0 // pred_check_branch
    %302 = sbr.rel (0) target = $region25
  $region24: #{gconv_transformer_forward.28} parent=0 // pred_region
    _
  $region25: #{gconv_transformer_forward.28} parent=0 // pred_fallthru
    _
  // Predicated region
  $region26: #{gconv_transformer_forward.28} parent=0 // pred_check
    _
  $region27: #{gconv_transformer_forward.28} parent=0 // pred_check_branch
    %304 = sbr.rel (0) target = $region29
  $region28: #{gconv_transformer_forward.28} parent=0 // pred_region
    _
  $region29: #{gconv_transformer_forward.28} parent=0 // pred_fallthru
    _

// kernel: gconv_transformer_forward.30
$region0: #{gconv_transformer_forward.30}
  #allocation0 [shape = 'u32[]', space=smem, size = 0x4, offset = 0x4, fixed_abs, tag = 'smem constant byte address 0x4 - core index']
  #allocation1 [shape = 'u32[72,128]{1,0:T(1,128)}', space=vmem, size = 0x9000, scoped, tag = 'internal scratch']
  %s0 = inlined_call_operand.vmem [shape: f32[64,32], index: 0, kind: input, shape index: {}]
  %s1 = inlined_call_operand.vmem [shape: f32[32,32], index: 1, kind: input, shape index: {}]
  %s2 = inlined_call_operand.vmem [shape: f32[1,32], index: 2, kind: input, shape index: {}]
  %s3 = inlined_call_operand.vmem [shape: f32[64,32], index: 3, kind: input, shape index: {}]
  %s4 = inlined_call_operand.vmem [shape: f32[32,32], index: 4, kind: input, shape index: {}]
  %s5 = inlined_call_operand.vmem [shape: f32[1,32], index: 5, kind: input, shape index: {}]
  %s6 = inlined_call_operand.vmem [shape: f32[64,32], index: 6, kind: output, shape index: {}]
  %s7 = sld [smem:[#allocation0]]
  $region34: #{gconv_transformer_forward.30} parent=0
    _
  %s9 = ssub.s32 1, %s7
  %s10 = scalar_select 0, %s9, %s7
  // Predicated region
  $region2: #{gconv_transformer_forward.30} parent=0 // pred_check
    _
  $region3: #{gconv_transformer_forward.30} parent=0 // pred_check_branch
    %12 = sbr.rel (0) target = $region5
  $region4: #{gconv_transformer_forward.30} parent=0 // pred_region
    _
  $region5: #{gconv_transformer_forward.30} parent=0 // pred_fallthru
    _
  // Predicated region
  $region6: #{gconv_transformer_forward.30} parent=0 // pred_check
    _
  $region7: #{gconv_transformer_forward.30} parent=0 // pred_check_branch
    %14 = sbr.rel (0) target = $region9
  $region8: #{gconv_transformer_forward.30} parent=0 // pred_region
    _
  $region9: #{gconv_transformer_forward.30} parent=0 // pred_fallthru
    _
  // Predicated region
  $region10: #{gconv_transformer_forward.30} parent=0 // pred_check
    _
  $region11: #{gconv_transformer_forward.30} parent=0 // pred_check_branch
    %16 = sbr.rel (0) target = $region13
  $region12: #{gconv_transformer_forward.30} parent=0 // pred_region
    _
  $region13: #{gconv_transformer_forward.30} parent=0 // pred_fallthru
    _
  // Predicated region
  $region14: #{gconv_transformer_forward.30} parent=0 // pred_check
    _
  $region15: #{gconv_transformer_forward.30} parent=0 // pred_check_branch
    %18 = sbr.rel (0) target = $region17
  $region16: #{gconv_transformer_forward.30} parent=0 // pred_region
    _
  $region17: #{gconv_transformer_forward.30} parent=0 // pred_fallthru
    _
  // Predicated region
  $region18: #{gconv_transformer_forward.30} parent=0 // pred_check
    _
  $region19: #{gconv_transformer_forward.30} parent=0 // pred_check_branch
    %20 = sbr.rel (0) target = $region21
  $region20: #{gconv_transformer_forward.30} parent=0 // pred_region
    _
  $region21: #{gconv_transformer_forward.30} parent=0 // pred_fallthru
    _
  // Predicated region
  $region22: #{gconv_transformer_forward.30} parent=0 // pred_check
    _
  $region23: #{gconv_transformer_forward.30} parent=0 // pred_check_branch
    %22 = sbr.rel (0) target = $region25
  $region24: #{gconv_transformer_forward.30} parent=0 // pred_region
    _
  $region25: #{gconv_transformer_forward.30} parent=0 // pred_fallthru
    _
  %v24 = vld [vmem:[%s0] sm:$0xff]
  %v25 = vld [vmem:[%s0 + $0x8] sm:$0xff]
  %v26 = vld [vmem:[%s0 + $0x10] sm:$0xff]
  %v27 = vld [vmem:[%s0 + $0x18] sm:$0xff]
  %v28 = vld [vmem:[%s0 + $0x20] sm:$0xff]
  %v29 = vld [vmem:[%s0 + $0x28] sm:$0xff]
  %v30 = vld [vmem:[%s0 + $0x30] sm:$0xff]
  %v31 = vld [vmem:[%s0 + $0x38] sm:$0xff]
  %v32 = vld [vmem:[%s1] sm:$0xff]
  %v33 = vld [vmem:[%s1 + $0x8] sm:$0xff]
  %v34 = vld [vmem:[%s1 + $0x10] sm:$0xff]
  %v35 = vld [vmem:[%s1 + $0x18] sm:$0xff]
  %v36 = vpack.c.bf16 %v25, %v24
  %v37 = vpack.c.bf16 %v27, %v26
  %v38 = vpack.c.bf16 %v29, %v28
  %v39 = vpack.c.bf16 %v31, %v30
  %v40 = vpack.c.bf16 %v33, %v32
  %v41 = vpack.c.bf16 %v35, %v34
  %v42 = vld [vmem:[%s2] sm:$0x1]
  %v44 = vperm.slane %v42, 0
  %vm46 = vcmask 261120
  %v48 = vsel %vm46, %v36, 0
  %v51 = vsel %vm46, %v37, 0
  %v54 = vsel %vm46, %v38, 0
  %v57 = vsel %vm46, %v39, 0
  %59 = vmatpush.bf16.msra.mxu0 0
  %60 = vmatpush.bf16.msra.mxu0 0
  %61 = vmatpush.bf16.msra.mxu0 0
  %62 = vmatpush.bf16.msra.mxu0 0
  %63 = vmatpush.bf16.msra.mxu0 0
  %64 = vmatpush.bf16.msra.mxu0 0
  %65 = vmatpush.bf16.msra.mxu0 %v41
  %66 = vmatpush.bf16.msra.mxu0 %v40
  %67 = vmatmul.bf16.gmra.mxu0 %v48
  %v68 = vpop.f32.mrf.mxu0
  %v69 = vadd.f32 %v44, %v68
  %v70 = vpop.f32.mrf.mxu0
  %v71 = vadd.f32 %v44, %v70
  %72 = vmatmul.bf16.gmra.mxu0 %v51
  %v73 = vpop.f32.mrf.mxu0
  %v74 = vadd.f32 %v44, %v73
  %v75 = vpop.f32.mrf.mxu0
  %v76 = vadd.f32 %v44, %v75
  %77 = vmatmul.bf16.gmra.mxu0 %v54
  %v78 = vpop.f32.mrf.mxu0
  %v79 = vadd.f32 %v44, %v78
  %v80 = vpop.f32.mrf.mxu0
  %v81 = vadd.f32 %v44, %v80
  %82 = vmatmul.bf16.gmra.mxu0 %v57
  %v83 = vpop.f32.mrf.mxu0
  %v84 = vadd.f32 %v44, %v83
  %v85 = vpop.f32.mrf.mxu0
  %v86 = vadd.f32 %v44, %v85
  %87 = vdwg.mxu0
  %v88 = vld [vmem:[%s3] sm:$0xff]
  %v89 = vld [vmem:[%s3 + $0x8] sm:$0xff]
  %v90 = vld [vmem:[%s3 + $0x10] sm:$0xff]
  %v91 = vld [vmem:[%s3 + $0x18] sm:$0xff]
  %v92 = vld [vmem:[%s3 + $0x20] sm:$0xff]
  %v93 = vld [vmem:[%s3 + $0x28] sm:$0xff]
  %v94 = vld [vmem:[%s3 + $0x30] sm:$0xff]
  %v95 = vld [vmem:[%s3 + $0x38] sm:$0xff]
  %v96 = vld [vmem:[%s4] sm:$0xff]
  %v97 = vld [vmem:[%s4 + $0x8] sm:$0xff]
  %v98 = vld [vmem:[%s4 + $0x10] sm:$0xff]
  %v99 = vld [vmem:[%s4 + $0x18] sm:$0xff]
  %v100 = vpack.c.bf16 %v89, %v88
  %v101 = vpack.c.bf16 %v91, %v90
  %v102 = vpack.c.bf16 %v93, %v92
  %v103 = vpack.c.bf16 %v95, %v94
  %v104 = vpack.c.bf16 %v97, %v96
  %v105 = vpack.c.bf16 %v99, %v98
  %v107 = vsel %vm46, %v100, 0
  %v110 = vsel %vm46, %v101, 0
  %v113 = vsel %vm46, %v102, 0
  %v116 = vsel %vm46, %v103, 0
  %118 = vmatpush.bf16.msra.mxu0 0
  %119 = vmatpush.bf16.msra.mxu0 0
  %120 = vmatpush.bf16.msra.mxu0 0
  %121 = vmatpush.bf16.msra.mxu0 0
  %122 = vmatpush.bf16.msra.mxu0 0
  %123 = vmatpush.bf16.msra.mxu0 0
  %124 = vmatpush.bf16.msra.mxu0 %v105
  %125 = vmatpush.bf16.msra.mxu0 %v104
  %126 = vmatmul.bf16.gmra.mxu0 %v107
  %v127 = vpop.f32.mrf.mxu0
  %v128 = vadd.f32 0.0, %v127
  %v129 = vpop.f32.mrf.mxu0
  %v130 = vadd.f32 0.0, %v129
  %131 = vmatmul.bf16.gmra.mxu0 %v110
  %v132 = vpop.f32.mrf.mxu0
  %v133 = vadd.f32 0.0, %v132
  %v134 = vpop.f32.mrf.mxu0
  %v135 = vadd.f32 0.0, %v134
  %136 = vmatmul.bf16.gmra.mxu0 %v113
  %v137 = vpop.f32.mrf.mxu0
  %v138 = vadd.f32 0.0, %v137
  %v139 = vpop.f32.mrf.mxu0
  %v140 = vadd.f32 0.0, %v139
  %141 = vmatmul.bf16.gmra.mxu0 %v116
  %v142 = vpop.f32.mrf.mxu0
  %v143 = vadd.f32 0.0, %v142
  %v144 = vpop.f32.mrf.mxu0
  %v145 = vadd.f32 0.0, %v144
  %146 = vdwg.mxu0
  %v147 = vadd.f32 %v69, %v128
  %v148 = vadd.f32 %v71, %v130
  %v149 = vadd.f32 %v74, %v133
  %v150 = vadd.f32 %v76, %v135
  %v151 = vadd.f32 %v79, %v138
  %v152 = vadd.f32 %v81, %v140
  %v153 = vadd.f32 %v84, %v143
  %v154 = vadd.f32 %v86, %v145
  %v155 = vld [vmem:[%s5] sm:$0x1]
  %v157 = vperm.slane %v155, 0
  %v159 = vadd.f32 %v147, %v157
  %v160 = vadd.f32 %v148, %v157
  %v161 = vadd.f32 %v149, %v157
  %v162 = vadd.f32 %v150, %v157
  %v163 = vadd.f32 %v151, %v157
  %v164 = vadd.f32 %v152, %v157
  %v165 = vadd.f32 %v153, %v157
  %v166 = vadd.f32 %v154, %v157
  %167 = vst.msk [vmem:[%s6] sm:$0xff] %vm46, %v159
  %168 = vst.msk [vmem:[%s6 + $0x8] sm:$0xff] %vm46, %v160
  %169 = vst.msk [vmem:[%s6 + $0x10] sm:$0xff] %vm46, %v161
  %170 = vst.msk [vmem:[%s6 + $0x18] sm:$0xff] %vm46, %v162
  %171 = vst.msk [vmem:[%s6 + $0x20] sm:$0xff] %vm46, %v163
  %172 = vst.msk [vmem:[%s6 + $0x28] sm:$0xff] %vm46, %v164
  %173 = vst.msk [vmem:[%s6 + $0x30] sm:$0xff] %vm46, %v165
  %174 = vst.msk [vmem:[%s6 + $0x38] sm:$0xff] %vm46, %v166
  // Predicated region
  $region26: #{gconv_transformer_forward.30} parent=0 // pred_check
    _
  $region27: #{gconv_transformer_forward.30} parent=0 // pred_check_branch
    %176 = sbr.rel (0) target = $region29
  $region28: #{gconv_transformer_forward.30} parent=0 // pred_region
    _
  $region29: #{gconv_transformer_forward.30} parent=0 // pred_fallthru
    _
  // Predicated region
  $region30: #{gconv_transformer_forward.30} parent=0 // pred_check
    _
  $region31: #{gconv_transformer_forward.30} parent=0 // pred_check_branch
    %178 = sbr.rel (0) target = $region33
  $region32: #{gconv_transformer_forward.30} parent=0 // pred_region
    _
  $region33: #{gconv_transformer_forward.30} parent=0 // pred_fallthru
    _

// kernel: gconv_transformer_forward.29
$region0: #{gconv_transformer_forward.29}
  #allocation0 [shape = 'u32[]', space=smem, size = 0x4, offset = 0x4, fixed_abs, tag = 'smem constant byte address 0x4 - core index']
  #allocation1 [shape = 'u32[72,128]{1,0:T(1,128)}', space=vmem, size = 0x9000, scoped, tag = 'internal scratch']
  %s0 = inlined_call_operand.vmem [shape: f32[16,8,16], index: 0, kind: input, shape index: {}]
  %s1 = inlined_call_operand.vmem [shape: f32[16,8,16], index: 1, kind: input, shape index: {}]
  %s2 = inlined_call_operand.vmem [shape: f32[16,8,16], index: 2, kind: input, shape index: {}]
  %s3 = inlined_call_operand.vmem [shape: f32[8,8], index: 3, kind: input, shape index: {}]
  %s4 = inlined_call_operand.vmem [shape: f32[16,8,16], index: 4, kind: output, shape index: {}]
  %s5 = sld [smem:[#allocation0]]
  $region26: #{gconv_transformer_forward.29} parent=0
    _
  %s7 = ssub.s32 1, %s5
  %s8 = scalar_select 0, %s7, %s5
  // Predicated region
  $region2: #{gconv_transformer_forward.29} parent=0 // pred_check
    _
  $region3: #{gconv_transformer_forward.29} parent=0 // pred_check_branch
    %10 = sbr.rel (0) target = $region5
  $region4: #{gconv_transformer_forward.29} parent=0 // pred_region
    _
  $region5: #{gconv_transformer_forward.29} parent=0 // pred_fallthru
    _
  // Predicated region
  $region6: #{gconv_transformer_forward.29} parent=0 // pred_check
    _
  $region7: #{gconv_transformer_forward.29} parent=0 // pred_check_branch
    %12 = sbr.rel (0) target = $region9
  $region8: #{gconv_transformer_forward.29} parent=0 // pred_region
    _
  $region9: #{gconv_transformer_forward.29} parent=0 // pred_fallthru
    _
  // Predicated region
  $region10: #{gconv_transformer_forward.29} parent=0 // pred_check
    _
  $region11: #{gconv_transformer_forward.29} parent=0 // pred_check_branch
    %14 = sbr.rel (0) target = $region13
  $region12: #{gconv_transformer_forward.29} parent=0 // pred_region
    _
  $region13: #{gconv_transformer_forward.29} parent=0 // pred_fallthru
    _
  // Predicated region
  $region14: #{gconv_transformer_forward.29} parent=0 // pred_check
    _
  $region15: #{gconv_transformer_forward.29} parent=0 // pred_check_branch
    %16 = sbr.rel (0) target = $region17
  $region16: #{gconv_transformer_forward.29} parent=0 // pred_region
    _
  $region17: #{gconv_transformer_forward.29} parent=0 // pred_fallthru
    _
  %v18 = vld [vmem:[%s0] sm:$0xff]
  %v19 = vld [vmem:[%s0 + $0x8] sm:$0xff]
  %v20 = vld [vmem:[%s0 + $0x10] sm:$0xff]
  %v21 = vld [vmem:[%s0 + $0x18] sm:$0xff]
  %v22 = vld [vmem:[%s0 + $0x20] sm:$0xff]
  %v23 = vld [vmem:[%s0 + $0x28] sm:$0xff]
  %v24 = vld [vmem:[%s0 + $0x30] sm:$0xff]
  %v25 = vld [vmem:[%s0 + $0x38] sm:$0xff]
  %v26 = vld [vmem:[%s0 + $0x40] sm:$0xff]
  %v27 = vld [vmem:[%s0 + $0x48] sm:$0xff]
  %v28 = vld [vmem:[%s0 + $0x50] sm:$0xff]
  %v29 = vld [vmem:[%s0 + $0x58] sm:$0xff]
  %v30 = vld [vmem:[%s0 + $0x60] sm:$0xff]
  %v31 = vld [vmem:[%s0 + $0x68] sm:$0xff]
  %v32 = vld [vmem:[%s0 + $0x70] sm:$0xff]
  %v33 = vld [vmem:[%s0 + $0x78] sm:$0xff]
  %v34 = vpack.c.bf16 %v18, %v18
  %v35 = vpack.c.bf16 %v19, %v19
  %v36 = vpack.c.bf16 %v20, %v20
  %v37 = vpack.c.bf16 %v21, %v21
  %v38 = vpack.c.bf16 %v22, %v22
  %v39 = vpack.c.bf16 %v23, %v23
  %v40 = vpack.c.bf16 %v24, %v24
  %v41 = vpack.c.bf16 %v25, %v25
  %v42 = vpack.c.bf16 %v26, %v26
  %v43 = vpack.c.bf16 %v27, %v27
  %v44 = vpack.c.bf16 %v28, %v28
  %v45 = vpack.c.bf16 %v29, %v29
  %v46 = vpack.c.bf16 %v30, %v30
  %v47 = vpack.c.bf16 %v31, %v31
  %v48 = vpack.c.bf16 %v32, %v32
  %v49 = vpack.c.bf16 %v33, %v33
  %v50 = vld [vmem:[%s1] sm:$0xff]
  %v51 = vld [vmem:[%s1 + $0x8] sm:$0xff]
  %v52 = vld [vmem:[%s1 + $0x10] sm:$0xff]
  %v53 = vld [vmem:[%s1 + $0x18] sm:$0xff]
  %v54 = vld [vmem:[%s1 + $0x20] sm:$0xff]
  %v55 = vld [vmem:[%s1 + $0x28] sm:$0xff]
  %v56 = vld [vmem:[%s1 + $0x30] sm:$0xff]
  %v57 = vld [vmem:[%s1 + $0x38] sm:$0xff]
  %v58 = vld [vmem:[%s1 + $0x40] sm:$0xff]
  %v59 = vld [vmem:[%s1 + $0x48] sm:$0xff]
  %v60 = vld [vmem:[%s1 + $0x50] sm:$0xff]
  %v61 = vld [vmem:[%s1 + $0x58] sm:$0xff]
  %v62 = vld [vmem:[%s1 + $0x60] sm:$0xff]
  %v63 = vld [vmem:[%s1 + $0x68] sm:$0xff]
  %v64 = vld [vmem:[%s1 + $0x70] sm:$0xff]
  %v65 = vld [vmem:[%s1 + $0x78] sm:$0xff]
  %v66 = vpack.c.bf16 %v50, %v50
  %v67 = vpack.c.bf16 %v51, %v51
  %v68 = vpack.c.bf16 %v52, %v52
  %v69 = vpack.c.bf16 %v53, %v53
  %v70 = vpack.c.bf16 %v54, %v54
  %v71 = vpack.c.bf16 %v55, %v55
  %v72 = vpack.c.bf16 %v56, %v56
  %v73 = vpack.c.bf16 %v57, %v57
  %v74 = vpack.c.bf16 %v58, %v58
  %v75 = vpack.c.bf16 %v59, %v59
  %v76 = vpack.c.bf16 %v60, %v60
  %v77 = vpack.c.bf16 %v61, %v61
  %v78 = vpack.c.bf16 %v62, %v62
  %v79 = vpack.c.bf16 %v63, %v63
  %v80 = vpack.c.bf16 %v64, %v64
  %v81 = vpack.c.bf16 %v65, %v65
  %vm82 = vcmask 130048
  %v84 = vsel %vm82, %v34, 0
  %v87 = vsel %vm82, %v66, 0
  %89 = vmatpush.bf16.xpose.msra.mxu0 0
  %90 = vmatpush.bf16.xpose.msra.mxu0 0
  %91 = vmatpush.bf16.xpose.msra.mxu0 0
  %92 = vmatpush.bf16.xpose.msra.mxu0 0
  %93 = vmatpush.bf16.xpose.msra.mxu0 0
  %94 = vmatpush.bf16.xpose.msra.mxu0 0
  %95 = vmatpush.bf16.xpose.msra.mxu0 0
  %96 = vmatpush.bf16.xpose.msra.mxu0 %v87
  %97 = vmatmul.bf16.gmra.mxu0 %v84
  %v98 = vpop.f32.mrf.mxu0
  %v99 = vadd.f32 0.0, %v98
  %v100 = vpop.f32.mrf.mxu0
  %101 = vdwg.mxu0
  %v103 = vsel %vm82, %v35, 0
  %v106 = vsel %vm82, %v67, 0
  %108 = vmatpush.bf16.xpose.msra.mxu0 0
  %109 = vmatpush.bf16.xpose.msra.mxu0 0
  %110 = vmatpush.bf16.xpose.msra.mxu0 0
  %111 = vmatpush.bf16.xpose.msra.mxu0 0
  %112 = vmatpush.bf16.xpose.msra.mxu0 0
  %113 = vmatpush.bf16.xpose.msra.mxu0 0
  %114 = vmatpush.bf16.xpose.msra.mxu0 0
  %115 = vmatpush.bf16.xpose.msra.mxu0 %v106
  %116 = vmatmul.bf16.gmra.mxu0 %v103
  %v117 = vpop.f32.mrf.mxu0
  %v118 = vadd.f32 0.0, %v117
  %v119 = vpop.f32.mrf.mxu0
  %120 = vdwg.mxu0
  %v122 = vsel %vm82, %v36, 0
  %v125 = vsel %vm82, %v68, 0
  %127 = vmatpush.bf16.xpose.msra.mxu0 0
  %128 = vmatpush.bf16.xpose.msra.mxu0 0
  %129 = vmatpush.bf16.xpose.msra.mxu0 0
  %130 = vmatpush.bf16.xpose.msra.mxu0 0
  %131 = vmatpush.bf16.xpose.msra.mxu0 0
  %132 = vmatpush.bf16.xpose.msra.mxu0 0
  %133 = vmatpush.bf16.xpose.msra.mxu0 0
  %134 = vmatpush.bf16.xpose.msra.mxu0 %v125
  %135 = vmatmul.bf16.gmra.mxu0 %v122
  %v136 = vpop.f32.mrf.mxu0
  %v137 = vadd.f32 0.0, %v136
  %v138 = vpop.f32.mrf.mxu0
  %139 = vdwg.mxu0
  %v141 = vsel %vm82, %v37, 0
  %v144 = vsel %vm82, %v69, 0
  %146 = vmatpush.bf16.xpose.msra.mxu0 0
  %147 = vmatpush.bf16.xpose.msra.mxu0 0
  %148 = vmatpush.bf16.xpose.msra.mxu0 0
  %149 = vmatpush.bf16.xpose.msra.mxu0 0
  %150 = vmatpush.bf16.xpose.msra.mxu0 0
  %151 = vmatpush.bf16.xpose.msra.mxu0 0
  %152 = vmatpush.bf16.xpose.msra.mxu0 0
  %153 = vmatpush.bf16.xpose.msra.mxu0 %v144
  %154 = vmatmul.bf16.gmra.mxu0 %v141
  %v155 = vpop.f32.mrf.mxu0
  %v156 = vadd.f32 0.0, %v155
  %v157 = vpop.f32.mrf.mxu0
  %158 = vdwg.mxu0
  %v160 = vsel %vm82, %v38, 0
  %v163 = vsel %vm82, %v70, 0
  %165 = vmatpush.bf16.xpose.msra.mxu0 0
  %166 = vmatpush.bf16.xpose.msra.mxu0 0
  %167 = vmatpush.bf16.xpose.msra.mxu0 0
  %168 = vmatpush.bf16.xpose.msra.mxu0 0
  %169 = vmatpush.bf16.xpose.msra.mxu0 0
  %170 = vmatpush.bf16.xpose.msra.mxu0 0
  %171 = vmatpush.bf16.xpose.msra.mxu0 0
  %172 = vmatpush.bf16.xpose.msra.mxu0 %v163
  %173 = vmatmul.bf16.gmra.mxu0 %v160
  %v174 = vpop.f32.mrf.mxu0
  %v175 = vadd.f32 0.0, %v174
  %v176 = vpop.f32.mrf.mxu0
  %177 = vdwg.mxu0
  %v179 = vsel %vm82, %v39, 0
  %v182 = vsel %vm82, %v71, 0
  %184 = vmatpush.bf16.xpose.msra.mxu0 0
  %185 = vmatpush.bf16.xpose.msra.mxu0 0
  %186 = vmatpush.bf16.xpose.msra.mxu0 0
  %187 = vmatpush.bf16.xpose.msra.mxu0 0
  %188 = vmatpush.bf16.xpose.msra.mxu0 0
  %189 = vmatpush.bf16.xpose.msra.mxu0 0
  %190 = vmatpush.bf16.xpose.msra.mxu0 0
  %191 = vmatpush.bf16.xpose.msra.mxu0 %v182
  %192 = vmatmul.bf16.gmra.mxu0 %v179
  %v193 = vpop.f32.mrf.mxu0
  %v194 = vadd.f32 0.0, %v193
  %v195 = vpop.f32.mrf.mxu0
  %196 = vdwg.mxu0
  %v198 = vsel %vm82, %v40, 0
  %v201 = vsel %vm82, %v72, 0
  %203 = vmatpush.bf16.xpose.msra.mxu0 0
  %204 = vmatpush.bf16.xpose.msra.mxu0 0
  %205 = vmatpush.bf16.xpose.msra.mxu0 0
  %206 = vmatpush.bf16.xpose.msra.mxu0 0
  %207 = vmatpush.bf16.xpose.msra.mxu0 0
  %208 = vmatpush.bf16.xpose.msra.mxu0 0
  %209 = vmatpush.bf16.xpose.msra.mxu0 0
  %210 = vmatpush.bf16.xpose.msra.mxu0 %v201
  %211 = vmatmul.bf16.gmra.mxu0 %v198
  %v212 = vpop.f32.mrf.mxu0
  %v213 = vadd.f32 0.0, %v212
  %v214 = vpop.f32.mrf.mxu0
  %215 = vdwg.mxu0
  %v217 = vsel %vm82, %v41, 0
  %v220 = vsel %vm82, %v73, 0
  %222 = vmatpush.bf16.xpose.msra.mxu0 0
  %223 = vmatpush.bf16.xpose.msra.mxu0 0
  %224 = vmatpush.bf16.xpose.msra.mxu0 0
  %225 = vmatpush.bf16.xpose.msra.mxu0 0
  %226 = vmatpush.bf16.xpose.msra.mxu0 0
  %227 = vmatpush.bf16.xpose.msra.mxu0 0
  %228 = vmatpush.bf16.xpose.msra.mxu0 0
  %229 = vmatpush.bf16.xpose.msra.mxu0 %v220
  %230 = vmatmul.bf16.gmra.mxu0 %v217
  %v231 = vpop.f32.mrf.mxu0
  %v232 = vadd.f32 0.0, %v231
  %v233 = vpop.f32.mrf.mxu0
  %234 = vdwg.mxu0
  %v236 = vsel %vm82, %v42, 0
  %v239 = vsel %vm82, %v74, 0
  %241 = vmatpush.bf16.xpose.msra.mxu0 0
  %242 = vmatpush.bf16.xpose.msra.mxu0 0
  %243 = vmatpush.bf16.xpose.msra.mxu0 0
  %244 = vmatpush.bf16.xpose.msra.mxu0 0
  %245 = vmatpush.bf16.xpose.msra.mxu0 0
  %246 = vmatpush.bf16.xpose.msra.mxu0 0
  %247 = vmatpush.bf16.xpose.msra.mxu0 0
  %248 = vmatpush.bf16.xpose.msra.mxu0 %v239
  %249 = vmatmul.bf16.gmra.mxu0 %v236
  %v250 = vpop.f32.mrf.mxu0
  %v251 = vadd.f32 0.0, %v250
  %v252 = vpop.f32.mrf.mxu0
  %253 = vdwg.mxu0
  %v255 = vsel %vm82, %v43, 0
  %v258 = vsel %vm82, %v75, 0
  %260 = vmatpush.bf16.xpose.msra.mxu0 0
  %261 = vmatpush.bf16.xpose.msra.mxu0 0
  %262 = vmatpush.bf16.xpose.msra.mxu0 0
  %263 = vmatpush.bf16.xpose.msra.mxu0 0
  %264 = vmatpush.bf16.xpose.msra.mxu0 0
  %265 = vmatpush.bf16.xpose.msra.mxu0 0
  %266 = vmatpush.bf16.xpose.msra.mxu0 0
  %267 = vmatpush.bf16.xpose.msra.mxu0 %v258
  %268 = vmatmul.bf16.gmra.mxu0 %v255
  %v269 = vpop.f32.mrf.mxu0
  %v270 = vadd.f32 0.0, %v269
  %v271 = vpop.f32.mrf.mxu0
  %272 = vdwg.mxu0
  %v274 = vsel %vm82, %v44, 0
  %v277 = vsel %vm82, %v76, 0
  %279 = vmatpush.bf16.xpose.msra.mxu0 0
  %280 = vmatpush.bf16.xpose.msra.mxu0 0
  %281 = vmatpush.bf16.xpose.msra.mxu0 0
  %282 = vmatpush.bf16.xpose.msra.mxu0 0
  %283 = vmatpush.bf16.xpose.msra.mxu0 0
  %284 = vmatpush.bf16.xpose.msra.mxu0 0
  %285 = vmatpush.bf16.xpose.msra.mxu0 0
  %286 = vmatpush.bf16.xpose.msra.mxu0 %v277
  %287 = vmatmul.bf16.gmra.mxu0 %v274
  %v288 = vpop.f32.mrf.mxu0
  %v289 = vadd.f32 0.0, %v288
  %v290 = vpop.f32.mrf.mxu0
  %291 = vdwg.mxu0
  %v293 = vsel %vm82, %v45, 0
  %v296 = vsel %vm82, %v77, 0
  %298 = vmatpush.bf16.xpose.msra.mxu0 0
  %299 = vmatpush.bf16.xpose.msra.mxu0 0
  %300 = vmatpush.bf16.xpose.msra.mxu0 0
  %301 = vmatpush.bf16.xpose.msra.mxu0 0
  %302 = vmatpush.bf16.xpose.msra.mxu0 0
  %303 = vmatpush.bf16.xpose.msra.mxu0 0
  %304 = vmatpush.bf16.xpose.msra.mxu0 0
  %305 = vmatpush.bf16.xpose.msra.mxu0 %v296
  %306 = vmatmul.bf16.gmra.mxu0 %v293
  %v307 = vpop.f32.mrf.mxu0
  %v308 = vadd.f32 0.0, %v307
  %v309 = vpop.f32.mrf.mxu0
  %310 = vdwg.mxu0
  %v312 = vsel %vm82, %v46, 0
  %v315 = vsel %vm82, %v78, 0
  %317 = vmatpush.bf16.xpose.msra.mxu0 0
  %318 = vmatpush.bf16.xpose.msra.mxu0 0
  %319 = vmatpush.bf16.xpose.msra.mxu0 0
  %320 = vmatpush.bf16.xpose.msra.mxu0 0
  %321 = vmatpush.bf16.xpose.msra.mxu0 0
  %322 = vmatpush.bf16.xpose.msra.mxu0 0
  %323 = vmatpush.bf16.xpose.msra.mxu0 0
  %324 = vmatpush.bf16.xpose.msra.mxu0 %v315
  %325 = vmatmul.bf16.gmra.mxu0 %v312
  %v326 = vpop.f32.mrf.mxu0
  %v327 = vadd.f32 0.0, %v326
  %v328 = vpop.f32.mrf.mxu0
  %329 = vdwg.mxu0
  %v331 = vsel %vm82, %v47, 0
  %v334 = vsel %vm82, %v79, 0
  %336 = vmatpush.bf16.xpose.msra.mxu0 0
  %337 = vmatpush.bf16.xpose.msra.mxu0 0
  %338 = vmatpush.bf16.xpose.msra.mxu0 0
  %339 = vmatpush.bf16.xpose.msra.mxu0 0
  %340 = vmatpush.bf16.xpose.msra.mxu0 0
  %341 = vmatpush.bf16.xpose.msra.mxu0 0
  %342 = vmatpush.bf16.xpose.msra.mxu0 0
  %343 = vmatpush.bf16.xpose.msra.mxu0 %v334
  %344 = vmatmul.bf16.gmra.mxu0 %v331
  %v345 = vpop.f32.mrf.mxu0
  %v346 = vadd.f32 0.0, %v345
  %v347 = vpop.f32.mrf.mxu0
  %348 = vdwg.mxu0
  %v350 = vsel %vm82, %v48, 0
  %v353 = vsel %vm82, %v80, 0
  %355 = vmatpush.bf16.xpose.msra.mxu0 0
  %356 = vmatpush.bf16.xpose.msra.mxu0 0
  %357 = vmatpush.bf16.xpose.msra.mxu0 0
  %358 = vmatpush.bf16.xpose.msra.mxu0 0
  %359 = vmatpush.bf16.xpose.msra.mxu0 0
  %360 = vmatpush.bf16.xpose.msra.mxu0 0
  %361 = vmatpush.bf16.xpose.msra.mxu0 0
  %362 = vmatpush.bf16.xpose.msra.mxu0 %v353
  %363 = vmatmul.bf16.gmra.mxu0 %v350
  %v364 = vpop.f32.mrf.mxu0
  %v365 = vadd.f32 0.0, %v364
  %v366 = vpop.f32.mrf.mxu0
  %367 = vdwg.mxu0
  %v369 = vsel %vm82, %v49, 0
  %v372 = vsel %vm82, %v81, 0
  %374 = vmatpush.bf16.xpose.msra.mxu0 0
  %375 = vmatpush.bf16.xpose.msra.mxu0 0
  %376 = vmatpush.bf16.xpose.msra.mxu0 0
  %377 = vmatpush.bf16.xpose.msra.mxu0 0
  %378 = vmatpush.bf16.xpose.msra.mxu0 0
  %379 = vmatpush.bf16.xpose.msra.mxu0 0
  %380 = vmatpush.bf16.xpose.msra.mxu0 0
  %381 = vmatpush.bf16.xpose.msra.mxu0 %v372
  %382 = vmatmul.bf16.gmra.mxu0 %v369
  %v383 = vpop.f32.mrf.mxu0
  %v384 = vadd.f32 0.0, %v383
  %v385 = vpop.f32.mrf.mxu0
  %386 = vdwg.mxu0
  %v387 = vmul.f32 %v99, 0.25
  %v388 = vmul.f32 %v118, 0.25
  %v389 = vmul.f32 %v137, 0.25
  %v390 = vmul.f32 %v156, 0.25
  %v391 = vmul.f32 %v175, 0.25
  %v392 = vmul.f32 %v194, 0.25
  %v393 = vmul.f32 %v213, 0.25
  %v394 = vmul.f32 %v232, 0.25
  %v395 = vmul.f32 %v251, 0.25
  %v396 = vmul.f32 %v270, 0.25
  %v397 = vmul.f32 %v289, 0.25
  %v398 = vmul.f32 %v308, 0.25
  %v399 = vmul.f32 %v327, 0.25
  %v400 = vmul.f32 %v346, 0.25
  %v401 = vmul.f32 %v365, 0.25
  %v402 = vmul.f32 %v384, 0.25
  %v403 = vld [vmem:[%s3] sm:$0xff]
  %v404 = vadd.f32 %v387, %v403
  %v405 = vadd.f32 %v388, %v403
  %v406 = vadd.f32 %v389, %v403
  %v407 = vadd.f32 %v390, %v403
  %v408 = vadd.f32 %v391, %v403
  %v409 = vadd.f32 %v392, %v403
  %v410 = vadd.f32 %v393, %v403
  %v411 = vadd.f32 %v394, %v403
  %v412 = vadd.f32 %v395, %v403
  %v413 = vadd.f32 %v396, %v403
  %v414 = vadd.f32 %v397, %v403
  %v415 = vadd.f32 %v398, %v403
  %v416 = vadd.f32 %v399, %v403
  %v417 = vadd.f32 %v400, %v403
  %v418 = vadd.f32 %v401, %v403
  %v419 = vadd.f32 %v402, %v403
  %vm420 = vcmask 64512
  %v421 = vsel %vm420, %v404, -inf
  %422 = vmax.xlane.f32.xlu0 %v421
  %v423 = vpop.xlane.xlu0 %422
  %v424 = vsel %vm420, %v405, -inf
  %425 = vmax.xlane.f32.xlu0 %v424
  %v426 = vpop.xlane.xlu0 %425
  %v427 = vsel %vm420, %v406, -inf
  %428 = vmax.xlane.f32.xlu0 %v427
  %v429 = vpop.xlane.xlu0 %428
  %v430 = vsel %vm420, %v407, -inf
  %431 = vmax.xlane.f32.xlu0 %v430
  %v432 = vpop.xlane.xlu0 %431
  %v433 = vsel %vm420, %v408, -inf
  %434 = vmax.xlane.f32.xlu0 %v433
  %v435 = vpop.xlane.xlu0 %434
  %v436 = vsel %vm420, %v409, -inf
  %437 = vmax.xlane.f32.xlu0 %v436
  %v438 = vpop.xlane.xlu0 %437
  %v439 = vsel %vm420, %v410, -inf
  %440 = vmax.xlane.f32.xlu0 %v439
  %v441 = vpop.xlane.xlu0 %440
  %v442 = vsel %vm420, %v411, -inf
  %443 = vmax.xlane.f32.xlu0 %v442
  %v444 = vpop.xlane.xlu0 %443
  %v445 = vsel %vm420, %v412, -inf
  %446 = vmax.xlane.f32.xlu0 %v445
  %v447 = vpop.xlane.xlu0 %446
  %v448 = vsel %vm420, %v413, -inf
  %449 = vmax.xlane.f32.xlu0 %v448
  %v450 = vpop.xlane.xlu0 %449
  %v451 = vsel %vm420, %v414, -inf
  %452 = vmax.xlane.f32.xlu0 %v451
  %v453 = vpop.xlane.xlu0 %452
  %v454 = vsel %vm420, %v415, -inf
  %455 = vmax.xlane.f32.xlu0 %v454
  %v456 = vpop.xlane.xlu0 %455
  %v457 = vsel %vm420, %v416, -inf
  %458 = vmax.xlane.f32.xlu0 %v457
  %v459 = vpop.xlane.xlu0 %458
  %v460 = vsel %vm420, %v417, -inf
  %461 = vmax.xlane.f32.xlu0 %v460
  %v462 = vpop.xlane.xlu0 %461
  %v463 = vsel %vm420, %v418, -inf
  %464 = vmax.xlane.f32.xlu0 %v463
  %v465 = vpop.xlane.xlu0 %464
  %v466 = vsel %vm420, %v419, -inf
  %467 = vmax.xlane.f32.xlu0 %v466
  %v468 = vpop.xlane.xlu0 %467
  %v469 = vsub.f32 %v404, %v423
  %v470 = vsub.f32 %v405, %v426
  %v471 = vsub.f32 %v406, %v429
  %v472 = vsub.f32 %v407, %v432
  %v473 = vsub.f32 %v408, %v435
  %v474 = vsub.f32 %v409, %v438
  %v475 = vsub.f32 %v410, %v441
  %v476 = vsub.f32 %v411, %v444
  %v477 = vsub.f32 %v412, %v447
  %v478 = vsub.f32 %v413, %v450
  %v479 = vsub.f32 %v414, %v453
  %v480 = vsub.f32 %v415, %v456
  %v481 = vsub.f32 %v416, %v459
  %v482 = vsub.f32 %v417, %v462
  %v483 = vsub.f32 %v418, %v465
  %v484 = vsub.f32 %v419, %v468
  %v485 = vmul.f32 %v469, 1.442695
  %v486 = vpow.pop %v485
  %v487 = vmul.f32 %v470, 1.442695
  %v488 = vpow.pop %v487
  %v489 = vmul.f32 %v471, 1.442695
  %v490 = vpow.pop %v489
  %v491 = vmul.f32 %v472, 1.442695
  %v492 = vpow.pop %v491
  %v493 = vmul.f32 %v473, 1.442695
  %v494 = vpow.pop %v493
  %v495 = vmul.f32 %v474, 1.442695
  %v496 = vpow.pop %v495
  %v497 = vmul.f32 %v475, 1.442695
  %v498 = vpow.pop %v497
  %v499 = vmul.f32 %v476, 1.442695
  %v500 = vpow.pop %v499
  %v501 = vmul.f32 %v477, 1.442695
  %v502 = vpow.pop %v501
  %v503 = vmul.f32 %v478, 1.442695
  %v504 = vpow.pop %v503
  %v505 = vmul.f32 %v479, 1.442695
  %v506 = vpow.pop %v505
  %v507 = vmul.f32 %v480, 1.442695
  %v508 = vpow.pop %v507
  %v509 = vmul.f32 %v481, 1.442695
  %v510 = vpow.pop %v509
  %v511 = vmul.f32 %v482, 1.442695
  %v512 = vpow.pop %v511
  %v513 = vmul.f32 %v483, 1.442695
  %v514 = vpow.pop %v513
  %v515 = vmul.f32 %v484, 1.442695
  %v516 = vpow.pop %v515
  %v517 = vsel %vm420, %v486, 0.0
  %518 = vadd.xlane.f32.xlu0 %v517
  %v519 = vpop.xlane.xlu0 %518
  %v520 = vsel %vm420, %v488, 0.0
  %521 = vadd.xlane.f32.xlu0 %v520
  %v522 = vpop.xlane.xlu0 %521
  %v523 = vsel %vm420, %v490, 0.0
  %524 = vadd.xlane.f32.xlu0 %v523
  %v525 = vpop.xlane.xlu0 %524
  %v526 = vsel %vm420, %v492, 0.0
  %527 = vadd.xlane.f32.xlu0 %v526
  %v528 = vpop.xlane.xlu0 %527
  %v529 = vsel %vm420, %v494, 0.0
  %530 = vadd.xlane.f32.xlu0 %v529
  %v531 = vpop.xlane.xlu0 %530
  %v532 = vsel %vm420, %v496, 0.0
  %533 = vadd.xlane.f32.xlu0 %v532
  %v534 = vpop.xlane.xlu0 %533
  %v535 = vsel %vm420, %v498, 0.0
  %536 = vadd.xlane.f32.xlu0 %v535
  %v537 = vpop.xlane.xlu0 %536
  %v538 = vsel %vm420, %v500, 0.0
  %539 = vadd.xlane.f32.xlu0 %v538
  %v540 = vpop.xlane.xlu0 %539
  %v541 = vsel %vm420, %v502, 0.0
  %542 = vadd.xlane.f32.xlu0 %v541
  %v543 = vpop.xlane.xlu0 %542
  %v544 = vsel %vm420, %v504, 0.0
  %545 = vadd.xlane.f32.xlu0 %v544
  %v546 = vpop.xlane.xlu0 %545
  %v547 = vsel %vm420, %v506, 0.0
  %548 = vadd.xlane.f32.xlu0 %v547
  %v549 = vpop.xlane.xlu0 %548
  %v550 = vsel %vm420, %v508, 0.0
  %551 = vadd.xlane.f32.xlu0 %v550
  %v552 = vpop.xlane.xlu0 %551
  %v553 = vsel %vm420, %v510, 0.0
  %554 = vadd.xlane.f32.xlu0 %v553
  %v555 = vpop.xlane.xlu0 %554
  %v556 = vsel %vm420, %v512, 0.0
  %557 = vadd.xlane.f32.xlu0 %v556
  %v558 = vpop.xlane.xlu0 %557
  %v559 = vsel %vm420, %v514, 0.0
  %560 = vadd.xlane.f32.xlu0 %v559
  %v561 = vpop.xlane.xlu0 %560
  %v562 = vsel %vm420, %v516, 0.0
  %563 = vadd.xlane.f32.xlu0 %v562
  %v564 = vpop.xlane.xlu0 %563
  %v565 = vrcp.pop %v519
  %v566 = vrcp.pop %v522
  %v567 = vrcp.pop %v525
  %v568 = vrcp.pop %v528
  %v569 = vrcp.pop %v531
  %v570 = vrcp.pop %v534
  %v571 = vrcp.pop %v537
  %v572 = vrcp.pop %v540
  %v573 = vrcp.pop %v543
  %v574 = vrcp.pop %v546
  %v575 = vrcp.pop %v549
  %v576 = vrcp.pop %v552
  %v577 = vrcp.pop %v555
  %v578 = vrcp.pop %v558
  %v579 = vrcp.pop %v561
  %v580 = vrcp.pop %v564
  %v581 = vmul.f32 %v486, %v565
  %v582 = vmul.f32 %v488, %v566
  %v583 = vmul.f32 %v490, %v567
  %v584 = vmul.f32 %v492, %v568
  %v585 = vmul.f32 %v494, %v569
  %v586 = vmul.f32 %v496, %v570
  %v587 = vmul.f32 %v498, %v571
  %v588 = vmul.f32 %v500, %v572
  %v589 = vmul.f32 %v502, %v573
  %v590 = vmul.f32 %v504, %v574
  %v591 = vmul.f32 %v506, %v575
  %v592 = vmul.f32 %v508, %v576
  %v593 = vmul.f32 %v510, %v577
  %v594 = vmul.f32 %v512, %v578
  %v595 = vmul.f32 %v514, %v579
  %v596 = vmul.f32 %v516, %v580
  %v597 = vpack.c.bf16 %v581, %v581
  %v598 = vpack.c.bf16 %v582, %v582
  %v599 = vpack.c.bf16 %v583, %v583
  %v600 = vpack.c.bf16 %v584, %v584
  %v601 = vpack.c.bf16 %v585, %v585
  %v602 = vpack.c.bf16 %v586, %v586
  %v603 = vpack.c.bf16 %v587, %v587
  %v604 = vpack.c.bf16 %v588, %v588
  %v605 = vpack.c.bf16 %v589, %v589
  %v606 = vpack.c.bf16 %v590, %v590
  %v607 = vpack.c.bf16 %v591, %v591
  %v608 = vpack.c.bf16 %v592, %v592
  %v609 = vpack.c.bf16 %v593, %v593
  %v610 = vpack.c.bf16 %v594, %v594
  %v611 = vpack.c.bf16 %v595, %v595
  %v612 = vpack.c.bf16 %v596, %v596
  %v613 = vld [vmem:[%s2] sm:$0xff]
  %v614 = vld [vmem:[%s2 + $0x8] sm:$0xff]
  %v615 = vld [vmem:[%s2 + $0x10] sm:$0xff]
  %v616 = vld [vmem:[%s2 + $0x18] sm:$0xff]
  %v617 = vld [vmem:[%s2 + $0x20] sm:$0xff]
  %v618 = vld [vmem:[%s2 + $0x28] sm:$0xff]
  %v619 = vld [vmem:[%s2 + $0x30] sm:$0xff]
  %v620 = vld [vmem:[%s2 + $0x38] sm:$0xff]
  %v621 = vld [vmem:[%s2 + $0x40] sm:$0xff]
  %v622 = vld [vmem:[%s2 + $0x48] sm:$0xff]
  %v623 = vld [vmem:[%s2 + $0x50] sm:$0xff]
  %v624 = vld [vmem:[%s2 + $0x58] sm:$0xff]
  %v625 = vld [vmem:[%s2 + $0x60] sm:$0xff]
  %v626 = vld [vmem:[%s2 + $0x68] sm:$0xff]
  %v627 = vld [vmem:[%s2 + $0x70] sm:$0xff]
  %v628 = vld [vmem:[%s2 + $0x78] sm:$0xff]
  %v629 = vpack.c.bf16 %v613, %v613
  %v630 = vpack.c.bf16 %v614, %v614
  %v631 = vpack.c.bf16 %v615, %v615
  %v632 = vpack.c.bf16 %v616, %v616
  %v633 = vpack.c.bf16 %v617, %v617
  %v634 = vpack.c.bf16 %v618, %v618
  %v635 = vpack.c.bf16 %v619, %v619
  %v636 = vpack.c.bf16 %v620, %v620
  %v637 = vpack.c.bf16 %v621, %v621
  %v638 = vpack.c.bf16 %v622, %v622
  %v639 = vpack.c.bf16 %v623, %v623
  %v640 = vpack.c.bf16 %v624, %v624
  %v641 = vpack.c.bf16 %v625, %v625
  %v642 = vpack.c.bf16 %v626, %v626
  %v643 = vpack.c.bf16 %v627, %v627
  %v644 = vpack.c.bf16 %v628, %v628
  %v646 = vsel %vm420, %v597, 0
  %vm648 = vcmask 1043456
  %v650 = vsel %vm648, %v629, 0
  %652 = vmatpush.bf16.msra.mxu0 0
  %653 = vmatpush.bf16.msra.mxu0 0
  %654 = vmatpush.bf16.msra.mxu0 0
  %655 = vmatpush.bf16.msra.mxu0 0
  %656 = vmatpush.bf16.msra.mxu0 0
  %657 = vmatpush.bf16.msra.mxu0 0
  %658 = vmatpush.bf16.msra.mxu0 0
  %659 = vmatpush.bf16.msra.mxu0 %v650
  %660 = vmatmul.bf16.gmra.mxu0 %v646
  %v661 = vpop.f32.mrf.mxu0
  %v662 = vadd.f32 0.0, %v661
  %v663 = vpop.f32.mrf.mxu0
  %664 = vdwg.mxu0
  %v666 = vsel %vm420, %v598, 0
  %v669 = vsel %vm648, %v630, 0
  %671 = vmatpush.bf16.msra.mxu0 0
  %672 = vmatpush.bf16.msra.mxu0 0
  %673 = vmatpush.bf16.msra.mxu0 0
  %674 = vmatpush.bf16.msra.mxu0 0
  %675 = vmatpush.bf16.msra.mxu0 0
  %676 = vmatpush.bf16.msra.mxu0 0
  %677 = vmatpush.bf16.msra.mxu0 0
  %678 = vmatpush.bf16.msra.mxu0 %v669
  %679 = vmatmul.bf16.gmra.mxu0 %v666
  %v680 = vpop.f32.mrf.mxu0
  %v681 = vadd.f32 0.0, %v680
  %v682 = vpop.f32.mrf.mxu0
  %683 = vdwg.mxu0
  %v685 = vsel %vm420, %v599, 0
  %v688 = vsel %vm648, %v631, 0
  %690 = vmatpush.bf16.msra.mxu0 0
  %691 = vmatpush.bf16.msra.mxu0 0
  %692 = vmatpush.bf16.msra.mxu0 0
  %693 = vmatpush.bf16.msra.mxu0 0
  %694 = vmatpush.bf16.msra.mxu0 0
  %695 = vmatpush.bf16.msra.mxu0 0
  %696 = vmatpush.bf16.msra.mxu0 0
  %697 = vmatpush.bf16.msra.mxu0 %v688
  %698 = vmatmul.bf16.gmra.mxu0 %v685
  %v699 = vpop.f32.mrf.mxu0
  %v700 = vadd.f32 0.0, %v699
  %v701 = vpop.f32.mrf.mxu0
  %702 = vdwg.mxu0
  %v704 = vsel %vm420, %v600, 0
  %v707 = vsel %vm648, %v632, 0
  %709 = vmatpush.bf16.msra.mxu0 0
  %710 = vmatpush.bf16.msra.mxu0 0
  %711 = vmatpush.bf16.msra.mxu0 0
  %712 = vmatpush.bf16.msra.mxu0 0
  %713 = vmatpush.bf16.msra.mxu0 0
  %714 = vmatpush.bf16.msra.mxu0 0
  %715 = vmatpush.bf16.msra.mxu0 0
  %716 = vmatpush.bf16.msra.mxu0 %v707
  %717 = vmatmul.bf16.gmra.mxu0 %v704
  %v718 = vpop.f32.mrf.mxu0
  %v719 = vadd.f32 0.0, %v718
  %v720 = vpop.f32.mrf.mxu0
  %721 = vdwg.mxu0
  %v723 = vsel %vm420, %v601, 0
  %v726 = vsel %vm648, %v633, 0
  %728 = vmatpush.bf16.msra.mxu0 0
  %729 = vmatpush.bf16.msra.mxu0 0
  %730 = vmatpush.bf16.msra.mxu0 0
  %731 = vmatpush.bf16.msra.mxu0 0
  %732 = vmatpush.bf16.msra.mxu0 0
  %733 = vmatpush.bf16.msra.mxu0 0
  %734 = vmatpush.bf16.msra.mxu0 0
  %735 = vmatpush.bf16.msra.mxu0 %v726
  %736 = vmatmul.bf16.gmra.mxu0 %v723
  %v737 = vpop.f32.mrf.mxu0
  %v738 = vadd.f32 0.0, %v737
  %v739 = vpop.f32.mrf.mxu0
  %740 = vdwg.mxu0
  %v742 = vsel %vm420, %v602, 0
  %v745 = vsel %vm648, %v634, 0
  %747 = vmatpush.bf16.msra.mxu0 0
  %748 = vmatpush.bf16.msra.mxu0 0
  %749 = vmatpush.bf16.msra.mxu0 0
  %750 = vmatpush.bf16.msra.mxu0 0
  %751 = vmatpush.bf16.msra.mxu0 0
  %752 = vmatpush.bf16.msra.mxu0 0
  %753 = vmatpush.bf16.msra.mxu0 0
  %754 = vmatpush.bf16.msra.mxu0 %v745
  %755 = vmatmul.bf16.gmra.mxu0 %v742
  %v756 = vpop.f32.mrf.mxu0
  %v757 = vadd.f32 0.0, %v756
  %v758 = vpop.f32.mrf.mxu0
  %759 = vdwg.mxu0
  %v761 = vsel %vm420, %v603, 0
  %v764 = vsel %vm648, %v635, 0
  %766 = vmatpush.bf16.msra.mxu0 0
  %767 = vmatpush.bf16.msra.mxu0 0
  %768 = vmatpush.bf16.msra.mxu0 0
  %769 = vmatpush.bf16.msra.mxu0 0
  %770 = vmatpush.bf16.msra.mxu0 0
  %771 = vmatpush.bf16.msra.mxu0 0
  %772 = vmatpush.bf16.msra.mxu0 0
  %773 = vmatpush.bf16.msra.mxu0 %v764
  %774 = vmatmul.bf16.gmra.mxu0 %v761
  %v775 = vpop.f32.mrf.mxu0
  %v776 = vadd.f32 0.0, %v775
  %v777 = vpop.f32.mrf.mxu0
  %778 = vdwg.mxu0
  %v780 = vsel %vm420, %v604, 0
  %v783 = vsel %vm648, %v636, 0
  %785 = vmatpush.bf16.msra.mxu0 0
  %786 = vmatpush.bf16.msra.mxu0 0
  %787 = vmatpush.bf16.msra.mxu0 0
  %788 = vmatpush.bf16.msra.mxu0 0
  %789 = vmatpush.bf16.msra.mxu0 0
  %790 = vmatpush.bf16.msra.mxu0 0
  %791 = vmatpush.bf16.msra.mxu0 0
  %792 = vmatpush.bf16.msra.mxu0 %v783
  %793 = vmatmul.bf16.gmra.mxu0 %v780
  %v794 = vpop.f32.mrf.mxu0
  %v795 = vadd.f32 0.0, %v794
  %v796 = vpop.f32.mrf.mxu0
  %797 = vdwg.mxu0
  %v799 = vsel %vm420, %v605, 0
  %v802 = vsel %vm648, %v637, 0
  %804 = vmatpush.bf16.msra.mxu0 0
  %805 = vmatpush.bf16.msra.mxu0 0
  %806 = vmatpush.bf16.msra.mxu0 0
  %807 = vmatpush.bf16.msra.mxu0 0
  %808 = vmatpush.bf16.msra.mxu0 0
  %809 = vmatpush.bf16.msra.mxu0 0
  %810 = vmatpush.bf16.msra.mxu0 0
  %811 = vmatpush.bf16.msra.mxu0 %v802
  %812 = vmatmul.bf16.gmra.mxu0 %v799
  %v813 = vpop.f32.mrf.mxu0
  %v814 = vadd.f32 0.0, %v813
  %v815 = vpop.f32.mrf.mxu0
  %816 = vdwg.mxu0
  %v818 = vsel %vm420, %v606, 0
  %v821 = vsel %vm648, %v638, 0
  %823 = vmatpush.bf16.msra.mxu0 0
  %824 = vmatpush.bf16.msra.mxu0 0
  %825 = vmatpush.bf16.msra.mxu0 0
  %826 = vmatpush.bf16.msra.mxu0 0
  %827 = vmatpush.bf16.msra.mxu0 0
  %828 = vmatpush.bf16.msra.mxu0 0
  %829 = vmatpush.bf16.msra.mxu0 0
  %830 = vmatpush.bf16.msra.mxu0 %v821
  %831 = vmatmul.bf16.gmra.mxu0 %v818
  %v832 = vpop.f32.mrf.mxu0
  %v833 = vadd.f32 0.0, %v832
  %v834 = vpop.f32.mrf.mxu0
  %835 = vdwg.mxu0
  %v837 = vsel %vm420, %v607, 0
  %v840 = vsel %vm648, %v639, 0
  %842 = vmatpush.bf16.msra.mxu0 0
  %843 = vmatpush.bf16.msra.mxu0 0
  %844 = vmatpush.bf16.msra.mxu0 0
  %845 = vmatpush.bf16.msra.mxu0 0
  %846 = vmatpush.bf16.msra.mxu0 0
  %847 = vmatpush.bf16.msra.mxu0 0
  %848 = vmatpush.bf16.msra.mxu0 0
  %849 = vmatpush.bf16.msra.mxu0 %v840
  %850 = vmatmul.bf16.gmra.mxu0 %v837
  %v851 = vpop.f32.mrf.mxu0
  %v852 = vadd.f32 0.0, %v851
  %v853 = vpop.f32.mrf.mxu0
  %854 = vdwg.mxu0
  %v856 = vsel %vm420, %v608, 0
  %v859 = vsel %vm648, %v640, 0
  %861 = vmatpush.bf16.msra.mxu0 0
  %862 = vmatpush.bf16.msra.mxu0 0
  %863 = vmatpush.bf16.msra.mxu0 0
  %864 = vmatpush.bf16.msra.mxu0 0
  %865 = vmatpush.bf16.msra.mxu0 0
  %866 = vmatpush.bf16.msra.mxu0 0
  %867 = vmatpush.bf16.msra.mxu0 0
  %868 = vmatpush.bf16.msra.mxu0 %v859
  %869 = vmatmul.bf16.gmra.mxu0 %v856
  %v870 = vpop.f32.mrf.mxu0
  %v871 = vadd.f32 0.0, %v870
  %v872 = vpop.f32.mrf.mxu0
  %873 = vdwg.mxu0
  %v875 = vsel %vm420, %v609, 0
  %v878 = vsel %vm648, %v641, 0
  %880 = vmatpush.bf16.msra.mxu0 0
  %881 = vmatpush.bf16.msra.mxu0 0
  %882 = vmatpush.bf16.msra.mxu0 0
  %883 = vmatpush.bf16.msra.mxu0 0
  %884 = vmatpush.bf16.msra.mxu0 0
  %885 = vmatpush.bf16.msra.mxu0 0
  %886 = vmatpush.bf16.msra.mxu0 0
  %887 = vmatpush.bf16.msra.mxu0 %v878
  %888 = vmatmul.bf16.gmra.mxu0 %v875
  %v889 = vpop.f32.mrf.mxu0
  %v890 = vadd.f32 0.0, %v889
  %v891 = vpop.f32.mrf.mxu0
  %892 = vdwg.mxu0
  %v894 = vsel %vm420, %v610, 0
  %v897 = vsel %vm648, %v642, 0
  %899 = vmatpush.bf16.msra.mxu0 0
  %900 = vmatpush.bf16.msra.mxu0 0
  %901 = vmatpush.bf16.msra.mxu0 0
  %902 = vmatpush.bf16.msra.mxu0 0
  %903 = vmatpush.bf16.msra.mxu0 0
  %904 = vmatpush.bf16.msra.mxu0 0
  %905 = vmatpush.bf16.msra.mxu0 0
  %906 = vmatpush.bf16.msra.mxu0 %v897
  %907 = vmatmul.bf16.gmra.mxu0 %v894
  %v908 = vpop.f32.mrf.mxu0
  %v909 = vadd.f32 0.0, %v908
  %v910 = vpop.f32.mrf.mxu0
  %911 = vdwg.mxu0
  %v913 = vsel %vm420, %v611, 0
  %v916 = vsel %vm648, %v643, 0
  %918 = vmatpush.bf16.msra.mxu0 0
  %919 = vmatpush.bf16.msra.mxu0 0
  %920 = vmatpush.bf16.msra.mxu0 0
  %921 = vmatpush.bf16.msra.mxu0 0
  %922 = vmatpush.bf16.msra.mxu0 0
  %923 = vmatpush.bf16.msra.mxu0 0
  %924 = vmatpush.bf16.msra.mxu0 0
  %925 = vmatpush.bf16.msra.mxu0 %v916
  %926 = vmatmul.bf16.gmra.mxu0 %v913
  %v927 = vpop.f32.mrf.mxu0
  %v928 = vadd.f32 0.0, %v927
  %v929 = vpop.f32.mrf.mxu0
  %930 = vdwg.mxu0
  %v932 = vsel %vm420, %v612, 0
  %v935 = vsel %vm648, %v644, 0
  %937 = vmatpush.bf16.msra.mxu0 0
  %938 = vmatpush.bf16.msra.mxu0 0
  %939 = vmatpush.bf16.msra.mxu0 0
  %940 = vmatpush.bf16.msra.mxu0 0
  %941 = vmatpush.bf16.msra.mxu0 0
  %942 = vmatpush.bf16.msra.mxu0 0
  %943 = vmatpush.bf16.msra.mxu0 0
  %944 = vmatpush.bf16.msra.mxu0 %v935
  %945 = vmatmul.bf16.gmra.mxu0 %v932
  %v946 = vpop.f32.mrf.mxu0
  %v947 = vadd.f32 0.0, %v946
  %v948 = vpop.f32.mrf.mxu0
  %949 = vdwg.mxu0
  %950 = vst.msk [vmem:[%s4] sm:$0xff] %vm82, %v662
  %951 = vst.msk [vmem:[%s4 + $0x8] sm:$0xff] %vm82, %v681
  %952 = vst.msk [vmem:[%s4 + $0x10] sm:$0xff] %vm82, %v700
  %953 = vst.msk [vmem:[%s4 + $0x18] sm:$0xff] %vm82, %v719
  %954 = vst.msk [vmem:[%s4 + $0x20] sm:$0xff] %vm82, %v738
  %955 = vst.msk [vmem:[%s4 + $0x28] sm:$0xff] %vm82, %v757
  %956 = vst.msk [vmem:[%s4 + $0x30] sm:$0xff] %vm82, %v776
  %957 = vst.msk [vmem:[%s4 + $0x38] sm:$0xff] %vm82, %v795
  %958 = vst.msk [vmem:[%s4 + $0x40] sm:$0xff] %vm82, %v814
  %959 = vst.msk [vmem:[%s4 + $0x48] sm:$0xff] %vm82, %v833
  %960 = vst.msk [vmem:[%s4 + $0x50] sm:$0xff] %vm82, %v852
  %961 = vst.msk [vmem:[%s4 + $0x58] sm:$0xff] %vm82, %v871
  %962 = vst.msk [vmem:[%s4 + $0x60] sm:$0xff] %vm82, %v890
  %963 = vst.msk [vmem:[%s4 + $0x68] sm:$0xff] %vm82, %v909
  %964 = vst.msk [vmem:[%s4 + $0x70] sm:$0xff] %vm82, %v928
  %965 = vst.msk [vmem:[%s4 + $0x78] sm:$0xff] %vm82, %v947
  // Predicated region
  $region18: #{gconv_transformer_forward.29} parent=0 // pred_check
    _
  $region19: #{gconv_transformer_forward.29} parent=0 // pred_check_branch
    %967 = sbr.rel (0) target = $region21
  $region20: #{gconv_transformer_forward.29} parent=0 // pred_region
    _
  $region21: #{gconv_transformer_forward.29} parent=0 // pred_fallthru
    _
  // Predicated region
  $region22: #{gconv_transformer_forward.29} parent=0 // pred_check
    _
  $region23: #{gconv_transformer_forward.29} parent=0 // pred_check_branch
    %969 = sbr.rel (0) target = $region25
  $region24: #{gconv_transformer_forward.29} parent=0 // pred_region
    _
  $region25: #{gconv_transformer_forward.29} parent=0 // pred_fallthru
    _

// kernel: gconv_transformer_forward.33
$region0: #{gconv_transformer_forward.33}
  #allocation0 [shape = 'u32[]', space=smem, size = 0x4, offset = 0x4, fixed_abs, tag = 'smem constant byte address 0x4 - core index']
  #allocation1 [shape = 'u32[72,128]{1,0:T(1,128)}', space=vmem, size = 0x9000, scoped, tag = 'internal scratch']
  %s0 = inlined_call_operand.vmem [shape: f32[64,32], index: 0, kind: input, shape index: {}]
  %s1 = inlined_call_operand.vmem [shape: f32[32,32], index: 1, kind: input, shape index: {}]
  %s2 = inlined_call_operand.vmem [shape: f32[1,32], index: 2, kind: input, shape index: {}]
  %s3 = inlined_call_operand.vmem [shape: f32[64,32], index: 3, kind: input, shape index: {}]
  %s4 = inlined_call_operand.vmem [shape: f32[64,32], index: 4, kind: output, shape index: {}]
  %s5 = sld [smem:[#allocation0]]
  $region26: #{gconv_transformer_forward.33} parent=0
    _
  %s7 = ssub.s32 1, %s5
  %s8 = scalar_select 0, %s7, %s5
  // Predicated region
  $region2: #{gconv_transformer_forward.33} parent=0 // pred_check
    _
  $region3: #{gconv_transformer_forward.33} parent=0 // pred_check_branch
    %10 = sbr.rel (0) target = $region5
  $region4: #{gconv_transformer_forward.33} parent=0 // pred_region
    _
  $region5: #{gconv_transformer_forward.33} parent=0 // pred_fallthru
    _
  // Predicated region
  $region6: #{gconv_transformer_forward.33} parent=0 // pred_check
    _
  $region7: #{gconv_transformer_forward.33} parent=0 // pred_check_branch
    %12 = sbr.rel (0) target = $region9
  $region8: #{gconv_transformer_forward.33} parent=0 // pred_region
    _
  $region9: #{gconv_transformer_forward.33} parent=0 // pred_fallthru
    _
  // Predicated region
  $region10: #{gconv_transformer_forward.33} parent=0 // pred_check
    _
  $region11: #{gconv_transformer_forward.33} parent=0 // pred_check_branch
    %14 = sbr.rel (0) target = $region13
  $region12: #{gconv_transformer_forward.33} parent=0 // pred_region
    _
  $region13: #{gconv_transformer_forward.33} parent=0 // pred_fallthru
    _
  // Predicated region
  $region14: #{gconv_transformer_forward.33} parent=0 // pred_check
    _
  $region15: #{gconv_transformer_forward.33} parent=0 // pred_check_branch
    %16 = sbr.rel (0) target = $region17
  $region16: #{gconv_transformer_forward.33} parent=0 // pred_region
    _
  $region17: #{gconv_transformer_forward.33} parent=0 // pred_fallthru
    _
  %v18 = vld [vmem:[%s0] sm:$0xff]
  %v19 = vld [vmem:[%s0 + $0x8] sm:$0xff]
  %v20 = vld [vmem:[%s0 + $0x10] sm:$0xff]
  %v21 = vld [vmem:[%s0 + $0x18] sm:$0xff]
  %v22 = vld [vmem:[%s0 + $0x20] sm:$0xff]
  %v23 = vld [vmem:[%s0 + $0x28] sm:$0xff]
  %v24 = vld [vmem:[%s0 + $0x30] sm:$0xff]
  %v25 = vld [vmem:[%s0 + $0x38] sm:$0xff]
  %v26 = vld [vmem:[%s1] sm:$0xff]
  %v27 = vld [vmem:[%s1 + $0x8] sm:$0xff]
  %v28 = vld [vmem:[%s1 + $0x10] sm:$0xff]
  %v29 = vld [vmem:[%s1 + $0x18] sm:$0xff]
  %v30 = vpack.c.bf16 %v19, %v18
  %v31 = vpack.c.bf16 %v21, %v20
  %v32 = vpack.c.bf16 %v23, %v22
  %v33 = vpack.c.bf16 %v25, %v24
  %v34 = vpack.c.bf16 %v27, %v26
  %v35 = vpack.c.bf16 %v29, %v28
  %v36 = vld [vmem:[%s2] sm:$0x1]
  %v38 = vperm.slane %v36, 0
  %vm40 = vcmask 261120
  %v42 = vsel %vm40, %v30, 0
  %v45 = vsel %vm40, %v31, 0
  %v48 = vsel %vm40, %v32, 0
  %v51 = vsel %vm40, %v33, 0
  %53 = vmatpush.bf16.msra.mxu0 0
  %54 = vmatpush.bf16.msra.mxu0 0
  %55 = vmatpush.bf16.msra.mxu0 0
  %56 = vmatpush.bf16.msra.mxu0 0
  %57 = vmatpush.bf16.msra.mxu0 0
  %58 = vmatpush.bf16.msra.mxu0 0
  %59 = vmatpush.bf16.msra.mxu0 %v35
  %60 = vmatpush.bf16.msra.mxu0 %v34
  %61 = vmatmul.bf16.gmra.mxu0 %v42
  %v62 = vpop.f32.mrf.mxu0
  %v63 = vadd.f32 %v38, %v62
  %v64 = vpop.f32.mrf.mxu0
  %v65 = vadd.f32 %v38, %v64
  %66 = vmatmul.bf16.gmra.mxu0 %v45
  %v67 = vpop.f32.mrf.mxu0
  %v68 = vadd.f32 %v38, %v67
  %v69 = vpop.f32.mrf.mxu0
  %v70 = vadd.f32 %v38, %v69
  %71 = vmatmul.bf16.gmra.mxu0 %v48
  %v72 = vpop.f32.mrf.mxu0
  %v73 = vadd.f32 %v38, %v72
  %v74 = vpop.f32.mrf.mxu0
  %v75 = vadd.f32 %v38, %v74
  %76 = vmatmul.bf16.gmra.mxu0 %v51
  %v77 = vpop.f32.mrf.mxu0
  %v78 = vadd.f32 %v38, %v77
  %v79 = vpop.f32.mrf.mxu0
  %v80 = vadd.f32 %v38, %v79
  %81 = vdwg.mxu0
  %v82 = vld [vmem:[%s3] sm:$0xff]
  %v83 = vld [vmem:[%s3 + $0x8] sm:$0xff]
  %v84 = vld [vmem:[%s3 + $0x10] sm:$0xff]
  %v85 = vld [vmem:[%s3 + $0x18] sm:$0xff]
  %v86 = vld [vmem:[%s3 + $0x20] sm:$0xff]
  %v87 = vld [vmem:[%s3 + $0x28] sm:$0xff]
  %v88 = vld [vmem:[%s3 + $0x30] sm:$0xff]
  %v89 = vld [vmem:[%s3 + $0x38] sm:$0xff]
  %v90 = vadd.f32 %v63, %v82
  %v91 = vadd.f32 %v65, %v83
  %v92 = vadd.f32 %v68, %v84
  %v93 = vadd.f32 %v70, %v85
  %v94 = vadd.f32 %v73, %v86
  %v95 = vadd.f32 %v75, %v87
  %v96 = vadd.f32 %v78, %v88
  %v97 = vadd.f32 %v80, %v89
  %98 = vst.msk [vmem:[%s4] sm:$0xff] %vm40, %v90
  %99 = vst.msk [vmem:[%s4 + $0x8] sm:$0xff] %vm40, %v91
  %100 = vst.msk [vmem:[%s4 + $0x10] sm:$0xff] %vm40, %v92
  %101 = vst.msk [vmem:[%s4 + $0x18] sm:$0xff] %vm40, %v93
  %102 = vst.msk [vmem:[%s4 + $0x20] sm:$0xff] %vm40, %v94
  %103 = vst.msk [vmem:[%s4 + $0x28] sm:$0xff] %vm40, %v95
  %104 = vst.msk [vmem:[%s4 + $0x30] sm:$0xff] %vm40, %v96
  %105 = vst.msk [vmem:[%s4 + $0x38] sm:$0xff] %vm40, %v97
  // Predicated region
  $region18: #{gconv_transformer_forward.33} parent=0 // pred_check
    _
  $region19: #{gconv_transformer_forward.33} parent=0 // pred_check_branch
    %107 = sbr.rel (0) target = $region21
  $region20: #{gconv_transformer_forward.33} parent=0 // pred_region
    _
  $region21: #{gconv_transformer_forward.33} parent=0 // pred_fallthru
    _
  // Predicated region
  $region22: #{gconv_transformer_forward.33} parent=0 // pred_check
    _
  $region23: #{gconv_transformer_forward.33} parent=0 // pred_check_branch
    %109 = sbr.rel (0) target = $region25
  $region24: #{gconv_transformer_forward.33} parent=0 // pred_region
    _
  $region25: #{gconv_transformer_forward.33} parent=0 // pred_fallthru
    _

// kernel: gconv_transformer_forward.34
$region0: #{gconv_transformer_forward.34}
  #allocation0 [shape = 'u32[]', space=smem, size = 0x4, offset = 0x4, fixed_abs, tag = 'smem constant byte address 0x4 - core index']
  #allocation1 [shape = 'u32[72,128]{1,0:T(1,128)}', space=vmem, size = 0x9000, scoped, tag = 'internal scratch']
  %s0 = inlined_call_operand.vmem [shape: f32[64,32], index: 0, kind: input, shape index: {}]
  %s1 = inlined_call_operand.vmem [shape: f32[1,32], index: 1, kind: input, shape index: {}]
  %s2 = inlined_call_operand.vmem [shape: f32[1,32], index: 2, kind: input, shape index: {}]
  %s3 = inlined_call_operand.vmem [shape: f32[32,32], index: 3, kind: input, shape index: {}]
  %s4 = inlined_call_operand.vmem [shape: f32[1,32], index: 4, kind: input, shape index: {}]
  %s5 = inlined_call_operand.vmem [shape: f32[64,32], index: 5, kind: output, shape index: {}]
  %s6 = sld [smem:[#allocation0]]
  $region30: #{gconv_transformer_forward.34} parent=0
    _
  %s8 = ssub.s32 1, %s6
  %s9 = scalar_select 0, %s8, %s6
  // Predicated region
  $region2: #{gconv_transformer_forward.34} parent=0 // pred_check
    _
  $region3: #{gconv_transformer_forward.34} parent=0 // pred_check_branch
    %11 = sbr.rel (0) target = $region5
  $region4: #{gconv_transformer_forward.34} parent=0 // pred_region
    _
  $region5: #{gconv_transformer_forward.34} parent=0 // pred_fallthru
    _
  // Predicated region
  $region6: #{gconv_transformer_forward.34} parent=0 // pred_check
    _
  $region7: #{gconv_transformer_forward.34} parent=0 // pred_check_branch
    %13 = sbr.rel (0) target = $region9
  $region8: #{gconv_transformer_forward.34} parent=0 // pred_region
    _
  $region9: #{gconv_transformer_forward.34} parent=0 // pred_fallthru
    _
  // Predicated region
  $region10: #{gconv_transformer_forward.34} parent=0 // pred_check
    _
  $region11: #{gconv_transformer_forward.34} parent=0 // pred_check_branch
    %15 = sbr.rel (0) target = $region13
  $region12: #{gconv_transformer_forward.34} parent=0 // pred_region
    _
  $region13: #{gconv_transformer_forward.34} parent=0 // pred_fallthru
    _
  // Predicated region
  $region14: #{gconv_transformer_forward.34} parent=0 // pred_check
    _
  $region15: #{gconv_transformer_forward.34} parent=0 // pred_check_branch
    %17 = sbr.rel (0) target = $region17
  $region16: #{gconv_transformer_forward.34} parent=0 // pred_region
    _
  $region17: #{gconv_transformer_forward.34} parent=0 // pred_fallthru
    _
  // Predicated region
  $region18: #{gconv_transformer_forward.34} parent=0 // pred_check
    _
  $region19: #{gconv_transformer_forward.34} parent=0 // pred_check_branch
    %19 = sbr.rel (0) target = $region21
  $region20: #{gconv_transformer_forward.34} parent=0 // pred_region
    _
  $region21: #{gconv_transformer_forward.34} parent=0 // pred_fallthru
    _
  %v21 = vld [vmem:[%s0] sm:$0xff]
  %v22 = vld [vmem:[%s0 + $0x8] sm:$0xff]
  %v23 = vld [vmem:[%s0 + $0x10] sm:$0xff]
  %v24 = vld [vmem:[%s0 + $0x18] sm:$0xff]
  %v25 = vld [vmem:[%s0 + $0x20] sm:$0xff]
  %v26 = vld [vmem:[%s0 + $0x28] sm:$0xff]
  %v27 = vld [vmem:[%s0 + $0x30] sm:$0xff]
  %v28 = vld [vmem:[%s0 + $0x38] sm:$0xff]
  %v29 = vld [vmem:[%s1] sm:$0x1]
  %v30 = vld [vmem:[%s2] sm:$0x1]
  %vm31 = vcmask 261120
  %v32 = vsel %vm31, %v21, 0.0
  %33 = vadd.xlane.f32.xlu0 %v32
  %v34 = vpop.xlane.xlu0 %33
  %v35 = vsel %vm31, %v22, 0.0
  %36 = vadd.xlane.f32.xlu0 %v35
  %v37 = vpop.xlane.xlu0 %36
  %v38 = vsel %vm31, %v23, 0.0
  %39 = vadd.xlane.f32.xlu0 %v38
  %v40 = vpop.xlane.xlu0 %39
  %v41 = vsel %vm31, %v24, 0.0
  %42 = vadd.xlane.f32.xlu0 %v41
  %v43 = vpop.xlane.xlu0 %42
  %v44 = vsel %vm31, %v25, 0.0
  %45 = vadd.xlane.f32.xlu0 %v44
  %v46 = vpop.xlane.xlu0 %45
  %v47 = vsel %vm31, %v26, 0.0
  %48 = vadd.xlane.f32.xlu0 %v47
  %v49 = vpop.xlane.xlu0 %48
  %v50 = vsel %vm31, %v27, 0.0
  %51 = vadd.xlane.f32.xlu0 %v50
  %v52 = vpop.xlane.xlu0 %51
  %v53 = vsel %vm31, %v28, 0.0
  %54 = vadd.xlane.f32.xlu0 %v53
  %v55 = vpop.xlane.xlu0 %54
  %v56 = vrcp.pop 32.0
  %v57 = vmul.f32 32.0, %v56
  %v58 = vsub.f32 1.0, %v57
  %v59 = vmul.f32 %v56, %v58
  %v60 = vadd.f32 %v56, %v59
  %vm61 = vweird.f32 %v56
  %v62 = vsel %vm61, %v56, %v60
  %v63 = vmul.f32 %v34, %v62
  %v64 = vmul.f32 %v37, %v62
  %v65 = vmul.f32 %v40, %v62
  %v66 = vmul.f32 %v43, %v62
  %v67 = vmul.f32 %v46, %v62
  %v68 = vmul.f32 %v49, %v62
  %v69 = vmul.f32 %v52, %v62
  %v70 = vmul.f32 %v55, %v62
  %v71 = vsub.f32 %v21, %v63
  %v72 = vsub.f32 %v22, %v64
  %v73 = vsub.f32 %v23, %v65
  %v74 = vsub.f32 %v24, %v66
  %v75 = vsub.f32 %v25, %v67
  %v76 = vsub.f32 %v26, %v68
  %v77 = vsub.f32 %v27, %v69
  %v78 = vsub.f32 %v28, %v70
  %v79 = vmul.f32 %v71, %v71
  %v80 = vmul.f32 %v72, %v72
  %v81 = vmul.f32 %v73, %v73
  %v82 = vmul.f32 %v74, %v74
  %v83 = vmul.f32 %v75, %v75
  %v84 = vmul.f32 %v76, %v76
  %v85 = vmul.f32 %v77, %v77
  %v86 = vmul.f32 %v78, %v78
  %v87 = vsel %vm31, %v79, 0.0
  %88 = vadd.xlane.f32.xlu0 %v87
  %v89 = vpop.xlane.xlu0 %88
  %v90 = vsel %vm31, %v80, 0.0
  %91 = vadd.xlane.f32.xlu0 %v90
  %v92 = vpop.xlane.xlu0 %91
  %v93 = vsel %vm31, %v81, 0.0
  %94 = vadd.xlane.f32.xlu0 %v93
  %v95 = vpop.xlane.xlu0 %94
  %v96 = vsel %vm31, %v82, 0.0
  %97 = vadd.xlane.f32.xlu0 %v96
  %v98 = vpop.xlane.xlu0 %97
  %v99 = vsel %vm31, %v83, 0.0
  %100 = vadd.xlane.f32.xlu0 %v99
  %v101 = vpop.xlane.xlu0 %100
  %v102 = vsel %vm31, %v84, 0.0
  %103 = vadd.xlane.f32.xlu0 %v102
  %v104 = vpop.xlane.xlu0 %103
  %v105 = vsel %vm31, %v85, 0.0
  %106 = vadd.xlane.f32.xlu0 %v105
  %v107 = vpop.xlane.xlu0 %106
  %v108 = vsel %vm31, %v86, 0.0
  %109 = vadd.xlane.f32.xlu0 %v108
  %v110 = vpop.xlane.xlu0 %109
  %v111 = vmul.f32 %v89, %v62
  %v112 = vmul.f32 %v92, %v62
  %v113 = vmul.f32 %v95, %v62
  %v114 = vmul.f32 %v98, %v62
  %v115 = vmul.f32 %v101, %v62
  %v116 = vmul.f32 %v104, %v62
  %v117 = vmul.f32 %v107, %v62
  %v118 = vmul.f32 %v110, %v62
  %v119 = vadd.f32 %v111, 1e-05
  %v120 = vadd.f32 %v112, 1e-05
  %v121 = vadd.f32 %v113, 1e-05
  %v122 = vadd.f32 %v114, 1e-05
  %v123 = vadd.f32 %v115, 1e-05
  %v124 = vadd.f32 %v116, 1e-05
  %v125 = vadd.f32 %v117, 1e-05
  %v126 = vadd.f32 %v118, 1e-05
  %v127 = vrsqrt.pop %v119
  %v128 = vmul.f32 %v127, %v119
  %v129 = vmul.f32 %v128, %v127
  %v130 = vmul.f32 0.5, %v129
  %v131 = vsub.f32 1.5, %v130
  %v132 = vmul.f32 %v127, %v131
  %vm133 = vweird.f32 %v119
  %vm134 = vweird.f32 %v127
  %vm135 = vmor %vm133, %vm134
  %v136 = vsel %vm135, %v127, %v132
  %v137 = vrsqrt.pop %v120
  %v138 = vmul.f32 %v137, %v120
  %v139 = vmul.f32 %v138, %v137
  %v140 = vmul.f32 0.5, %v139
  %v141 = vsub.f32 1.5, %v140
  %v142 = vmul.f32 %v137, %v141
  %vm143 = vweird.f32 %v120
  %vm144 = vweird.f32 %v137
  %vm145 = vmor %vm143, %vm144
  %v146 = vsel %vm145, %v137, %v142
  %v147 = vrsqrt.pop %v121
  %v148 = vmul.f32 %v147, %v121
  %v149 = vmul.f32 %v148, %v147
  %v150 = vmul.f32 0.5, %v149
  %v151 = vsub.f32 1.5, %v150
  %v152 = vmul.f32 %v147, %v151
  %vm153 = vweird.f32 %v121
  %vm154 = vweird.f32 %v147
  %vm155 = vmor %vm153, %vm154
  %v156 = vsel %vm155, %v147, %v152
  %v157 = vrsqrt.pop %v122
  %v158 = vmul.f32 %v157, %v122
  %v159 = vmul.f32 %v158, %v157
  %v160 = vmul.f32 0.5, %v159
  %v161 = vsub.f32 1.5, %v160
  %v162 = vmul.f32 %v157, %v161
  %vm163 = vweird.f32 %v122
  %vm164 = vweird.f32 %v157
  %vm165 = vmor %vm163, %vm164
  %v166 = vsel %vm165, %v157, %v162
  %v167 = vrsqrt.pop %v123
  %v168 = vmul.f32 %v167, %v123
  %v169 = vmul.f32 %v168, %v167
  %v170 = vmul.f32 0.5, %v169
  %v171 = vsub.f32 1.5, %v170
  %v172 = vmul.f32 %v167, %v171
  %vm173 = vweird.f32 %v123
  %vm174 = vweird.f32 %v167
  %vm175 = vmor %vm173, %vm174
  %v176 = vsel %vm175, %v167, %v172
  %v177 = vrsqrt.pop %v124
  %v178 = vmul.f32 %v177, %v124
  %v179 = vmul.f32 %v178, %v177
  %v180 = vmul.f32 0.5, %v179
  %v181 = vsub.f32 1.5, %v180
  %v182 = vmul.f32 %v177, %v181
  %vm183 = vweird.f32 %v124
  %vm184 = vweird.f32 %v177
  %vm185 = vmor %vm183, %vm184
  %v186 = vsel %vm185, %v177, %v182
  %v187 = vrsqrt.pop %v125
  %v188 = vmul.f32 %v187, %v125
  %v189 = vmul.f32 %v188, %v187
  %v190 = vmul.f32 0.5, %v189
  %v191 = vsub.f32 1.5, %v190
  %v192 = vmul.f32 %v187, %v191
  %vm193 = vweird.f32 %v125
  %vm194 = vweird.f32 %v187
  %vm195 = vmor %vm193, %vm194
  %v196 = vsel %vm195, %v187, %v192
  %v197 = vrsqrt.pop %v126
  %v198 = vmul.f32 %v197, %v126
  %v199 = vmul.f32 %v198, %v197
  %v200 = vmul.f32 0.5, %v199
  %v201 = vsub.f32 1.5, %v200
  %v202 = vmul.f32 %v197, %v201
  %vm203 = vweird.f32 %v126
  %vm204 = vweird.f32 %v197
  %vm205 = vmor %vm203, %vm204
  %v206 = vsel %vm205, %v197, %v202
  %v207 = vmul.f32 %v71, %v136
  %v208 = vmul.f32 %v72, %v146
  %v209 = vmul.f32 %v73, %v156
  %v210 = vmul.f32 %v74, %v166
  %v211 = vmul.f32 %v75, %v176
  %v212 = vmul.f32 %v76, %v186
  %v213 = vmul.f32 %v77, %v196
  %v214 = vmul.f32 %v78, %v206
  %v216 = vperm.slane %v29, 0
  %v218 = vmul.f32 %v207, %v216
  %v219 = vmul.f32 %v208, %v216
  %v220 = vmul.f32 %v209, %v216
  %v221 = vmul.f32 %v210, %v216
  %v222 = vmul.f32 %v211, %v216
  %v223 = vmul.f32 %v212, %v216
  %v224 = vmul.f32 %v213, %v216
  %v225 = vmul.f32 %v214, %v216
  %v227 = vperm.slane %v30, 0
  %v229 = vadd.f32 %v218, %v227
  %v230 = vadd.f32 %v219, %v227
  %v231 = vadd.f32 %v220, %v227
  %v232 = vadd.f32 %v221, %v227
  %v233 = vadd.f32 %v222, %v227
  %v234 = vadd.f32 %v223, %v227
  %v235 = vadd.f32 %v224, %v227
  %v236 = vadd.f32 %v225, %v227
  %v237 = vld [vmem:[%s3] sm:$0xff]
  %v238 = vld [vmem:[%s3 + $0x8] sm:$0xff]
  %v239 = vld [vmem:[%s3 + $0x10] sm:$0xff]
  %v240 = vld [vmem:[%s3 + $0x18] sm:$0xff]
  %v241 = vpack.c.bf16 %v230, %v229
  %v242 = vpack.c.bf16 %v232, %v231
  %v243 = vpack.c.bf16 %v234, %v233
  %v244 = vpack.c.bf16 %v236, %v235
  %v245 = vpack.c.bf16 %v238, %v237
  %v246 = vpack.c.bf16 %v240, %v239
  %v247 = vld [vmem:[%s4] sm:$0x1]
  %v249 = vperm.slane %v247, 0
  %v252 = vsel %vm31, %v241, 0
  %v255 = vsel %vm31, %v242, 0
  %v258 = vsel %vm31, %v243, 0
  %v261 = vsel %vm31, %v244, 0
  %263 = vmatpush.bf16.msra.mxu0 0
  %264 = vmatpush.bf16.msra.mxu0 0
  %265 = vmatpush.bf16.msra.mxu0 0
  %266 = vmatpush.bf16.msra.mxu0 0
  %267 = vmatpush.bf16.msra.mxu0 0
  %268 = vmatpush.bf16.msra.mxu0 0
  %269 = vmatpush.bf16.msra.mxu0 %v246
  %270 = vmatpush.bf16.msra.mxu0 %v245
  %271 = vmatmul.bf16.gmra.mxu0 %v252
  %v272 = vpop.f32.mrf.mxu0
  %v273 = vadd.f32 %v249, %v272
  %v274 = vpop.f32.mrf.mxu0
  %v275 = vadd.f32 %v249, %v274
  %276 = vmatmul.bf16.gmra.mxu0 %v255
  %v277 = vpop.f32.mrf.mxu0
  %v278 = vadd.f32 %v249, %v277
  %v279 = vpop.f32.mrf.mxu0
  %v280 = vadd.f32 %v249, %v279
  %281 = vmatmul.bf16.gmra.mxu0 %v258
  %v282 = vpop.f32.mrf.mxu0
  %v283 = vadd.f32 %v249, %v282
  %v284 = vpop.f32.mrf.mxu0
  %v285 = vadd.f32 %v249, %v284
  %286 = vmatmul.bf16.gmra.mxu0 %v261
  %v287 = vpop.f32.mrf.mxu0
  %v288 = vadd.f32 %v249, %v287
  %v289 = vpop.f32.mrf.mxu0
  %v290 = vadd.f32 %v249, %v289
  %291 = vdwg.mxu0
  %vm292 = vcmp.gt.f32.partialorder %v273, 0.0
  %vm293 = vcmp.gt.f32.partialorder %v275, 0.0
  %vm294 = vcmp.gt.f32.partialorder %v278, 0.0
  %vm295 = vcmp.gt.f32.partialorder %v280, 0.0
  %vm296 = vcmp.gt.f32.partialorder %v283, 0.0
  %vm297 = vcmp.gt.f32.partialorder %v285, 0.0
  %vm298 = vcmp.gt.f32.partialorder %v288, 0.0
  %vm299 = vcmp.gt.f32.partialorder %v290, 0.0
  %v300 = vmin.f32 %v273, 0.0
  %v301 = vmin.f32 %v275, 0.0
  %v302 = vmin.f32 %v278, 0.0
  %v303 = vmin.f32 %v280, 0.0
  %v304 = vmin.f32 %v283, 0.0
  %v305 = vmin.f32 %v285, 0.0
  %v306 = vmin.f32 %v288, 0.0
  %v307 = vmin.f32 %v290, 0.0
  %v308 = vmul.f32 %v300, 1.442695
  %v309 = vpow.pop %v308
  %v310 = vmul.f32 %v301, 1.442695
  %v311 = vpow.pop %v310
  %v312 = vmul.f32 %v302, 1.442695
  %v313 = vpow.pop %v312
  %v314 = vmul.f32 %v303, 1.442695
  %v315 = vpow.pop %v314
  %v316 = vmul.f32 %v304, 1.442695
  %v317 = vpow.pop %v316
  %v318 = vmul.f32 %v305, 1.442695
  %v319 = vpow.pop %v318
  %v320 = vmul.f32 %v306, 1.442695
  %v321 = vpow.pop %v320
  %v322 = vmul.f32 %v307, 1.442695
  %v323 = vpow.pop %v322
  %v324 = vsub.f32 %v309, 1.0
  %v325 = vsub.f32 %v311, 1.0
  %v326 = vsub.f32 %v313, 1.0
  %v327 = vsub.f32 %v315, 1.0
  %v328 = vsub.f32 %v317, 1.0
  %v329 = vsub.f32 %v319, 1.0
  %v330 = vsub.f32 %v321, 1.0
  %v331 = vsub.f32 %v323, 1.0
  %v332 = vsel %vm292, %v273, %v324
  %v333 = vsel %vm293, %v275, %v325
  %v334 = vsel %vm294, %v278, %v326
  %v335 = vsel %vm295, %v280, %v327
  %v336 = vsel %vm296, %v283, %v328
  %v337 = vsel %vm297, %v285, %v329
  %v338 = vsel %vm298, %v288, %v330
  %v339 = vsel %vm299, %v290, %v331
  %340 = vst.msk [vmem:[%s5] sm:$0xff] %vm31, %v332
  %341 = vst.msk [vmem:[%s5 + $0x8] sm:$0xff] %vm31, %v333
  %342 = vst.msk [vmem:[%s5 + $0x10] sm:$0xff] %vm31, %v334
  %343 = vst.msk [vmem:[%s5 + $0x18] sm:$0xff] %vm31, %v335
  %344 = vst.msk [vmem:[%s5 + $0x20] sm:$0xff] %vm31, %v336
  %345 = vst.msk [vmem:[%s5 + $0x28] sm:$0xff] %vm31, %v337
  %346 = vst.msk [vmem:[%s5 + $0x30] sm:$0xff] %vm31, %v338
  %347 = vst.msk [vmem:[%s5 + $0x38] sm:$0xff] %vm31, %v339
  // Predicated region
  $region22: #{gconv_transformer_forward.34} parent=0 // pred_check
    _
  $region23: #{gconv_transformer_forward.34} parent=0 // pred_check_branch
    %349 = sbr.rel (0) target = $region25
  $region24: #{gconv_transformer_forward.34} parent=0 // pred_region
    _
  $region25: #{gconv_transformer_forward.34} parent=0 // pred_fallthru
    _
  // Predicated region
  $region26: #{gconv_transformer_forward.34} parent=0 // pred_check
    _
  $region27: #{gconv_transformer_forward.34} parent=0 // pred_check_branch
    %351 = sbr.rel (0) target = $region29
  $region28: #{gconv_transformer_forward.34} parent=0 // pred_region
    _
  $region29: #{gconv_transformer_forward.34} parent=0 // pred_fallthru
    _

// kernel: gconv_transformer_forward.27
$region0: #{gconv_transformer_forward.27}
  #allocation0 [shape = 'u32[]', space=smem, size = 0x4, offset = 0x4, fixed_abs, tag = 'smem constant byte address 0x4 - core index']
  #allocation1 [shape = 'u32[72,128]{1,0:T(1,128)}', space=vmem, size = 0x9000, scoped, tag = 'internal scratch']
  %s0 = inlined_call_operand.vmem [shape: f32[4,8], index: 0, kind: input, shape index: {}]
  %s1 = inlined_call_operand.vmem [shape: f32[4,8], index: 1, kind: input, shape index: {}]
  %s2 = inlined_call_operand.vmem [shape: f32[4,4], index: 2, kind: output, shape index: {}]
  %s3 = sld [smem:[#allocation0]]
  $region18: #{gconv_transformer_forward.27} parent=0
    _
  %s5 = ssub.s32 1, %s3
  %s6 = scalar_select 0, %s5, %s3
  // Predicated region
  $region2: #{gconv_transformer_forward.27} parent=0 // pred_check
    _
  $region3: #{gconv_transformer_forward.27} parent=0 // pred_check_branch
    %8 = sbr.rel (0) target = $region5
  $region4: #{gconv_transformer_forward.27} parent=0 // pred_region
    _
  $region5: #{gconv_transformer_forward.27} parent=0 // pred_fallthru
    _
  // Predicated region
  $region6: #{gconv_transformer_forward.27} parent=0 // pred_check
    _
  $region7: #{gconv_transformer_forward.27} parent=0 // pred_check_branch
    %10 = sbr.rel (0) target = $region9
  $region8: #{gconv_transformer_forward.27} parent=0 // pred_region
    _
  $region9: #{gconv_transformer_forward.27} parent=0 // pred_fallthru
    _
  %v11 = vld [vmem:[%s0] sm:$0xf]
  %v12 = vld [vmem:[%s1] sm:$0xf]
  %vm13 = vcmask 64512
  %v15 = vsel %vm13, %v11, 0
  %v18 = vsel %vm13, %v12, 0
  %20 = vmatpush.xpose.msra.mxu0 0.0
  %21 = vmatpush.xpose.msra.mxu0 0.0
  %22 = vmatpush.xpose.msra.mxu0 0.0
  %23 = vmatpush.xpose.msra.mxu0 0.0
  %24 = vmatpush.xpose.msra.mxu0 0.0
  %25 = vmatpush.xpose.msra.mxu0 0.0
  %26 = vmatpush.xpose.msra.mxu0 0.0
  %27 = vmatpush.xpose.msra.mxu0 0.0
  %28 = vmatpush.xpose.msra.mxu0 0.0
  %29 = vmatpush.xpose.msra.mxu0 0.0
  %30 = vmatpush.xpose.msra.mxu0 0.0
  %31 = vmatpush.xpose.msra.mxu0 0.0
  %32 = vmatpush.xpose.msra.mxu0 0.0
  %33 = vmatpush.xpose.msra.mxu0 0.0
  %34 = vmatpush.xpose.msra.mxu0 0.0
  %35 = vmatpush.xpose.msra.mxu0 %v18
  %36 = vmatmul.f32.gmra.mxu0 %v15
  %v37 = vpop.f32.mrf.mxu0
  %v38 = vadd.f32 0.0, %v37
  %39 = vdwg.mxu0
  %v40 = vmax.f32 %v38, 0.0
  %vm41 = vcmask 27648
  %v42 = vsel %vm41, %v40, -inf
  %43 = vmax.xlane.f32.xlu0 %v42
  %v44 = vpop.xlane.xlu0 %43
  %v45 = vsub.f32 %v40, %v44
  %v46 = vmul.f32 %v45, 1.442695
  %v47 = vpow.pop %v46
  %v48 = vsel %vm41, %v47, 0.0
  %49 = vadd.xlane.f32.xlu0 %v48
  %v50 = vpop.xlane.xlu0 %49
  %v51 = vrcp.pop %v50
  %v52 = vmul.f32 %v47, %v51
  %53 = vst.msk [vmem:[%s2] sm:$0xf] %vm41, %v52
  // Predicated region
  $region10: #{gconv_transformer_forward.27} parent=0 // pred_check
    _
  $region11: #{gconv_transformer_forward.27} parent=0 // pred_check_branch
    %55 = sbr.rel (0) target = $region13
  $region12: #{gconv_transformer_forward.27} parent=0 // pred_region
    _
  $region13: #{gconv_transformer_forward.27} parent=0 // pred_fallthru
    _
  // Predicated region
  $region14: #{gconv_transformer_forward.27} parent=0 // pred_check
    _
  $region15: #{gconv_transformer_forward.27} parent=0 // pred_check_branch
    %57 = sbr.rel (0) target = $region17
  $region16: #{gconv_transformer_forward.27} parent=0 // pred_region
    _
  $region17: #{gconv_transformer_forward.27} parent=0 // pred_fallthru
    _

// kernel: gconv_transformer_forward.36
$region0: #{gconv_transformer_forward.36}
  #allocation0 [shape = 'u32[]', space=smem, size = 0x4, offset = 0x4, fixed_abs, tag = 'smem constant byte address 0x4 - core index']
  #allocation1 [shape = 'u32[72,128]{1,0:T(1,128)}', space=vmem, size = 0x9000, scoped, tag = 'internal scratch']
  %s0 = inlined_call_operand.vmem [shape: f32[4,4], index: 0, kind: input, shape index: {}]
  %s1 = inlined_call_operand.vmem [shape: f32[4,512], index: 1, kind: input, shape index: {}]
  %s2 = inlined_call_operand.vmem [shape: f32[4,512], index: 2, kind: output, shape index: {0}]
  %s3 = inlined_call_operand.vmem [shape: f32[4,512], index: 3, kind: output, shape index: {1}]
  %4 = xla_tuple %s2, %s3
  %s5 = sld [smem:[#allocation0]]
  $region26: #{gconv_transformer_forward.36} parent=0
    _
  %s7 = ssub.s32 1, %s5
  %s8 = scalar_select 0, %s7, %s5
  // Predicated region
  $region2: #{gconv_transformer_forward.36} parent=0 // pred_check
    _
  $region3: #{gconv_transformer_forward.36} parent=0 // pred_check_branch
    %10 = sbr.rel (0) target = $region5
  $region4: #{gconv_transformer_forward.36} parent=0 // pred_region
    _
  $region5: #{gconv_transformer_forward.36} parent=0 // pred_fallthru
    _
  // Predicated region
  $region6: #{gconv_transformer_forward.36} parent=0 // pred_check
    _
  $region7: #{gconv_transformer_forward.36} parent=0 // pred_check_branch
    %12 = sbr.rel (0) target = $region9
  $region8: #{gconv_transformer_forward.36} parent=0 // pred_region
    _
  $region9: #{gconv_transformer_forward.36} parent=0 // pred_fallthru
    _
  %v14 = vld [vmem:[%s0] sm:$0xf]
  %v15 = vpack.c.bf16 %v14, %v14
  %v16 = vld [vmem:[%s1] sm:$0xff]
  %v17 = vld [vmem:[%s1 + $0x8] sm:$0xff]
  %20 = vst [vmem:[#allocation1] ss:$2 sm:$0xff] %v16
  %s21 = scalar_lea.vmem [#allocation1], 16
  %22 = vst [vmem:[%s21] ss:$2 sm:$0xff] %v17
  %v23 = vld.sshfl [vmem:[#allocation1] sm:$0xff pattern:$0x75316420]
  %v24 = vld.sshfl [vmem:[#allocation1 + $0x8] sm:$0xff pattern:$0x75316420]
  %v25 = vld.sshfl [vmem:[#allocation1 + $0x10] sm:$0xff pattern:$0x75316420]
  %v26 = vld.sshfl [vmem:[#allocation1 + $0x18] sm:$0xff pattern:$0x75316420]
  %v31 = vpack.c.bf16 %v23, %v23
  %v32 = vpack.c.bf16 %v24, %v24
  %v33 = vpack.c.bf16 %v25, %v25
  %v34 = vpack.c.bf16 %v26, %v26
  %vm35 = vcmask 31744
  %v37 = vsel %vm35, %v15, 0
  %vm39 = vcmask 1041408
  %v41 = vsel %vm39, %v31, 0
  %v44 = vsel %vm39, %v32, 0
  %v47 = vsel %vm39, %v33, 0
  %v50 = vsel %vm39, %v34, 0
  %52 = vmatpush.bf16.msra.mxu0 0
  %53 = vmatpush.bf16.msra.mxu0 0
  %54 = vmatpush.bf16.msra.mxu0 0
  %55 = vmatpush.bf16.msra.mxu0 0
  %56 = vmatpush.bf16.msra.mxu0 0
  %57 = vmatpush.bf16.msra.mxu0 0
  %58 = vmatpush.bf16.msra.mxu0 0
  %59 = vmatpush.bf16.msra.mxu0 %v41
  %60 = vmatmul.bf16.gmra.mxu0 %v37
  %v61 = vpop.f32.mrf.mxu0
  %v62 = vadd.f32 0.0, %v61
  %v63 = vpop.f32.mrf.mxu0
  %64 = vdwg.mxu0
  %65 = vmatpush.bf16.msra.mxu0 0
  %66 = vmatpush.bf16.msra.mxu0 0
  %67 = vmatpush.bf16.msra.mxu0 0
  %68 = vmatpush.bf16.msra.mxu0 0
  %69 = vmatpush.bf16.msra.mxu0 0
  %70 = vmatpush.bf16.msra.mxu0 0
  %71 = vmatpush.bf16.msra.mxu0 0
  %72 = vmatpush.bf16.msra.mxu0 %v44
  %73 = vmatmul.bf16.gmra.mxu0 %v37
  %v74 = vpop.f32.mrf.mxu0
  %v75 = vadd.f32 0.0, %v74
  %v76 = vpop.f32.mrf.mxu0
  %77 = vdwg.mxu0
  %78 = vmatpush.bf16.msra.mxu0 0
  %79 = vmatpush.bf16.msra.mxu0 0
  %80 = vmatpush.bf16.msra.mxu0 0
  %81 = vmatpush.bf16.msra.mxu0 0
  %82 = vmatpush.bf16.msra.mxu0 0
  %83 = vmatpush.bf16.msra.mxu0 0
  %84 = vmatpush.bf16.msra.mxu0 0
  %85 = vmatpush.bf16.msra.mxu0 %v47
  %86 = vmatmul.bf16.gmra.mxu0 %v37
  %v87 = vpop.f32.mrf.mxu0
  %v88 = vadd.f32 0.0, %v87
  %v89 = vpop.f32.mrf.mxu0
  %90 = vdwg.mxu0
  %91 = vmatpush.bf16.msra.mxu0 0
  %92 = vmatpush.bf16.msra.mxu0 0
  %93 = vmatpush.bf16.msra.mxu0 0
  %94 = vmatpush.bf16.msra.mxu0 0
  %95 = vmatpush.bf16.msra.mxu0 0
  %96 = vmatpush.bf16.msra.mxu0 0
  %97 = vmatpush.bf16.msra.mxu0 0
  %98 = vmatpush.bf16.msra.mxu0 %v50
  %99 = vmatmul.bf16.gmra.mxu0 %v37
  %v100 = vpop.f32.mrf.mxu0
  %v101 = vadd.f32 0.0, %v100
  %v102 = vpop.f32.mrf.mxu0
  %103 = vdwg.mxu0
  %v104 = vpack.c.bf16 %v62, %v62
  %v105 = vpack.c.bf16 %v75, %v75
  %v106 = vpack.c.bf16 %v88, %v88
  %v107 = vpack.c.bf16 %v101, %v101
  %v109 = vsel %vm39, %v104, 0
  %v112 = vsel %vm39, %v105, 0
  %v115 = vsel %vm39, %v106, 0
  %v118 = vsel %vm39, %v107, 0
  %120 = vmatpush.bf16.msra.mxu0 0
  %121 = vmatpush.bf16.msra.mxu0 0
  %122 = vmatpush.bf16.msra.mxu0 0
  %123 = vmatpush.bf16.msra.mxu0 0
  %124 = vmatpush.bf16.msra.mxu0 0
  %125 = vmatpush.bf16.msra.mxu0 0
  %126 = vmatpush.bf16.msra.mxu0 0
  %127 = vmatpush.bf16.msra.mxu0 %v109
  %128 = vmatmul.bf16.gmra.mxu0 %v37
  %v129 = vpop.f32.mrf.mxu0
  %v130 = vadd.f32 0.0, %v129
  %v131 = vpop.f32.mrf.mxu0
  %132 = vdwg.mxu0
  %133 = vmatpush.bf16.msra.mxu0 0
  %134 = vmatpush.bf16.msra.mxu0 0
  %135 = vmatpush.bf16.msra.mxu0 0
  %136 = vmatpush.bf16.msra.mxu0 0
  %137 = vmatpush.bf16.msra.mxu0 0
  %138 = vmatpush.bf16.msra.mxu0 0
  %139 = vmatpush.bf16.msra.mxu0 0
  %140 = vmatpush.bf16.msra.mxu0 %v112
  %141 = vmatmul.bf16.gmra.mxu0 %v37
  %v142 = vpop.f32.mrf.mxu0
  %v143 = vadd.f32 0.0, %v142
  %v144 = vpop.f32.mrf.mxu0
  %145 = vdwg.mxu0
  %146 = vmatpush.bf16.msra.mxu0 0
  %147 = vmatpush.bf16.msra.mxu0 0
  %148 = vmatpush.bf16.msra.mxu0 0
  %149 = vmatpush.bf16.msra.mxu0 0
  %150 = vmatpush.bf16.msra.mxu0 0
  %151 = vmatpush.bf16.msra.mxu0 0
  %152 = vmatpush.bf16.msra.mxu0 0
  %153 = vmatpush.bf16.msra.mxu0 %v115
  %154 = vmatmul.bf16.gmra.mxu0 %v37
  %v155 = vpop.f32.mrf.mxu0
  %v156 = vadd.f32 0.0, %v155
  %v157 = vpop.f32.mrf.mxu0
  %158 = vdwg.mxu0
  %159 = vmatpush.bf16.msra.mxu0 0
  %160 = vmatpush.bf16.msra.mxu0 0
  %161 = vmatpush.bf16.msra.mxu0 0
  %162 = vmatpush.bf16.msra.mxu0 0
  %163 = vmatpush.bf16.msra.mxu0 0
  %164 = vmatpush.bf16.msra.mxu0 0
  %165 = vmatpush.bf16.msra.mxu0 0
  %166 = vmatpush.bf16.msra.mxu0 %v118
  %167 = vmatmul.bf16.gmra.mxu0 %v37
  %v168 = vpop.f32.mrf.mxu0
  %v169 = vadd.f32 0.0, %v168
  %v170 = vpop.f32.mrf.mxu0
  %171 = vdwg.mxu0
  %v176 = vrot.slane %v75, 4
  %v177 = vrot.slane %v101, 4
  %vm178 = vcmask 1043456
  %v179 = vsel %vm178, %v62, %v176
  %v180 = vsel %vm178, %v88, %v177
  %183 = vst [vmem:[%s2] sm:$0xff] %v179
  %184 = vst [vmem:[%s2 + $0x8] sm:$0xff] %v180
  %v189 = vrot.slane %v143, 4
  %v190 = vrot.slane %v169, 4
  %v191 = vsel %vm178, %v130, %v189
  %v192 = vsel %vm178, %v156, %v190
  %195 = vst [vmem:[%s3] sm:$0xff] %v191
  %196 = vst [vmem:[%s3 + $0x8] sm:$0xff] %v192
  // Predicated region
  $region10: #{gconv_transformer_forward.36} parent=0 // pred_check
    _
  $region11: #{gconv_transformer_forward.36} parent=0 // pred_check_branch
    %198 = sbr.rel (0) target = $region13
  $region12: #{gconv_transformer_forward.36} parent=0 // pred_region
    _
  $region13: #{gconv_transformer_forward.36} parent=0 // pred_fallthru
    _
  // Predicated region
  $region14: #{gconv_transformer_forward.36} parent=0 // pred_check
    _
  $region15: #{gconv_transformer_forward.36} parent=0 // pred_check_branch
    %200 = sbr.rel (0) target = $region17
  $region16: #{gconv_transformer_forward.36} parent=0 // pred_region
    _
  $region17: #{gconv_transformer_forward.36} parent=0 // pred_fallthru
    _
  // Predicated region
  $region18: #{gconv_transformer_forward.36} parent=0 // pred_check
    _
  $region19: #{gconv_transformer_forward.36} parent=0 // pred_check_branch
    %202 = sbr.rel (0) target = $region21
  $region20: #{gconv_transformer_forward.36} parent=0 // pred_region
    _
  $region21: #{gconv_transformer_forward.36} parent=0 // pred_fallthru
    _
  // Predicated region
  $region22: #{gconv_transformer_forward.36} parent=0 // pred_check
    _
  $region23: #{gconv_transformer_forward.36} parent=0 // pred_check_branch
    %204 = sbr.rel (0) target = $region25
  $region24: #{gconv_transformer_forward.36} parent=0 // pred_region
    _
  $region25: #{gconv_transformer_forward.36} parent=0 // pred_fallthru
    _

// kernel: gconv_transformer_forward.37
$region0: #{gconv_transformer_forward.37}
  #allocation0 [shape = 'u32[]', space=smem, size = 0x4, offset = 0x4, fixed_abs, tag = 'smem constant byte address 0x4 - core index']
  #allocation1 [shape = 'u32[72,128]{1,0:T(1,128)}', space=vmem, size = 0x9000, scoped, tag = 'internal scratch']
  %s0 = inlined_call_operand.vmem [shape: f32[64,96], index: 0, kind: input, shape index: {}]
  %s1 = inlined_call_operand.vmem [shape: f32[96,32], index: 1, kind: input, shape index: {}]
  %s2 = inlined_call_operand.vmem [shape: f32[1,32], index: 2, kind: input, shape index: {}]
  %s3 = inlined_call_operand.vmem [shape: f32[64,32], index: 3, kind: output, shape index: {}]
  %s4 = sld [smem:[#allocation0]]
  $region22: #{gconv_transformer_forward.37} parent=0
    _
  %s6 = ssub.s32 1, %s4
  %s7 = scalar_select 0, %s6, %s4
  // Predicated region
  $region2: #{gconv_transformer_forward.37} parent=0 // pred_check
    _
  $region3: #{gconv_transformer_forward.37} parent=0 // pred_check_branch
    %9 = sbr.rel (0) target = $region5
  $region4: #{gconv_transformer_forward.37} parent=0 // pred_region
    _
  $region5: #{gconv_transformer_forward.37} parent=0 // pred_fallthru
    _
  // Predicated region
  $region6: #{gconv_transformer_forward.37} parent=0 // pred_check
    _
  $region7: #{gconv_transformer_forward.37} parent=0 // pred_check_branch
    %11 = sbr.rel (0) target = $region9
  $region8: #{gconv_transformer_forward.37} parent=0 // pred_region
    _
  $region9: #{gconv_transformer_forward.37} parent=0 // pred_fallthru
    _
  // Predicated region
  $region10: #{gconv_transformer_forward.37} parent=0 // pred_check
    _
  $region11: #{gconv_transformer_forward.37} parent=0 // pred_check_branch
    %13 = sbr.rel (0) target = $region13
  $region12: #{gconv_transformer_forward.37} parent=0 // pred_region
    _
  $region13: #{gconv_transformer_forward.37} parent=0 // pred_fallthru
    _
  %v15 = vld [vmem:[%s0] sm:$0xff]
  %v16 = vld [vmem:[%s0 + $0x8] sm:$0xff]
  %v17 = vld [vmem:[%s0 + $0x10] sm:$0xff]
  %v18 = vld [vmem:[%s0 + $0x18] sm:$0xff]
  %v19 = vld [vmem:[%s0 + $0x20] sm:$0xff]
  %v20 = vld [vmem:[%s0 + $0x28] sm:$0xff]
  %v21 = vld [vmem:[%s0 + $0x30] sm:$0xff]
  %v22 = vld [vmem:[%s0 + $0x38] sm:$0xff]
  %v23 = vld [vmem:[%s1] sm:$0xff]
  %v24 = vld [vmem:[%s1 + $0x8] sm:$0xff]
  %v25 = vld [vmem:[%s1 + $0x10] sm:$0xff]
  %v26 = vld [vmem:[%s1 + $0x18] sm:$0xff]
  %v27 = vld [vmem:[%s1 + $0x20] sm:$0xff]
  %v28 = vld [vmem:[%s1 + $0x28] sm:$0xff]
  %v29 = vld [vmem:[%s1 + $0x30] sm:$0xff]
  %v30 = vld [vmem:[%s1 + $0x38] sm:$0xff]
  %v31 = vld [vmem:[%s1 + $0x40] sm:$0xff]
  %v32 = vld [vmem:[%s1 + $0x48] sm:$0xff]
  %v33 = vld [vmem:[%s1 + $0x50] sm:$0xff]
  %v34 = vld [vmem:[%s1 + $0x58] sm:$0xff]
  %v35 = vpack.c.bf16 %v16, %v15
  %v36 = vpack.c.bf16 %v18, %v17
  %v37 = vpack.c.bf16 %v20, %v19
  %v38 = vpack.c.bf16 %v22, %v21
  %v39 = vpack.c.bf16 %v24, %v23
  %v40 = vpack.c.bf16 %v26, %v25
  %v41 = vpack.c.bf16 %v28, %v27
  %v42 = vpack.c.bf16 %v30, %v29
  %v43 = vpack.c.bf16 %v32, %v31
  %v44 = vpack.c.bf16 %v34, %v33
  %v45 = vld [vmem:[%s2] sm:$0x1]
  %v47 = vperm.slane %v45, 0
  %vm49 = vcmask 785408
  %v51 = vsel %vm49, %v35, 0
  %v54 = vsel %vm49, %v36, 0
  %v57 = vsel %vm49, %v37, 0
  %v60 = vsel %vm49, %v38, 0
  %62 = vmatpush.bf16.msra.mxu0 0
  %63 = vmatpush.bf16.msra.mxu0 0
  %64 = vmatpush.bf16.msra.mxu0 %v44
  %65 = vmatpush.bf16.msra.mxu0 %v43
  %66 = vmatpush.bf16.msra.mxu0 %v42
  %67 = vmatpush.bf16.msra.mxu0 %v41
  %68 = vmatpush.bf16.msra.mxu0 %v40
  %69 = vmatpush.bf16.msra.mxu0 %v39
  %70 = vmatmul.bf16.gmra.mxu0 %v51
  %v71 = vpop.f32.mrf.mxu0
  %v72 = vadd.f32 %v47, %v71
  %v73 = vpop.f32.mrf.mxu0
  %v74 = vadd.f32 %v47, %v73
  %75 = vmatmul.bf16.gmra.mxu0 %v54
  %v76 = vpop.f32.mrf.mxu0
  %v77 = vadd.f32 %v47, %v76
  %v78 = vpop.f32.mrf.mxu0
  %v79 = vadd.f32 %v47, %v78
  %80 = vmatmul.bf16.gmra.mxu0 %v57
  %v81 = vpop.f32.mrf.mxu0
  %v82 = vadd.f32 %v47, %v81
  %v83 = vpop.f32.mrf.mxu0
  %v84 = vadd.f32 %v47, %v83
  %85 = vmatmul.bf16.gmra.mxu0 %v60
  %v86 = vpop.f32.mrf.mxu0
  %v87 = vadd.f32 %v47, %v86
  %v88 = vpop.f32.mrf.mxu0
  %v89 = vadd.f32 %v47, %v88
  %90 = vdwg.mxu0
  %vm91 = vcmask 261120
  %92 = vst.msk [vmem:[%s3] sm:$0xff] %vm91, %v72
  %93 = vst.msk [vmem:[%s3 + $0x8] sm:$0xff] %vm91, %v74
  %94 = vst.msk [vmem:[%s3 + $0x10] sm:$0xff] %vm91, %v77
  %95 = vst.msk [vmem:[%s3 + $0x18] sm:$0xff] %vm91, %v79
  %96 = vst.msk [vmem:[%s3 + $0x20] sm:$0xff] %vm91, %v82
  %97 = vst.msk [vmem:[%s3 + $0x28] sm:$0xff] %vm91, %v84
  %98 = vst.msk [vmem:[%s3 + $0x30] sm:$0xff] %vm91, %v87
  %99 = vst.msk [vmem:[%s3 + $0x38] sm:$0xff] %vm91, %v89
  // Predicated region
  $region14: #{gconv_transformer_forward.37} parent=0 // pred_check
    _
  $region15: #{gconv_transformer_forward.37} parent=0 // pred_check_branch
    %101 = sbr.rel (0) target = $region17
  $region16: #{gconv_transformer_forward.37} parent=0 // pred_region
    _
  $region17: #{gconv_transformer_forward.37} parent=0 // pred_fallthru
    _
  // Predicated region
  $region18: #{gconv_transformer_forward.37} parent=0 // pred_check
    _
  $region19: #{gconv_transformer_forward.37} parent=0 // pred_check_branch
    %103 = sbr.rel (0) target = $region21
  $region20: #{gconv_transformer_forward.37} parent=0 // pred_region
    _
  $region21: #{gconv_transformer_forward.37} parent=0 // pred_fallthru
    _

// kernel: gconv_transformer_forward.49
$region0: #{gconv_transformer_forward.49}
  #allocation0 [shape = 'u32[]', space=smem, size = 0x4, offset = 0x4, fixed_abs, tag = 'smem constant byte address 0x4 - core index']
  #allocation1 [shape = 'u32[72,128]{1,0:T(1,128)}', space=vmem, size = 0x9000, scoped, tag = 'internal scratch']
  #allocation2 [shape = 'f32[1,1]{1,0:T(1,128)S(1)}', space=vmem, size = 0x200, scoped, tag = 'scoped memory for gconv_transformer_forward.49']
  %s0 = inlined_call_operand.vmem [shape: f32[64,32], index: 0, kind: input, shape index: {}]
  %s1 = inlined_call_operand.vmem [shape: f32[32,32], index: 1, kind: input, shape index: {}]
  %s2 = inlined_call_operand.vmem [shape: f32[1,32], index: 2, kind: input, shape index: {}]
  %s3 = inlined_call_operand.vmem [shape: f32[32,32], index: 3, kind: input, shape index: {}]
  %s4 = inlined_call_operand.vmem [shape: f32[1,32], index: 4, kind: input, shape index: {}]
  %s5 = inlined_call_operand.vmem [shape: f32[32,1], index: 5, kind: input, shape index: {}]
  %s6 = inlined_call_operand.<no memory space> [shape: f32[1,1], index: 6, kind: input, shape index: {}]
  %s7 = inlined_call_operand.vmem [shape: f32[64,1], index: 7, kind: output, shape index: {}]
  %s8 = sld [smem:[#allocation0]]
  $region38: #{gconv_transformer_forward.49} parent=0
    _
  %s10 = ssub.s32 1, %s8
  %s11 = scalar_select 0, %s10, %s8
  %v12 = vstv %s6
  %13 = vst [vmem:[#allocation2] sm:$0x1] %v12
  // Predicated region
  $region2: #{gconv_transformer_forward.49} parent=0 // pred_check
    _
  $region3: #{gconv_transformer_forward.49} parent=0 // pred_check_branch
    %15 = sbr.rel (0) target = $region5
  $region4: #{gconv_transformer_forward.49} parent=0 // pred_region
    _
  $region5: #{gconv_transformer_forward.49} parent=0 // pred_fallthru
    _
  // Predicated region
  $region6: #{gconv_transformer_forward.49} parent=0 // pred_check
    _
  $region7: #{gconv_transformer_forward.49} parent=0 // pred_check_branch
    %17 = sbr.rel (0) target = $region9
  $region8: #{gconv_transformer_forward.49} parent=0 // pred_region
    _
  $region9: #{gconv_transformer_forward.49} parent=0 // pred_fallthru
    _
  // Predicated region
  $region10: #{gconv_transformer_forward.49} parent=0 // pred_check
    _
  $region11: #{gconv_transformer_forward.49} parent=0 // pred_check_branch
    %19 = sbr.rel (0) target = $region13
  $region12: #{gconv_transformer_forward.49} parent=0 // pred_region
    _
  $region13: #{gconv_transformer_forward.49} parent=0 // pred_fallthru
    _
  // Predicated region
  $region14: #{gconv_transformer_forward.49} parent=0 // pred_check
    _
  $region15: #{gconv_transformer_forward.49} parent=0 // pred_check_branch
    %21 = sbr.rel (0) target = $region17
  $region16: #{gconv_transformer_forward.49} parent=0 // pred_region
    _
  $region17: #{gconv_transformer_forward.49} parent=0 // pred_fallthru
    _
  // Predicated region
  $region18: #{gconv_transformer_forward.49} parent=0 // pred_check
    _
  $region19: #{gconv_transformer_forward.49} parent=0 // pred_check_branch
    %23 = sbr.rel (0) target = $region21
  $region20: #{gconv_transformer_forward.49} parent=0 // pred_region
    _
  $region21: #{gconv_transformer_forward.49} parent=0 // pred_fallthru
    _
  // Predicated region
  $region22: #{gconv_transformer_forward.49} parent=0 // pred_check
    _
  $region23: #{gconv_transformer_forward.49} parent=0 // pred_check_branch
    %25 = sbr.rel (0) target = $region25
  $region24: #{gconv_transformer_forward.49} parent=0 // pred_region
    _
  $region25: #{gconv_transformer_forward.49} parent=0 // pred_fallthru
    _
  // Predicated region
  $region26: #{gconv_transformer_forward.49} parent=0 // pred_check
    _
  $region27: #{gconv_transformer_forward.49} parent=0 // pred_check_branch
    %27 = sbr.rel (0) target = $region29
  $region28: #{gconv_transformer_forward.49} parent=0 // pred_region
    _
  $region29: #{gconv_transformer_forward.49} parent=0 // pred_fallthru
    _
  %v29 = vld [vmem:[%s0] sm:$0xff]
  %v30 = vld [vmem:[%s0 + $0x8] sm:$0xff]
  %v31 = vld [vmem:[%s0 + $0x10] sm:$0xff]
  %v32 = vld [vmem:[%s0 + $0x18] sm:$0xff]
  %v33 = vld [vmem:[%s0 + $0x20] sm:$0xff]
  %v34 = vld [vmem:[%s0 + $0x28] sm:$0xff]
  %v35 = vld [vmem:[%s0 + $0x30] sm:$0xff]
  %v36 = vld [vmem:[%s0 + $0x38] sm:$0xff]
  %v37 = vld [vmem:[%s1] sm:$0xff]
  %v38 = vld [vmem:[%s1 + $0x8] sm:$0xff]
  %v39 = vld [vmem:[%s1 + $0x10] sm:$0xff]
  %v40 = vld [vmem:[%s1 + $0x18] sm:$0xff]
  %v41 = vpack.c.bf16 %v30, %v29
  %v42 = vpack.c.bf16 %v32, %v31
  %v43 = vpack.c.bf16 %v34, %v33
  %v44 = vpack.c.bf16 %v36, %v35
  %v45 = vpack.c.bf16 %v38, %v37
  %v46 = vpack.c.bf16 %v40, %v39
  %v47 = vld [vmem:[%s2] sm:$0x1]
  %v49 = vperm.slane %v47, 0
  %vm51 = vcmask 261120
  %v53 = vsel %vm51, %v41, 0
  %v56 = vsel %vm51, %v42, 0
  %v59 = vsel %vm51, %v43, 0
  %v62 = vsel %vm51, %v44, 0
  %64 = vmatpush.bf16.msra.mxu0 0
  %65 = vmatpush.bf16.msra.mxu0 0
  %66 = vmatpush.bf16.msra.mxu0 0
  %67 = vmatpush.bf16.msra.mxu0 0
  %68 = vmatpush.bf16.msra.mxu0 0
  %69 = vmatpush.bf16.msra.mxu0 0
  %70 = vmatpush.bf16.msra.mxu0 %v46
  %71 = vmatpush.bf16.msra.mxu0 %v45
  %72 = vmatmul.bf16.gmra.mxu0 %v53
  %v73 = vpop.f32.mrf.mxu0
  %v74 = vadd.f32 %v49, %v73
  %v75 = vpop.f32.mrf.mxu0
  %v76 = vadd.f32 %v49, %v75
  %77 = vmatmul.bf16.gmra.mxu0 %v56
  %v78 = vpop.f32.mrf.mxu0
  %v79 = vadd.f32 %v49, %v78
  %v80 = vpop.f32.mrf.mxu0
  %v81 = vadd.f32 %v49, %v80
  %82 = vmatmul.bf16.gmra.mxu0 %v59
  %v83 = vpop.f32.mrf.mxu0
  %v84 = vadd.f32 %v49, %v83
  %v85 = vpop.f32.mrf.mxu0
  %v86 = vadd.f32 %v49, %v85
  %87 = vmatmul.bf16.gmra.mxu0 %v62
  %v88 = vpop.f32.mrf.mxu0
  %v89 = vadd.f32 %v49, %v88
  %v90 = vpop.f32.mrf.mxu0
  %v91 = vadd.f32 %v49, %v90
  %92 = vdwg.mxu0
  %v93 = vmax.f32 %v74, 0.0
  %v94 = vmax.f32 %v76, 0.0
  %v95 = vmax.f32 %v79, 0.0
  %v96 = vmax.f32 %v81, 0.0
  %v97 = vmax.f32 %v84, 0.0
  %v98 = vmax.f32 %v86, 0.0
  %v99 = vmax.f32 %v89, 0.0
  %v100 = vmax.f32 %v91, 0.0
  %v101 = vld [vmem:[%s3] sm:$0xff]
  %v102 = vld [vmem:[%s3 + $0x8] sm:$0xff]
  %v103 = vld [vmem:[%s3 + $0x10] sm:$0xff]
  %v104 = vld [vmem:[%s3 + $0x18] sm:$0xff]
  %v105 = vpack.c.bf16 %v94, %v93
  %v106 = vpack.c.bf16 %v96, %v95
  %v107 = vpack.c.bf16 %v98, %v97
  %v108 = vpack.c.bf16 %v100, %v99
  %v109 = vpack.c.bf16 %v102, %v101
  %v110 = vpack.c.bf16 %v104, %v103
  %v111 = vld [vmem:[%s4] sm:$0x1]
  %v113 = vperm.slane %v111, 0
  %v116 = vsel %vm51, %v105, 0
  %v119 = vsel %vm51, %v106, 0
  %v122 = vsel %vm51, %v107, 0
  %v125 = vsel %vm51, %v108, 0
  %127 = vmatpush.bf16.msra.mxu0 0
  %128 = vmatpush.bf16.msra.mxu0 0
  %129 = vmatpush.bf16.msra.mxu0 0
  %130 = vmatpush.bf16.msra.mxu0 0
  %131 = vmatpush.bf16.msra.mxu0 0
  %132 = vmatpush.bf16.msra.mxu0 0
  %133 = vmatpush.bf16.msra.mxu0 %v110
  %134 = vmatpush.bf16.msra.mxu0 %v109
  %135 = vmatmul.bf16.gmra.mxu0 %v116
  %v136 = vpop.f32.mrf.mxu0
  %v137 = vadd.f32 %v113, %v136
  %v138 = vpop.f32.mrf.mxu0
  %v139 = vadd.f32 %v113, %v138
  %140 = vmatmul.bf16.gmra.mxu0 %v119
  %v141 = vpop.f32.mrf.mxu0
  %v142 = vadd.f32 %v113, %v141
  %v143 = vpop.f32.mrf.mxu0
  %v144 = vadd.f32 %v113, %v143
  %145 = vmatmul.bf16.gmra.mxu0 %v122
  %v146 = vpop.f32.mrf.mxu0
  %v147 = vadd.f32 %v113, %v146
  %v148 = vpop.f32.mrf.mxu0
  %v149 = vadd.f32 %v113, %v148
  %150 = vmatmul.bf16.gmra.mxu0 %v125
  %v151 = vpop.f32.mrf.mxu0
  %v152 = vadd.f32 %v113, %v151
  %v153 = vpop.f32.mrf.mxu0
  %v154 = vadd.f32 %v113, %v153
  %155 = vdwg.mxu0
  %v156 = vmax.f32 %v137, 0.0
  %v157 = vmax.f32 %v139, 0.0
  %v158 = vmax.f32 %v142, 0.0
  %v159 = vmax.f32 %v144, 0.0
  %v160 = vmax.f32 %v147, 0.0
  %v161 = vmax.f32 %v149, 0.0
  %v162 = vmax.f32 %v152, 0.0
  %v163 = vmax.f32 %v154, 0.0
  %v164 = vld [vmem:[%s5] sm:$0xff]
  %v165 = vld [vmem:[%s5 + $0x8] sm:$0xff]
  %v166 = vld [vmem:[%s5 + $0x10] sm:$0xff]
  %v167 = vld [vmem:[%s5 + $0x18] sm:$0xff]
  %v168 = vpack.c.bf16 %v157, %v156
  %v169 = vpack.c.bf16 %v159, %v158
  %v170 = vpack.c.bf16 %v161, %v160
  %v171 = vpack.c.bf16 %v163, %v162
  %v172 = vpack.c.bf16 %v165, %v164
  %v173 = vpack.c.bf16 %v167, %v166
  %v174 = vld [vmem:[#allocation2] sm:$0x1]
  %v176 = vperm.slane %v174, 0
  %v179 = vsel %vm51, %v168, 0
  %v182 = vsel %vm51, %v169, 0
  %v185 = vsel %vm51, %v170, 0
  %v188 = vsel %vm51, %v171, 0
  %190 = vmatpush.bf16.msra.mxu0 0
  %191 = vmatpush.bf16.msra.mxu0 0
  %192 = vmatpush.bf16.msra.mxu0 0
  %193 = vmatpush.bf16.msra.mxu0 0
  %194 = vmatpush.bf16.msra.mxu0 0
  %195 = vmatpush.bf16.msra.mxu0 0
  %196 = vmatpush.bf16.msra.mxu0 %v173
  %197 = vmatpush.bf16.msra.mxu0 %v172
  %198 = vmatmul.bf16.gmra.mxu0 %v179
  %v199 = vpop.f32.mrf.mxu0
  %v200 = vadd.f32 %v176, %v199
  %v201 = vpop.f32.mrf.mxu0
  %v202 = vadd.f32 %v176, %v201
  %203 = vmatmul.bf16.gmra.mxu0 %v182
  %v204 = vpop.f32.mrf.mxu0
  %v205 = vadd.f32 %v176, %v204
  %v206 = vpop.f32.mrf.mxu0
  %v207 = vadd.f32 %v176, %v206
  %208 = vmatmul.bf16.gmra.mxu0 %v185
  %v209 = vpop.f32.mrf.mxu0
  %v210 = vadd.f32 %v176, %v209
  %v211 = vpop.f32.mrf.mxu0
  %v212 = vadd.f32 %v176, %v211
  %213 = vmatmul.bf16.gmra.mxu0 %v188
  %v214 = vpop.f32.mrf.mxu0
  %v215 = vadd.f32 %v176, %v214
  %v216 = vpop.f32.mrf.mxu0
  %v217 = vadd.f32 %v176, %v216
  %218 = vdwg.mxu0
  %vm219 = vcmask 7168
  %220 = vst.msk [vmem:[%s7] sm:$0xff] %vm219, %v200
  %221 = vst.msk [vmem:[%s7 + $0x8] sm:$0xff] %vm219, %v202
  %222 = vst.msk [vmem:[%s7 + $0x10] sm:$0xff] %vm219, %v205
  %223 = vst.msk [vmem:[%s7 + $0x18] sm:$0xff] %vm219, %v207
  %224 = vst.msk [vmem:[%s7 + $0x20] sm:$0xff] %vm219, %v210
  %225 = vst.msk [vmem:[%s7 + $0x28] sm:$0xff] %vm219, %v212
  %226 = vst.msk [vmem:[%s7 + $0x30] sm:$0xff] %vm219, %v215
  %227 = vst.msk [vmem:[%s7 + $0x38] sm:$0xff] %vm219, %v217
  // Predicated region
  $region30: #{gconv_transformer_forward.49} parent=0 // pred_check
    _
  $region31: #{gconv_transformer_forward.49} parent=0 // pred_check_branch
    %229 = sbr.rel (0) target = $region33
  $region32: #{gconv_transformer_forward.49} parent=0 // pred_region
    _
  $region33: #{gconv_transformer_forward.49} parent=0 // pred_fallthru
    _
  // Predicated region
  $region34: #{gconv_transformer_forward.49} parent=0 // pred_check
    _
  $region35: #{gconv_transformer_forward.49} parent=0 // pred_check_branch
    %231 = sbr.rel (0) target = $region37
  $region36: #{gconv_transformer_forward.49} parent=0 // pred_region
    _
  $region37: #{gconv_transformer_forward.49} parent=0 // pred_fallthru
    _

// kernel: gconv_transformer_forward.32
$region0: #{gconv_transformer_forward.32}
  #allocation0 [shape = 'u32[]', space=smem, size = 0x4, offset = 0x4, fixed_abs, tag = 'smem constant byte address 0x4 - core index']
  #allocation1 [shape = 'u32[72,128]{1,0:T(1,128)}', space=vmem, size = 0x9000, scoped, tag = 'internal scratch']
  %s0 = inlined_call_operand.vmem [shape: f32[32,4,16], index: 0, kind: input, shape index: {}]
  %s1 = inlined_call_operand.vmem [shape: f32[32,4,16], index: 1, kind: input, shape index: {}]
  %s2 = inlined_call_operand.vmem [shape: f32[32,4,16], index: 2, kind: input, shape index: {}]
  %s3 = inlined_call_operand.vmem [shape: f32[32,4,16], index: 3, kind: output, shape index: {}]
  %s4 = sld [smem:[#allocation0]]
  $region22: #{gconv_transformer_forward.32} parent=0
    _
  %s6 = ssub.s32 1, %s4
  %s7 = scalar_select 0, %s6, %s4
  // Predicated region
  $region2: #{gconv_transformer_forward.32} parent=0 // pred_check
    _
  $region3: #{gconv_transformer_forward.32} parent=0 // pred_check_branch
    %9 = sbr.rel (0) target = $region5
  $region4: #{gconv_transformer_forward.32} parent=0 // pred_region
    _
  $region5: #{gconv_transformer_forward.32} parent=0 // pred_fallthru
    _
  // Predicated region
  $region6: #{gconv_transformer_forward.32} parent=0 // pred_check
    _
  $region7: #{gconv_transformer_forward.32} parent=0 // pred_check_branch
    %11 = sbr.rel (0) target = $region9
  $region8: #{gconv_transformer_forward.32} parent=0 // pred_region
    _
  $region9: #{gconv_transformer_forward.32} parent=0 // pred_fallthru
    _
  // Predicated region
  $region10: #{gconv_transformer_forward.32} parent=0 // pred_check
    _
  $region11: #{gconv_transformer_forward.32} parent=0 // pred_check_branch
    %13 = sbr.rel (0) target = $region13
  $region12: #{gconv_transformer_forward.32} parent=0 // pred_region
    _
  $region13: #{gconv_transformer_forward.32} parent=0 // pred_fallthru
    _
  %v15 = vld [vmem:[%s0] sm:$0xf]
  %v16 = vld [vmem:[%s0 + $0x4] sm:$0xf]
  %v17 = vld [vmem:[%s0 + $0x8] sm:$0xf]
  %v18 = vld [vmem:[%s0 + $0xc] sm:$0xf]
  %v19 = vld [vmem:[%s0 + $0x10] sm:$0xf]
  %v20 = vld [vmem:[%s0 + $0x14] sm:$0xf]
  %v21 = vld [vmem:[%s0 + $0x18] sm:$0xf]
  %v22 = vld [vmem:[%s0 + $0x1c] sm:$0xf]
  %v23 = vld [vmem:[%s0 + $0x20] sm:$0xf]
  %v24 = vld [vmem:[%s0 + $0x24] sm:$0xf]
  %v25 = vld [vmem:[%s0 + $0x28] sm:$0xf]
  %v26 = vld [vmem:[%s0 + $0x2c] sm:$0xf]
  %v27 = vld [vmem:[%s0 + $0x30] sm:$0xf]
  %v28 = vld [vmem:[%s0 + $0x34] sm:$0xf]
  %v29 = vld [vmem:[%s0 + $0x38] sm:$0xf]
  %v30 = vld [vmem:[%s0 + $0x3c] sm:$0xf]
  %v31 = vld [vmem:[%s0 + $0x40] sm:$0xf]
  %v32 = vld [vmem:[%s0 + $0x44] sm:$0xf]
  %v33 = vld [vmem:[%s0 + $0x48] sm:$0xf]
  %v34 = vld [vmem:[%s0 + $0x4c] sm:$0xf]
  %v35 = vld [vmem:[%s0 + $0x50] sm:$0xf]
  %v36 = vld [vmem:[%s0 + $0x54] sm:$0xf]
  %v37 = vld [vmem:[%s0 + $0x58] sm:$0xf]
  %v38 = vld [vmem:[%s0 + $0x5c] sm:$0xf]
  %v39 = vld [vmem:[%s0 + $0x60] sm:$0xf]
  %v40 = vld [vmem:[%s0 + $0x64] sm:$0xf]
  %v41 = vld [vmem:[%s0 + $0x68] sm:$0xf]
  %v42 = vld [vmem:[%s0 + $0x6c] sm:$0xf]
  %v43 = vld [vmem:[%s0 + $0x70] sm:$0xf]
  %v44 = vld [vmem:[%s0 + $0x74] sm:$0xf]
  %v45 = vld [vmem:[%s0 + $0x78] sm:$0xf]
  %v46 = vld [vmem:[%s0 + $0x7c] sm:$0xf]
  %v47 = vpack.c.bf16 %v15, %v15
  %v48 = vpack.c.bf16 %v16, %v16
  %v49 = vpack.c.bf16 %v17, %v17
  %v50 = vpack.c.bf16 %v18, %v18
  %v51 = vpack.c.bf16 %v19, %v19
  %v52 = vpack.c.bf16 %v20, %v20
  %v53 = vpack.c.bf16 %v21, %v21
  %v54 = vpack.c.bf16 %v22, %v22
  %v55 = vpack.c.bf16 %v23, %v23
  %v56 = vpack.c.bf16 %v24, %v24
  %v57 = vpack.c.bf16 %v25, %v25
  %v58 = vpack.c.bf16 %v26, %v26
  %v59 = vpack.c.bf16 %v27, %v27
  %v60 = vpack.c.bf16 %v28, %v28
  %v61 = vpack.c.bf16 %v29, %v29
  %v62 = vpack.c.bf16 %v30, %v30
  %v63 = vpack.c.bf16 %v31, %v31
  %v64 = vpack.c.bf16 %v32, %v32
  %v65 = vpack.c.bf16 %v33, %v33
  %v66 = vpack.c.bf16 %v34, %v34
  %v67 = vpack.c.bf16 %v35, %v35
  %v68 = vpack.c.bf16 %v36, %v36
  %v69 = vpack.c.bf16 %v37, %v37
  %v70 = vpack.c.bf16 %v38, %v38
  %v71 = vpack.c.bf16 %v39, %v39
  %v72 = vpack.c.bf16 %v40, %v40
  %v73 = vpack.c.bf16 %v41, %v41
  %v74 = vpack.c.bf16 %v42, %v42
  %v75 = vpack.c.bf16 %v43, %v43
  %v76 = vpack.c.bf16 %v44, %v44
  %v77 = vpack.c.bf16 %v45, %v45
  %v78 = vpack.c.bf16 %v46, %v46
  %v79 = vld [vmem:[%s1] sm:$0xf]
  %v80 = vld [vmem:[%s1 + $0x4] sm:$0xf]
  %v81 = vld [vmem:[%s1 + $0x8] sm:$0xf]
  %v82 = vld [vmem:[%s1 + $0xc] sm:$0xf]
  %v83 = vld [vmem:[%s1 + $0x10] sm:$0xf]
  %v84 = vld [vmem:[%s1 + $0x14] sm:$0xf]
  %v85 = vld [vmem:[%s1 + $0x18] sm:$0xf]
  %v86 = vld [vmem:[%s1 + $0x1c] sm:$0xf]
  %v87 = vld [vmem:[%s1 + $0x20] sm:$0xf]
  %v88 = vld [vmem:[%s1 + $0x24] sm:$0xf]
  %v89 = vld [vmem:[%s1 + $0x28] sm:$0xf]
  %v90 = vld [vmem:[%s1 + $0x2c] sm:$0xf]
  %v91 = vld [vmem:[%s1 + $0x30] sm:$0xf]
  %v92 = vld [vmem:[%s1 + $0x34] sm:$0xf]
  %v93 = vld [vmem:[%s1 + $0x38] sm:$0xf]
  %v94 = vld [vmem:[%s1 + $0x3c] sm:$0xf]
  %v95 = vld [vmem:[%s1 + $0x40] sm:$0xf]
  %v96 = vld [vmem:[%s1 + $0x44] sm:$0xf]
  %v97 = vld [vmem:[%s1 + $0x48] sm:$0xf]
  %v98 = vld [vmem:[%s1 + $0x4c] sm:$0xf]
  %v99 = vld [vmem:[%s1 + $0x50] sm:$0xf]
  %v100 = vld [vmem:[%s1 + $0x54] sm:$0xf]
  %v101 = vld [vmem:[%s1 + $0x58] sm:$0xf]
  %v102 = vld [vmem:[%s1 + $0x5c] sm:$0xf]
  %v103 = vld [vmem:[%s1 + $0x60] sm:$0xf]
  %v104 = vld [vmem:[%s1 + $0x64] sm:$0xf]
  %v105 = vld [vmem:[%s1 + $0x68] sm:$0xf]
  %v106 = vld [vmem:[%s1 + $0x6c] sm:$0xf]
  %v107 = vld [vmem:[%s1 + $0x70] sm:$0xf]
  %v108 = vld [vmem:[%s1 + $0x74] sm:$0xf]
  %v109 = vld [vmem:[%s1 + $0x78] sm:$0xf]
  %v110 = vld [vmem:[%s1 + $0x7c] sm:$0xf]
  %v111 = vpack.c.bf16 %v79, %v79
  %v112 = vpack.c.bf16 %v80, %v80
  %v113 = vpack.c.bf16 %v81, %v81
  %v114 = vpack.c.bf16 %v82, %v82
  %v115 = vpack.c.bf16 %v83, %v83
  %v116 = vpack.c.bf16 %v84, %v84
  %v117 = vpack.c.bf16 %v85, %v85
  %v118 = vpack.c.bf16 %v86, %v86
  %v119 = vpack.c.bf16 %v87, %v87
  %v120 = vpack.c.bf16 %v88, %v88
  %v121 = vpack.c.bf16 %v89, %v89
  %v122 = vpack.c.bf16 %v90, %v90
  %v123 = vpack.c.bf16 %v91, %v91
  %v124 = vpack.c.bf16 %v92, %v92
  %v125 = vpack.c.bf16 %v93, %v93
  %v126 = vpack.c.bf16 %v94, %v94
  %v127 = vpack.c.bf16 %v95, %v95
  %v128 = vpack.c.bf16 %v96, %v96
  %v129 = vpack.c.bf16 %v97, %v97
  %v130 = vpack.c.bf16 %v98, %v98
  %v131 = vpack.c.bf16 %v99, %v99
  %v132 = vpack.c.bf16 %v100, %v100
  %v133 = vpack.c.bf16 %v101, %v101
  %v134 = vpack.c.bf16 %v102, %v102
  %v135 = vpack.c.bf16 %v103, %v103
  %v136 = vpack.c.bf16 %v104, %v104
  %v137 = vpack.c.bf16 %v105, %v105
  %v138 = vpack.c.bf16 %v106, %v106
  %v139 = vpack.c.bf16 %v107, %v107
  %v140 = vpack.c.bf16 %v108, %v108
  %v141 = vpack.c.bf16 %v109, %v109
  %v142 = vpack.c.bf16 %v110, %v110
  %vm143 = vcmask 130048
  %v145 = vsel %vm143, %v47, 0
  %v148 = vsel %vm143, %v111, 0
  %150 = vmatpush.bf16.xpose.msra.mxu0 0
  %151 = vmatpush.bf16.xpose.msra.mxu0 0
  %152 = vmatpush.bf16.xpose.msra.mxu0 0
  %153 = vmatpush.bf16.xpose.msra.mxu0 0
  %154 = vmatpush.bf16.xpose.msra.mxu0 0
  %155 = vmatpush.bf16.xpose.msra.mxu0 0
  %156 = vmatpush.bf16.xpose.msra.mxu0 0
  %157 = vmatpush.bf16.xpose.msra.mxu0 %v148
  %158 = vmatmul.bf16.gmra.mxu0 %v145
  %v159 = vpop.f32.mrf.mxu0
  %v160 = vadd.f32 0.0, %v159
  %v161 = vpop.f32.mrf.mxu0
  %162 = vdwg.mxu0
  %v164 = vsel %vm143, %v48, 0
  %v167 = vsel %vm143, %v112, 0
  %169 = vmatpush.bf16.xpose.msra.mxu0 0
  %170 = vmatpush.bf16.xpose.msra.mxu0 0
  %171 = vmatpush.bf16.xpose.msra.mxu0 0
  %172 = vmatpush.bf16.xpose.msra.mxu0 0
  %173 = vmatpush.bf16.xpose.msra.mxu0 0
  %174 = vmatpush.bf16.xpose.msra.mxu0 0
  %175 = vmatpush.bf16.xpose.msra.mxu0 0
  %176 = vmatpush.bf16.xpose.msra.mxu0 %v167
  %177 = vmatmul.bf16.gmra.mxu0 %v164
  %v178 = vpop.f32.mrf.mxu0
  %v179 = vadd.f32 0.0, %v178
  %v180 = vpop.f32.mrf.mxu0
  %181 = vdwg.mxu0
  %v183 = vsel %vm143, %v49, 0
  %v186 = vsel %vm143, %v113, 0
  %188 = vmatpush.bf16.xpose.msra.mxu0 0
  %189 = vmatpush.bf16.xpose.msra.mxu0 0
  %190 = vmatpush.bf16.xpose.msra.mxu0 0
  %191 = vmatpush.bf16.xpose.msra.mxu0 0
  %192 = vmatpush.bf16.xpose.msra.mxu0 0
  %193 = vmatpush.bf16.xpose.msra.mxu0 0
  %194 = vmatpush.bf16.xpose.msra.mxu0 0
  %195 = vmatpush.bf16.xpose.msra.mxu0 %v186
  %196 = vmatmul.bf16.gmra.mxu0 %v183
  %v197 = vpop.f32.mrf.mxu0
  %v198 = vadd.f32 0.0, %v197
  %v199 = vpop.f32.mrf.mxu0
  %200 = vdwg.mxu0
  %v202 = vsel %vm143, %v50, 0
  %v205 = vsel %vm143, %v114, 0
  %207 = vmatpush.bf16.xpose.msra.mxu0 0
  %208 = vmatpush.bf16.xpose.msra.mxu0 0
  %209 = vmatpush.bf16.xpose.msra.mxu0 0
  %210 = vmatpush.bf16.xpose.msra.mxu0 0
  %211 = vmatpush.bf16.xpose.msra.mxu0 0
  %212 = vmatpush.bf16.xpose.msra.mxu0 0
  %213 = vmatpush.bf16.xpose.msra.mxu0 0
  %214 = vmatpush.bf16.xpose.msra.mxu0 %v205
  %215 = vmatmul.bf16.gmra.mxu0 %v202
  %v216 = vpop.f32.mrf.mxu0
  %v217 = vadd.f32 0.0, %v216
  %v218 = vpop.f32.mrf.mxu0
  %219 = vdwg.mxu0
  %v221 = vsel %vm143, %v51, 0
  %v224 = vsel %vm143, %v115, 0
  %226 = vmatpush.bf16.xpose.msra.mxu0 0
  %227 = vmatpush.bf16.xpose.msra.mxu0 0
  %228 = vmatpush.bf16.xpose.msra.mxu0 0
  %229 = vmatpush.bf16.xpose.msra.mxu0 0
  %230 = vmatpush.bf16.xpose.msra.mxu0 0
  %231 = vmatpush.bf16.xpose.msra.mxu0 0
  %232 = vmatpush.bf16.xpose.msra.mxu0 0
  %233 = vmatpush.bf16.xpose.msra.mxu0 %v224
  %234 = vmatmul.bf16.gmra.mxu0 %v221
  %v235 = vpop.f32.mrf.mxu0
  %v236 = vadd.f32 0.0, %v235
  %v237 = vpop.f32.mrf.mxu0
  %238 = vdwg.mxu0
  %v240 = vsel %vm143, %v52, 0
  %v243 = vsel %vm143, %v116, 0
  %245 = vmatpush.bf16.xpose.msra.mxu0 0
  %246 = vmatpush.bf16.xpose.msra.mxu0 0
  %247 = vmatpush.bf16.xpose.msra.mxu0 0
  %248 = vmatpush.bf16.xpose.msra.mxu0 0
  %249 = vmatpush.bf16.xpose.msra.mxu0 0
  %250 = vmatpush.bf16.xpose.msra.mxu0 0
  %251 = vmatpush.bf16.xpose.msra.mxu0 0
  %252 = vmatpush.bf16.xpose.msra.mxu0 %v243
  %253 = vmatmul.bf16.gmra.mxu0 %v240
  %v254 = vpop.f32.mrf.mxu0
  %v255 = vadd.f32 0.0, %v254
  %v256 = vpop.f32.mrf.mxu0
  %257 = vdwg.mxu0
  %v259 = vsel %vm143, %v53, 0
  %v262 = vsel %vm143, %v117, 0
  %264 = vmatpush.bf16.xpose.msra.mxu0 0
  %265 = vmatpush.bf16.xpose.msra.mxu0 0
  %266 = vmatpush.bf16.xpose.msra.mxu0 0
  %267 = vmatpush.bf16.xpose.msra.mxu0 0
  %268 = vmatpush.bf16.xpose.msra.mxu0 0
  %269 = vmatpush.bf16.xpose.msra.mxu0 0
  %270 = vmatpush.bf16.xpose.msra.mxu0 0
  %271 = vmatpush.bf16.xpose.msra.mxu0 %v262
  %272 = vmatmul.bf16.gmra.mxu0 %v259
  %v273 = vpop.f32.mrf.mxu0
  %v274 = vadd.f32 0.0, %v273
  %v275 = vpop.f32.mrf.mxu0
  %276 = vdwg.mxu0
  %v278 = vsel %vm143, %v54, 0
  %v281 = vsel %vm143, %v118, 0
  %283 = vmatpush.bf16.xpose.msra.mxu0 0
  %284 = vmatpush.bf16.xpose.msra.mxu0 0
  %285 = vmatpush.bf16.xpose.msra.mxu0 0
  %286 = vmatpush.bf16.xpose.msra.mxu0 0
  %287 = vmatpush.bf16.xpose.msra.mxu0 0
  %288 = vmatpush.bf16.xpose.msra.mxu0 0
  %289 = vmatpush.bf16.xpose.msra.mxu0 0
  %290 = vmatpush.bf16.xpose.msra.mxu0 %v281
  %291 = vmatmul.bf16.gmra.mxu0 %v278
  %v292 = vpop.f32.mrf.mxu0
  %v293 = vadd.f32 0.0, %v292
  %v294 = vpop.f32.mrf.mxu0
  %295 = vdwg.mxu0
  %v297 = vsel %vm143, %v55, 0
  %v300 = vsel %vm143, %v119, 0
  %302 = vmatpush.bf16.xpose.msra.mxu0 0
  %303 = vmatpush.bf16.xpose.msra.mxu0 0
  %304 = vmatpush.bf16.xpose.msra.mxu0 0
  %305 = vmatpush.bf16.xpose.msra.mxu0 0
  %306 = vmatpush.bf16.xpose.msra.mxu0 0
  %307 = vmatpush.bf16.xpose.msra.mxu0 0
  %308 = vmatpush.bf16.xpose.msra.mxu0 0
  %309 = vmatpush.bf16.xpose.msra.mxu0 %v300
  %310 = vmatmul.bf16.gmra.mxu0 %v297
  %v311 = vpop.f32.mrf.mxu0
  %v312 = vadd.f32 0.0, %v311
  %v313 = vpop.f32.mrf.mxu0
  %314 = vdwg.mxu0
  %v316 = vsel %vm143, %v56, 0
  %v319 = vsel %vm143, %v120, 0
  %321 = vmatpush.bf16.xpose.msra.mxu0 0
  %322 = vmatpush.bf16.xpose.msra.mxu0 0
  %323 = vmatpush.bf16.xpose.msra.mxu0 0
  %324 = vmatpush.bf16.xpose.msra.mxu0 0
  %325 = vmatpush.bf16.xpose.msra.mxu0 0
  %326 = vmatpush.bf16.xpose.msra.mxu0 0
  %327 = vmatpush.bf16.xpose.msra.mxu0 0
  %328 = vmatpush.bf16.xpose.msra.mxu0 %v319
  %329 = vmatmul.bf16.gmra.mxu0 %v316
  %v330 = vpop.f32.mrf.mxu0
  %v331 = vadd.f32 0.0, %v330
  %v332 = vpop.f32.mrf.mxu0
  %333 = vdwg.mxu0
  %v335 = vsel %vm143, %v57, 0
  %v338 = vsel %vm143, %v121, 0
  %340 = vmatpush.bf16.xpose.msra.mxu0 0
  %341 = vmatpush.bf16.xpose.msra.mxu0 0
  %342 = vmatpush.bf16.xpose.msra.mxu0 0
  %343 = vmatpush.bf16.xpose.msra.mxu0 0
  %344 = vmatpush.bf16.xpose.msra.mxu0 0
  %345 = vmatpush.bf16.xpose.msra.mxu0 0
  %346 = vmatpush.bf16.xpose.msra.mxu0 0
  %347 = vmatpush.bf16.xpose.msra.mxu0 %v338
  %348 = vmatmul.bf16.gmra.mxu0 %v335
  %v349 = vpop.f32.mrf.mxu0
  %v350 = vadd.f32 0.0, %v349
  %v351 = vpop.f32.mrf.mxu0
  %352 = vdwg.mxu0
  %v354 = vsel %vm143, %v58, 0
  %v357 = vsel %vm143, %v122, 0
  %359 = vmatpush.bf16.xpose.msra.mxu0 0
  %360 = vmatpush.bf16.xpose.msra.mxu0 0
  %361 = vmatpush.bf16.xpose.msra.mxu0 0
  %362 = vmatpush.bf16.xpose.msra.mxu0 0
  %363 = vmatpush.bf16.xpose.msra.mxu0 0
  %364 = vmatpush.bf16.xpose.msra.mxu0 0
  %365 = vmatpush.bf16.xpose.msra.mxu0 0
  %366 = vmatpush.bf16.xpose.msra.mxu0 %v357
  %367 = vmatmul.bf16.gmra.mxu0 %v354
  %v368 = vpop.f32.mrf.mxu0
  %v369 = vadd.f32 0.0, %v368
  %v370 = vpop.f32.mrf.mxu0
  %371 = vdwg.mxu0
  %v373 = vsel %vm143, %v59, 0
  %v376 = vsel %vm143, %v123, 0
  %378 = vmatpush.bf16.xpose.msra.mxu0 0
  %379 = vmatpush.bf16.xpose.msra.mxu0 0
  %380 = vmatpush.bf16.xpose.msra.mxu0 0
  %381 = vmatpush.bf16.xpose.msra.mxu0 0
  %382 = vmatpush.bf16.xpose.msra.mxu0 0
  %383 = vmatpush.bf16.xpose.msra.mxu0 0
  %384 = vmatpush.bf16.xpose.msra.mxu0 0
  %385 = vmatpush.bf16.xpose.msra.mxu0 %v376
  %386 = vmatmul.bf16.gmra.mxu0 %v373
  %v387 = vpop.f32.mrf.mxu0
  %v388 = vadd.f32 0.0, %v387
  %v389 = vpop.f32.mrf.mxu0
  %390 = vdwg.mxu0
  %v392 = vsel %vm143, %v60, 0
  %v395 = vsel %vm143, %v124, 0
  %397 = vmatpush.bf16.xpose.msra.mxu0 0
  %398 = vmatpush.bf16.xpose.msra.mxu0 0
  %399 = vmatpush.bf16.xpose.msra.mxu0 0
  %400 = vmatpush.bf16.xpose.msra.mxu0 0
  %401 = vmatpush.bf16.xpose.msra.mxu0 0
  %402 = vmatpush.bf16.xpose.msra.mxu0 0
  %403 = vmatpush.bf16.xpose.msra.mxu0 0
  %404 = vmatpush.bf16.xpose.msra.mxu0 %v395
  %405 = vmatmul.bf16.gmra.mxu0 %v392
  %v406 = vpop.f32.mrf.mxu0
  %v407 = vadd.f32 0.0, %v406
  %v408 = vpop.f32.mrf.mxu0
  %409 = vdwg.mxu0
  %v411 = vsel %vm143, %v61, 0
  %v414 = vsel %vm143, %v125, 0
  %416 = vmatpush.bf16.xpose.msra.mxu0 0
  %417 = vmatpush.bf16.xpose.msra.mxu0 0
  %418 = vmatpush.bf16.xpose.msra.mxu0 0
  %419 = vmatpush.bf16.xpose.msra.mxu0 0
  %420 = vmatpush.bf16.xpose.msra.mxu0 0
  %421 = vmatpush.bf16.xpose.msra.mxu0 0
  %422 = vmatpush.bf16.xpose.msra.mxu0 0
  %423 = vmatpush.bf16.xpose.msra.mxu0 %v414
  %424 = vmatmul.bf16.gmra.mxu0 %v411
  %v425 = vpop.f32.mrf.mxu0
  %v426 = vadd.f32 0.0, %v425
  %v427 = vpop.f32.mrf.mxu0
  %428 = vdwg.mxu0
  %v430 = vsel %vm143, %v62, 0
  %v433 = vsel %vm143, %v126, 0
  %435 = vmatpush.bf16.xpose.msra.mxu0 0
  %436 = vmatpush.bf16.xpose.msra.mxu0 0
  %437 = vmatpush.bf16.xpose.msra.mxu0 0
  %438 = vmatpush.bf16.xpose.msra.mxu0 0
  %439 = vmatpush.bf16.xpose.msra.mxu0 0
  %440 = vmatpush.bf16.xpose.msra.mxu0 0
  %441 = vmatpush.bf16.xpose.msra.mxu0 0
  %442 = vmatpush.bf16.xpose.msra.mxu0 %v433
  %443 = vmatmul.bf16.gmra.mxu0 %v430
  %v444 = vpop.f32.mrf.mxu0
  %v445 = vadd.f32 0.0, %v444
  %v446 = vpop.f32.mrf.mxu0
  %447 = vdwg.mxu0
  %v449 = vsel %vm143, %v63, 0
  %v452 = vsel %vm143, %v127, 0
  %454 = vmatpush.bf16.xpose.msra.mxu0 0
  %455 = vmatpush.bf16.xpose.msra.mxu0 0
  %456 = vmatpush.bf16.xpose.msra.mxu0 0
  %457 = vmatpush.bf16.xpose.msra.mxu0 0
  %458 = vmatpush.bf16.xpose.msra.mxu0 0
  %459 = vmatpush.bf16.xpose.msra.mxu0 0
  %460 = vmatpush.bf16.xpose.msra.mxu0 0
  %461 = vmatpush.bf16.xpose.msra.mxu0 %v452
  %462 = vmatmul.bf16.gmra.mxu0 %v449
  %v463 = vpop.f32.mrf.mxu0
  %v464 = vadd.f32 0.0, %v463
  %v465 = vpop.f32.mrf.mxu0
  %466 = vdwg.mxu0
  %v468 = vsel %vm143, %v64, 0
  %v471 = vsel %vm143, %v128, 0
  %473 = vmatpush.bf16.xpose.msra.mxu0 0
  %474 = vmatpush.bf16.xpose.msra.mxu0 0
  %475 = vmatpush.bf16.xpose.msra.mxu0 0
  %476 = vmatpush.bf16.xpose.msra.mxu0 0
  %477 = vmatpush.bf16.xpose.msra.mxu0 0
  %478 = vmatpush.bf16.xpose.msra.mxu0 0
  %479 = vmatpush.bf16.xpose.msra.mxu0 0
  %480 = vmatpush.bf16.xpose.msra.mxu0 %v471
  %481 = vmatmul.bf16.gmra.mxu0 %v468
  %v482 = vpop.f32.mrf.mxu0
  %v483 = vadd.f32 0.0, %v482
  %v484 = vpop.f32.mrf.mxu0
  %485 = vdwg.mxu0
  %v487 = vsel %vm143, %v65, 0
  %v490 = vsel %vm143, %v129, 0
  %492 = vmatpush.bf16.xpose.msra.mxu0 0
  %493 = vmatpush.bf16.xpose.msra.mxu0 0
  %494 = vmatpush.bf16.xpose.msra.mxu0 0
  %495 = vmatpush.bf16.xpose.msra.mxu0 0
  %496 = vmatpush.bf16.xpose.msra.mxu0 0
  %497 = vmatpush.bf16.xpose.msra.mxu0 0
  %498 = vmatpush.bf16.xpose.msra.mxu0 0
  %499 = vmatpush.bf16.xpose.msra.mxu0 %v490
  %500 = vmatmul.bf16.gmra.mxu0 %v487
  %v501 = vpop.f32.mrf.mxu0
  %v502 = vadd.f32 0.0, %v501
  %v503 = vpop.f32.mrf.mxu0
  %504 = vdwg.mxu0
  %v506 = vsel %vm143, %v66, 0
  %v509 = vsel %vm143, %v130, 0
  %511 = vmatpush.bf16.xpose.msra.mxu0 0
  %512 = vmatpush.bf16.xpose.msra.mxu0 0
  %513 = vmatpush.bf16.xpose.msra.mxu0 0
  %514 = vmatpush.bf16.xpose.msra.mxu0 0
  %515 = vmatpush.bf16.xpose.msra.mxu0 0
  %516 = vmatpush.bf16.xpose.msra.mxu0 0
  %517 = vmatpush.bf16.xpose.msra.mxu0 0
  %518 = vmatpush.bf16.xpose.msra.mxu0 %v509
  %519 = vmatmul.bf16.gmra.mxu0 %v506
  %v520 = vpop.f32.mrf.mxu0
  %v521 = vadd.f32 0.0, %v520
  %v522 = vpop.f32.mrf.mxu0
  %523 = vdwg.mxu0
  %v525 = vsel %vm143, %v67, 0
  %v528 = vsel %vm143, %v131, 0
  %530 = vmatpush.bf16.xpose.msra.mxu0 0
  %531 = vmatpush.bf16.xpose.msra.mxu0 0
  %532 = vmatpush.bf16.xpose.msra.mxu0 0
  %533 = vmatpush.bf16.xpose.msra.mxu0 0
  %534 = vmatpush.bf16.xpose.msra.mxu0 0
  %535 = vmatpush.bf16.xpose.msra.mxu0 0
  %536 = vmatpush.bf16.xpose.msra.mxu0 0
  %537 = vmatpush.bf16.xpose.msra.mxu0 %v528
  %538 = vmatmul.bf16.gmra.mxu0 %v525
  %v539 = vpop.f32.mrf.mxu0
  %v540 = vadd.f32 0.0, %v539
  %v541 = vpop.f32.mrf.mxu0
  %542 = vdwg.mxu0
  %v544 = vsel %vm143, %v68, 0
  %v547 = vsel %vm143, %v132, 0
  %549 = vmatpush.bf16.xpose.msra.mxu0 0
  %550 = vmatpush.bf16.xpose.msra.mxu0 0
  %551 = vmatpush.bf16.xpose.msra.mxu0 0
  %552 = vmatpush.bf16.xpose.msra.mxu0 0
  %553 = vmatpush.bf16.xpose.msra.mxu0 0
  %554 = vmatpush.bf16.xpose.msra.mxu0 0
  %555 = vmatpush.bf16.xpose.msra.mxu0 0
  %556 = vmatpush.bf16.xpose.msra.mxu0 %v547
  %557 = vmatmul.bf16.gmra.mxu0 %v544
  %v558 = vpop.f32.mrf.mxu0
  %v559 = vadd.f32 0.0, %v558
  %v560 = vpop.f32.mrf.mxu0
  %561 = vdwg.mxu0
  %v563 = vsel %vm143, %v69, 0
  %v566 = vsel %vm143, %v133, 0
  %568 = vmatpush.bf16.xpose.msra.mxu0 0
  %569 = vmatpush.bf16.xpose.msra.mxu0 0
  %570 = vmatpush.bf16.xpose.msra.mxu0 0
  %571 = vmatpush.bf16.xpose.msra.mxu0 0
  %572 = vmatpush.bf16.xpose.msra.mxu0 0
  %573 = vmatpush.bf16.xpose.msra.mxu0 0
  %574 = vmatpush.bf16.xpose.msra.mxu0 0
  %575 = vmatpush.bf16.xpose.msra.mxu0 %v566
  %576 = vmatmul.bf16.gmra.mxu0 %v563
  %v577 = vpop.f32.mrf.mxu0
  %v578 = vadd.f32 0.0, %v577
  %v579 = vpop.f32.mrf.mxu0
  %580 = vdwg.mxu0
  %v582 = vsel %vm143, %v70, 0
  %v585 = vsel %vm143, %v134, 0
  %587 = vmatpush.bf16.xpose.msra.mxu0 0
  %588 = vmatpush.bf16.xpose.msra.mxu0 0
  %589 = vmatpush.bf16.xpose.msra.mxu0 0
  %590 = vmatpush.bf16.xpose.msra.mxu0 0
  %591 = vmatpush.bf16.xpose.msra.mxu0 0
  %592 = vmatpush.bf16.xpose.msra.mxu0 0
  %593 = vmatpush.bf16.xpose.msra.mxu0 0
  %594 = vmatpush.bf16.xpose.msra.mxu0 %v585
  %595 = vmatmul.bf16.gmra.mxu0 %v582
  %v596 = vpop.f32.mrf.mxu0
  %v597 = vadd.f32 0.0, %v596
  %v598 = vpop.f32.mrf.mxu0
  %599 = vdwg.mxu0
  %v601 = vsel %vm143, %v71, 0
  %v604 = vsel %vm143, %v135, 0
  %606 = vmatpush.bf16.xpose.msra.mxu0 0
  %607 = vmatpush.bf16.xpose.msra.mxu0 0
  %608 = vmatpush.bf16.xpose.msra.mxu0 0
  %609 = vmatpush.bf16.xpose.msra.mxu0 0
  %610 = vmatpush.bf16.xpose.msra.mxu0 0
  %611 = vmatpush.bf16.xpose.msra.mxu0 0
  %612 = vmatpush.bf16.xpose.msra.mxu0 0
  %613 = vmatpush.bf16.xpose.msra.mxu0 %v604
  %614 = vmatmul.bf16.gmra.mxu0 %v601
  %v615 = vpop.f32.mrf.mxu0
  %v616 = vadd.f32 0.0, %v615
  %v617 = vpop.f32.mrf.mxu0
  %618 = vdwg.mxu0
  %v620 = vsel %vm143, %v72, 0
  %v623 = vsel %vm143, %v136, 0
  %625 = vmatpush.bf16.xpose.msra.mxu0 0
  %626 = vmatpush.bf16.xpose.msra.mxu0 0
  %627 = vmatpush.bf16.xpose.msra.mxu0 0
  %628 = vmatpush.bf16.xpose.msra.mxu0 0
  %629 = vmatpush.bf16.xpose.msra.mxu0 0
  %630 = vmatpush.bf16.xpose.msra.mxu0 0
  %631 = vmatpush.bf16.xpose.msra.mxu0 0
  %632 = vmatpush.bf16.xpose.msra.mxu0 %v623
  %633 = vmatmul.bf16.gmra.mxu0 %v620
  %v634 = vpop.f32.mrf.mxu0
  %v635 = vadd.f32 0.0, %v634
  %v636 = vpop.f32.mrf.mxu0
  %637 = vdwg.mxu0
  %v639 = vsel %vm143, %v73, 0
  %v642 = vsel %vm143, %v137, 0
  %644 = vmatpush.bf16.xpose.msra.mxu0 0
  %645 = vmatpush.bf16.xpose.msra.mxu0 0
  %646 = vmatpush.bf16.xpose.msra.mxu0 0
  %647 = vmatpush.bf16.xpose.msra.mxu0 0
  %648 = vmatpush.bf16.xpose.msra.mxu0 0
  %649 = vmatpush.bf16.xpose.msra.mxu0 0
  %650 = vmatpush.bf16.xpose.msra.mxu0 0
  %651 = vmatpush.bf16.xpose.msra.mxu0 %v642
  %652 = vmatmul.bf16.gmra.mxu0 %v639
  %v653 = vpop.f32.mrf.mxu0
  %v654 = vadd.f32 0.0, %v653
  %v655 = vpop.f32.mrf.mxu0
  %656 = vdwg.mxu0
  %v658 = vsel %vm143, %v74, 0
  %v661 = vsel %vm143, %v138, 0
  %663 = vmatpush.bf16.xpose.msra.mxu0 0
  %664 = vmatpush.bf16.xpose.msra.mxu0 0
  %665 = vmatpush.bf16.xpose.msra.mxu0 0
  %666 = vmatpush.bf16.xpose.msra.mxu0 0
  %667 = vmatpush.bf16.xpose.msra.mxu0 0
  %668 = vmatpush.bf16.xpose.msra.mxu0 0
  %669 = vmatpush.bf16.xpose.msra.mxu0 0
  %670 = vmatpush.bf16.xpose.msra.mxu0 %v661
  %671 = vmatmul.bf16.gmra.mxu0 %v658
  %v672 = vpop.f32.mrf.mxu0
  %v673 = vadd.f32 0.0, %v672
  %v674 = vpop.f32.mrf.mxu0
  %675 = vdwg.mxu0
  %v677 = vsel %vm143, %v75, 0
  %v680 = vsel %vm143, %v139, 0
  %682 = vmatpush.bf16.xpose.msra.mxu0 0
  %683 = vmatpush.bf16.xpose.msra.mxu0 0
  %684 = vmatpush.bf16.xpose.msra.mxu0 0
  %685 = vmatpush.bf16.xpose.msra.mxu0 0
  %686 = vmatpush.bf16.xpose.msra.mxu0 0
  %687 = vmatpush.bf16.xpose.msra.mxu0 0
  %688 = vmatpush.bf16.xpose.msra.mxu0 0
  %689 = vmatpush.bf16.xpose.msra.mxu0 %v680
  %690 = vmatmul.bf16.gmra.mxu0 %v677
  %v691 = vpop.f32.mrf.mxu0
  %v692 = vadd.f32 0.0, %v691
  %v693 = vpop.f32.mrf.mxu0
  %694 = vdwg.mxu0
  %v696 = vsel %vm143, %v76, 0
  %v699 = vsel %vm143, %v140, 0
  %701 = vmatpush.bf16.xpose.msra.mxu0 0
  %702 = vmatpush.bf16.xpose.msra.mxu0 0
  %703 = vmatpush.bf16.xpose.msra.mxu0 0
  %704 = vmatpush.bf16.xpose.msra.mxu0 0
  %705 = vmatpush.bf16.xpose.msra.mxu0 0
  %706 = vmatpush.bf16.xpose.msra.mxu0 0
  %707 = vmatpush.bf16.xpose.msra.mxu0 0
  %708 = vmatpush.bf16.xpose.msra.mxu0 %v699
  %709 = vmatmul.bf16.gmra.mxu0 %v696
  %v710 = vpop.f32.mrf.mxu0
  %v711 = vadd.f32 0.0, %v710
  %v712 = vpop.f32.mrf.mxu0
  %713 = vdwg.mxu0
  %v715 = vsel %vm143, %v77, 0
  %v718 = vsel %vm143, %v141, 0
  %720 = vmatpush.bf16.xpose.msra.mxu0 0
  %721 = vmatpush.bf16.xpose.msra.mxu0 0
  %722 = vmatpush.bf16.xpose.msra.mxu0 0
  %723 = vmatpush.bf16.xpose.msra.mxu0 0
  %724 = vmatpush.bf16.xpose.msra.mxu0 0
  %725 = vmatpush.bf16.xpose.msra.mxu0 0
  %726 = vmatpush.bf16.xpose.msra.mxu0 0
  %727 = vmatpush.bf16.xpose.msra.mxu0 %v718
  %728 = vmatmul.bf16.gmra.mxu0 %v715
  %v729 = vpop.f32.mrf.mxu0
  %v730 = vadd.f32 0.0, %v729
  %v731 = vpop.f32.mrf.mxu0
  %732 = vdwg.mxu0
  %v734 = vsel %vm143, %v78, 0
  %v737 = vsel %vm143, %v142, 0
  %739 = vmatpush.bf16.xpose.msra.mxu0 0
  %740 = vmatpush.bf16.xpose.msra.mxu0 0
  %741 = vmatpush.bf16.xpose.msra.mxu0 0
  %742 = vmatpush.bf16.xpose.msra.mxu0 0
  %743 = vmatpush.bf16.xpose.msra.mxu0 0
  %744 = vmatpush.bf16.xpose.msra.mxu0 0
  %745 = vmatpush.bf16.xpose.msra.mxu0 0
  %746 = vmatpush.bf16.xpose.msra.mxu0 %v737
  %747 = vmatmul.bf16.gmra.mxu0 %v734
  %v748 = vpop.f32.mrf.mxu0
  %v749 = vadd.f32 0.0, %v748
  %v750 = vpop.f32.mrf.mxu0
  %751 = vdwg.mxu0
  %v752 = vmul.f32 %v160, 0.25
  %v753 = vmul.f32 %v179, 0.25
  %v754 = vmul.f32 %v198, 0.25
  %v755 = vmul.f32 %v217, 0.25
  %v756 = vmul.f32 %v236, 0.25
  %v757 = vmul.f32 %v255, 0.25
  %v758 = vmul.f32 %v274, 0.25
  %v759 = vmul.f32 %v293, 0.25
  %v760 = vmul.f32 %v312, 0.25
  %v761 = vmul.f32 %v331, 0.25
  %v762 = vmul.f32 %v350, 0.25
  %v763 = vmul.f32 %v369, 0.25
  %v764 = vmul.f32 %v388, 0.25
  %v765 = vmul.f32 %v407, 0.25
  %v766 = vmul.f32 %v426, 0.25
  %v767 = vmul.f32 %v445, 0.25
  %v768 = vmul.f32 %v464, 0.25
  %v769 = vmul.f32 %v483, 0.25
  %v770 = vmul.f32 %v502, 0.25
  %v771 = vmul.f32 %v521, 0.25
  %v772 = vmul.f32 %v540, 0.25
  %v773 = vmul.f32 %v559, 0.25
  %v774 = vmul.f32 %v578, 0.25
  %v775 = vmul.f32 %v597, 0.25
  %v776 = vmul.f32 %v616, 0.25
  %v777 = vmul.f32 %v635, 0.25
  %v778 = vmul.f32 %v654, 0.25
  %v779 = vmul.f32 %v673, 0.25
  %v780 = vmul.f32 %v692, 0.25
  %v781 = vmul.f32 %v711, 0.25
  %v782 = vmul.f32 %v730, 0.25
  %v783 = vmul.f32 %v749, 0.25
  %vm784 = vcmask 27648
  %v785 = vsel %vm784, %v752, -inf
  %786 = vmax.xlane.f32.xlu0 %v785
  %v787 = vpop.xlane.xlu0 %786
  %v788 = vsel %vm784, %v753, -inf
  %789 = vmax.xlane.f32.xlu0 %v788
  %v790 = vpop.xlane.xlu0 %789
  %v791 = vsel %vm784, %v754, -inf
  %792 = vmax.xlane.f32.xlu0 %v791
  %v793 = vpop.xlane.xlu0 %792
  %v794 = vsel %vm784, %v755, -inf
  %795 = vmax.xlane.f32.xlu0 %v794
  %v796 = vpop.xlane.xlu0 %795
  %v797 = vsel %vm784, %v756, -inf
  %798 = vmax.xlane.f32.xlu0 %v797
  %v799 = vpop.xlane.xlu0 %798
  %v800 = vsel %vm784, %v757, -inf
  %801 = vmax.xlane.f32.xlu0 %v800
  %v802 = vpop.xlane.xlu0 %801
  %v803 = vsel %vm784, %v758, -inf
  %804 = vmax.xlane.f32.xlu0 %v803
  %v805 = vpop.xlane.xlu0 %804
  %v806 = vsel %vm784, %v759, -inf
  %807 = vmax.xlane.f32.xlu0 %v806
  %v808 = vpop.xlane.xlu0 %807
  %v809 = vsel %vm784, %v760, -inf
  %810 = vmax.xlane.f32.xlu0 %v809
  %v811 = vpop.xlane.xlu0 %810
  %v812 = vsel %vm784, %v761, -inf
  %813 = vmax.xlane.f32.xlu0 %v812
  %v814 = vpop.xlane.xlu0 %813
  %v815 = vsel %vm784, %v762, -inf
  %816 = vmax.xlane.f32.xlu0 %v815
  %v817 = vpop.xlane.xlu0 %816
  %v818 = vsel %vm784, %v763, -inf
  %819 = vmax.xlane.f32.xlu0 %v818
  %v820 = vpop.xlane.xlu0 %819
  %v821 = vsel %vm784, %v764, -inf
  %822 = vmax.xlane.f32.xlu0 %v821
  %v823 = vpop.xlane.xlu0 %822
  %v824 = vsel %vm784, %v765, -inf
  %825 = vmax.xlane.f32.xlu0 %v824
  %v826 = vpop.xlane.xlu0 %825
  %v827 = vsel %vm784, %v766, -inf
  %828 = vmax.xlane.f32.xlu0 %v827
  %v829 = vpop.xlane.xlu0 %828
  %v830 = vsel %vm784, %v767, -inf
  %831 = vmax.xlane.f32.xlu0 %v830
  %v832 = vpop.xlane.xlu0 %831
  %v833 = vsel %vm784, %v768, -inf
  %834 = vmax.xlane.f32.xlu0 %v833
  %v835 = vpop.xlane.xlu0 %834
  %v836 = vsel %vm784, %v769, -inf
  %837 = vmax.xlane.f32.xlu0 %v836
  %v838 = vpop.xlane.xlu0 %837
  %v839 = vsel %vm784, %v770, -inf
  %840 = vmax.xlane.f32.xlu0 %v839
  %v841 = vpop.xlane.xlu0 %840
  %v842 = vsel %vm784, %v771, -inf
  %843 = vmax.xlane.f32.xlu0 %v842
  %v844 = vpop.xlane.xlu0 %843
  %v845 = vsel %vm784, %v772, -inf
  %846 = vmax.xlane.f32.xlu0 %v845
  %v847 = vpop.xlane.xlu0 %846
  %v848 = vsel %vm784, %v773, -inf
  %849 = vmax.xlane.f32.xlu0 %v848
  %v850 = vpop.xlane.xlu0 %849
  %v851 = vsel %vm784, %v774, -inf
  %852 = vmax.xlane.f32.xlu0 %v851
  %v853 = vpop.xlane.xlu0 %852
  %v854 = vsel %vm784, %v775, -inf
  %855 = vmax.xlane.f32.xlu0 %v854
  %v856 = vpop.xlane.xlu0 %855
  %v857 = vsel %vm784, %v776, -inf
  %858 = vmax.xlane.f32.xlu0 %v857
  %v859 = vpop.xlane.xlu0 %858
  %v860 = vsel %vm784, %v777, -inf
  %861 = vmax.xlane.f32.xlu0 %v860
  %v862 = vpop.xlane.xlu0 %861
  %v863 = vsel %vm784, %v778, -inf
  %864 = vmax.xlane.f32.xlu0 %v863
  %v865 = vpop.xlane.xlu0 %864
  %v866 = vsel %vm784, %v779, -inf
  %867 = vmax.xlane.f32.xlu0 %v866
  %v868 = vpop.xlane.xlu0 %867
  %v869 = vsel %vm784, %v780, -inf
  %870 = vmax.xlane.f32.xlu0 %v869
  %v871 = vpop.xlane.xlu0 %870
  %v872 = vsel %vm784, %v781, -inf
  %873 = vmax.xlane.f32.xlu0 %v872
  %v874 = vpop.xlane.xlu0 %873
  %v875 = vsel %vm784, %v782, -inf
  %876 = vmax.xlane.f32.xlu0 %v875
  %v877 = vpop.xlane.xlu0 %876
  %v878 = vsel %vm784, %v783, -inf
  %879 = vmax.xlane.f32.xlu0 %v878
  %v880 = vpop.xlane.xlu0 %879
  %v881 = vsub.f32 %v752, %v787
  %v882 = vsub.f32 %v753, %v790
  %v883 = vsub.f32 %v754, %v793
  %v884 = vsub.f32 %v755, %v796
  %v885 = vsub.f32 %v756, %v799
  %v886 = vsub.f32 %v757, %v802
  %v887 = vsub.f32 %v758, %v805
  %v888 = vsub.f32 %v759, %v808
  %v889 = vsub.f32 %v760, %v811
  %v890 = vsub.f32 %v761, %v814
  %v891 = vsub.f32 %v762, %v817
  %v892 = vsub.f32 %v763, %v820
  %v893 = vsub.f32 %v764, %v823
  %v894 = vsub.f32 %v765, %v826
  %v895 = vsub.f32 %v766, %v829
  %v896 = vsub.f32 %v767, %v832
  %v897 = vsub.f32 %v768, %v835
  %v898 = vsub.f32 %v769, %v838
  %v899 = vsub.f32 %v770, %v841
  %v900 = vsub.f32 %v771, %v844
  %v901 = vsub.f32 %v772, %v847
  %v902 = vsub.f32 %v773, %v850
  %v903 = vsub.f32 %v774, %v853
  %v904 = vsub.f32 %v775, %v856
  %v905 = vsub.f32 %v776, %v859
  %v906 = vsub.f32 %v777, %v862
  %v907 = vsub.f32 %v778, %v865
  %v908 = vsub.f32 %v779, %v868
  %v909 = vsub.f32 %v780, %v871
  %v910 = vsub.f32 %v781, %v874
  %v911 = vsub.f32 %v782, %v877
  %v912 = vsub.f32 %v783, %v880
  %v913 = vmul.f32 %v881, 1.442695
  %v914 = vpow.pop %v913
  %v915 = vmul.f32 %v882, 1.442695
  %v916 = vpow.pop %v915
  %v917 = vmul.f32 %v883, 1.442695
  %v918 = vpow.pop %v917
  %v919 = vmul.f32 %v884, 1.442695
  %v920 = vpow.pop %v919
  %v921 = vmul.f32 %v885, 1.442695
  %v922 = vpow.pop %v921
  %v923 = vmul.f32 %v886, 1.442695
  %v924 = vpow.pop %v923
  %v925 = vmul.f32 %v887, 1.442695
  %v926 = vpow.pop %v925
  %v927 = vmul.f32 %v888, 1.442695
  %v928 = vpow.pop %v927
  %v929 = vmul.f32 %v889, 1.442695
  %v930 = vpow.pop %v929
  %v931 = vmul.f32 %v890, 1.442695
  %v932 = vpow.pop %v931
  %v933 = vmul.f32 %v891, 1.442695
  %v934 = vpow.pop %v933
  %v935 = vmul.f32 %v892, 1.442695
  %v936 = vpow.pop %v935
  %v937 = vmul.f32 %v893, 1.442695
  %v938 = vpow.pop %v937
  %v939 = vmul.f32 %v894, 1.442695
  %v940 = vpow.pop %v939
  %v941 = vmul.f32 %v895, 1.442695
  %v942 = vpow.pop %v941
  %v943 = vmul.f32 %v896, 1.442695
  %v944 = vpow.pop %v943
  %v945 = vmul.f32 %v897, 1.442695
  %v946 = vpow.pop %v945
  %v947 = vmul.f32 %v898, 1.442695
  %v948 = vpow.pop %v947
  %v949 = vmul.f32 %v899, 1.442695
  %v950 = vpow.pop %v949
  %v951 = vmul.f32 %v900, 1.442695
  %v952 = vpow.pop %v951
  %v953 = vmul.f32 %v901, 1.442695
  %v954 = vpow.pop %v953
  %v955 = vmul.f32 %v902, 1.442695
  %v956 = vpow.pop %v955
  %v957 = vmul.f32 %v903, 1.442695
  %v958 = vpow.pop %v957
  %v959 = vmul.f32 %v904, 1.442695
  %v960 = vpow.pop %v959
  %v961 = vmul.f32 %v905, 1.442695
  %v962 = vpow.pop %v961
  %v963 = vmul.f32 %v906, 1.442695
  %v964 = vpow.pop %v963
  %v965 = vmul.f32 %v907, 1.442695
  %v966 = vpow.pop %v965
  %v967 = vmul.f32 %v908, 1.442695
  %v968 = vpow.pop %v967
  %v969 = vmul.f32 %v909, 1.442695
  %v970 = vpow.pop %v969
  %v971 = vmul.f32 %v910, 1.442695
  %v972 = vpow.pop %v971
  %v973 = vmul.f32 %v911, 1.442695
  %v974 = vpow.pop %v973
  %v975 = vmul.f32 %v912, 1.442695
  %v976 = vpow.pop %v975
  %v977 = vsel %vm784, %v914, 0.0
  %978 = vadd.xlane.f32.xlu0 %v977
  %v979 = vpop.xlane.xlu0 %978
  %v980 = vsel %vm784, %v916, 0.0
  %981 = vadd.xlane.f32.xlu0 %v980
  %v982 = vpop.xlane.xlu0 %981
  %v983 = vsel %vm784, %v918, 0.0
  %984 = vadd.xlane.f32.xlu0 %v983
  %v985 = vpop.xlane.xlu0 %984
  %v986 = vsel %vm784, %v920, 0.0
  %987 = vadd.xlane.f32.xlu0 %v986
  %v988 = vpop.xlane.xlu0 %987
  %v989 = vsel %vm784, %v922, 0.0
  %990 = vadd.xlane.f32.xlu0 %v989
  %v991 = vpop.xlane.xlu0 %990
  %v992 = vsel %vm784, %v924, 0.0
  %993 = vadd.xlane.f32.xlu0 %v992
  %v994 = vpop.xlane.xlu0 %993
  %v995 = vsel %vm784, %v926, 0.0
  %996 = vadd.xlane.f32.xlu0 %v995
  %v997 = vpop.xlane.xlu0 %996
  %v998 = vsel %vm784, %v928, 0.0
  %999 = vadd.xlane.f32.xlu0 %v998
  %v1000 = vpop.xlane.xlu0 %999
  %v1001 = vsel %vm784, %v930, 0.0
  %1002 = vadd.xlane.f32.xlu0 %v1001
  %v1003 = vpop.xlane.xlu0 %1002
  %v1004 = vsel %vm784, %v932, 0.0
  %1005 = vadd.xlane.f32.xlu0 %v1004
  %v1006 = vpop.xlane.xlu0 %1005
  %v1007 = vsel %vm784, %v934, 0.0
  %1008 = vadd.xlane.f32.xlu0 %v1007
  %v1009 = vpop.xlane.xlu0 %1008
  %v1010 = vsel %vm784, %v936, 0.0
  %1011 = vadd.xlane.f32.xlu0 %v1010
  %v1012 = vpop.xlane.xlu0 %1011
  %v1013 = vsel %vm784, %v938, 0.0
  %1014 = vadd.xlane.f32.xlu0 %v1013
  %v1015 = vpop.xlane.xlu0 %1014
  %v1016 = vsel %vm784, %v940, 0.0
  %1017 = vadd.xlane.f32.xlu0 %v1016
  %v1018 = vpop.xlane.xlu0 %1017
  %v1019 = vsel %vm784, %v942, 0.0
  %1020 = vadd.xlane.f32.xlu0 %v1019
  %v1021 = vpop.xlane.xlu0 %1020
  %v1022 = vsel %vm784, %v944, 0.0
  %1023 = vadd.xlane.f32.xlu0 %v1022
  %v1024 = vpop.xlane.xlu0 %1023
  %v1025 = vsel %vm784, %v946, 0.0
  %1026 = vadd.xlane.f32.xlu0 %v1025
  %v1027 = vpop.xlane.xlu0 %1026
  %v1028 = vsel %vm784, %v948, 0.0
  %1029 = vadd.xlane.f32.xlu0 %v1028
  %v1030 = vpop.xlane.xlu0 %1029
  %v1031 = vsel %vm784, %v950, 0.0
  %1032 = vadd.xlane.f32.xlu0 %v1031
  %v1033 = vpop.xlane.xlu0 %1032
  %v1034 = vsel %vm784, %v952, 0.0
  %1035 = vadd.xlane.f32.xlu0 %v1034
  %v1036 = vpop.xlane.xlu0 %1035
  %v1037 = vsel %vm784, %v954, 0.0
  %1038 = vadd.xlane.f32.xlu0 %v1037
  %v1039 = vpop.xlane.xlu0 %1038
  %v1040 = vsel %vm784, %v956, 0.0
  %1041 = vadd.xlane.f32.xlu0 %v1040
  %v1042 = vpop.xlane.xlu0 %1041
  %v1043 = vsel %vm784, %v958, 0.0
  %1044 = vadd.xlane.f32.xlu0 %v1043
  %v1045 = vpop.xlane.xlu0 %1044
  %v1046 = vsel %vm784, %v960, 0.0
  %1047 = vadd.xlane.f32.xlu0 %v1046
  %v1048 = vpop.xlane.xlu0 %1047
  %v1049 = vsel %vm784, %v962, 0.0
  %1050 = vadd.xlane.f32.xlu0 %v1049
  %v1051 = vpop.xlane.xlu0 %1050
  %v1052 = vsel %vm784, %v964, 0.0
  %1053 = vadd.xlane.f32.xlu0 %v1052
  %v1054 = vpop.xlane.xlu0 %1053
  %v1055 = vsel %vm784, %v966, 0.0
  %1056 = vadd.xlane.f32.xlu0 %v1055
  %v1057 = vpop.xlane.xlu0 %1056
  %v1058 = vsel %vm784, %v968, 0.0
  %1059 = vadd.xlane.f32.xlu0 %v1058
  %v1060 = vpop.xlane.xlu0 %1059
  %v1061 = vsel %vm784, %v970, 0.0
  %1062 = vadd.xlane.f32.xlu0 %v1061
  %v1063 = vpop.xlane.xlu0 %1062
  %v1064 = vsel %vm784, %v972, 0.0
  %1065 = vadd.xlane.f32.xlu0 %v1064
  %v1066 = vpop.xlane.xlu0 %1065
  %v1067 = vsel %vm784, %v974, 0.0
  %1068 = vadd.xlane.f32.xlu0 %v1067
  %v1069 = vpop.xlane.xlu0 %1068
  %v1070 = vsel %vm784, %v976, 0.0
  %1071 = vadd.xlane.f32.xlu0 %v1070
  %v1072 = vpop.xlane.xlu0 %1071
  %v1073 = vrcp.pop %v979
  %v1074 = vrcp.pop %v982
  %v1075 = vrcp.pop %v985
  %v1076 = vrcp.pop %v988
  %v1077 = vrcp.pop %v991
  %v1078 = vrcp.pop %v994
  %v1079 = vrcp.pop %v997
  %v1080 = vrcp.pop %v1000
  %v1081 = vrcp.pop %v1003
  %v1082 = vrcp.pop %v1006
  %v1083 = vrcp.pop %v1009
  %v1084 = vrcp.pop %v1012
  %v1085 = vrcp.pop %v1015
  %v1086 = vrcp.pop %v1018
  %v1087 = vrcp.pop %v1021
  %v1088 = vrcp.pop %v1024
  %v1089 = vrcp.pop %v1027
  %v1090 = vrcp.pop %v1030
  %v1091 = vrcp.pop %v1033
  %v1092 = vrcp.pop %v1036
  %v1093 = vrcp.pop %v1039
  %v1094 = vrcp.pop %v1042
  %v1095 = vrcp.pop %v1045
  %v1096 = vrcp.pop %v1048
  %v1097 = vrcp.pop %v1051
  %v1098 = vrcp.pop %v1054
  %v1099 = vrcp.pop %v1057
  %v1100 = vrcp.pop %v1060
  %v1101 = vrcp.pop %v1063
  %v1102 = vrcp.pop %v1066
  %v1103 = vrcp.pop %v1069
  %v1104 = vrcp.pop %v1072
  %v1105 = vmul.f32 %v914, %v1073
  %v1106 = vmul.f32 %v916, %v1074
  %v1107 = vmul.f32 %v918, %v1075
  %v1108 = vmul.f32 %v920, %v1076
  %v1109 = vmul.f32 %v922, %v1077
  %v1110 = vmul.f32 %v924, %v1078
  %v1111 = vmul.f32 %v926, %v1079
  %v1112 = vmul.f32 %v928, %v1080
  %v1113 = vmul.f32 %v930, %v1081
  %v1114 = vmul.f32 %v932, %v1082
  %v1115 = vmul.f32 %v934, %v1083
  %v1116 = vmul.f32 %v936, %v1084
  %v1117 = vmul.f32 %v938, %v1085
  %v1118 = vmul.f32 %v940, %v1086
  %v1119 = vmul.f32 %v942, %v1087
  %v1120 = vmul.f32 %v944, %v1088
  %v1121 = vmul.f32 %v946, %v1089
  %v1122 = vmul.f32 %v948, %v1090
  %v1123 = vmul.f32 %v950, %v1091
  %v1124 = vmul.f32 %v952, %v1092
  %v1125 = vmul.f32 %v954, %v1093
  %v1126 = vmul.f32 %v956, %v1094
  %v1127 = vmul.f32 %v958, %v1095
  %v1128 = vmul.f32 %v960, %v1096
  %v1129 = vmul.f32 %v962, %v1097
  %v1130 = vmul.f32 %v964, %v1098
  %v1131 = vmul.f32 %v966, %v1099
  %v1132 = vmul.f32 %v968, %v1100
  %v1133 = vmul.f32 %v970, %v1101
  %v1134 = vmul.f32 %v972, %v1102
  %v1135 = vmul.f32 %v974, %v1103
  %v1136 = vmul.f32 %v976, %v1104
  %v1137 = vpack.c.bf16 %v1105, %v1105
  %v1138 = vpack.c.bf16 %v1106, %v1106
  %v1139 = vpack.c.bf16 %v1107, %v1107
  %v1140 = vpack.c.bf16 %v1108, %v1108
  %v1141 = vpack.c.bf16 %v1109, %v1109
  %v1142 = vpack.c.bf16 %v1110, %v1110
  %v1143 = vpack.c.bf16 %v1111, %v1111
  %v1144 = vpack.c.bf16 %v1112, %v1112
  %v1145 = vpack.c.bf16 %v1113, %v1113
  %v1146 = vpack.c.bf16 %v1114, %v1114
  %v1147 = vpack.c.bf16 %v1115, %v1115
  %v1148 = vpack.c.bf16 %v1116, %v1116
  %v1149 = vpack.c.bf16 %v1117, %v1117
  %v1150 = vpack.c.bf16 %v1118, %v1118
  %v1151 = vpack.c.bf16 %v1119, %v1119
  %v1152 = vpack.c.bf16 %v1120, %v1120
  %v1153 = vpack.c.bf16 %v1121, %v1121
  %v1154 = vpack.c.bf16 %v1122, %v1122
  %v1155 = vpack.c.bf16 %v1123, %v1123
  %v1156 = vpack.c.bf16 %v1124, %v1124
  %v1157 = vpack.c.bf16 %v1125, %v1125
  %v1158 = vpack.c.bf16 %v1126, %v1126
  %v1159 = vpack.c.bf16 %v1127, %v1127
  %v1160 = vpack.c.bf16 %v1128, %v1128
  %v1161 = vpack.c.bf16 %v1129, %v1129
  %v1162 = vpack.c.bf16 %v1130, %v1130
  %v1163 = vpack.c.bf16 %v1131, %v1131
  %v1164 = vpack.c.bf16 %v1132, %v1132
  %v1165 = vpack.c.bf16 %v1133, %v1133
  %v1166 = vpack.c.bf16 %v1134, %v1134
  %v1167 = vpack.c.bf16 %v1135, %v1135
  %v1168 = vpack.c.bf16 %v1136, %v1136
  %v1169 = vld [vmem:[%s2] sm:$0xf]
  %v1170 = vld [vmem:[%s2 + $0x4] sm:$0xf]
  %v1171 = vld [vmem:[%s2 + $0x8] sm:$0xf]
  %v1172 = vld [vmem:[%s2 + $0xc] sm:$0xf]
  %v1173 = vld [vmem:[%s2 + $0x10] sm:$0xf]
  %v1174 = vld [vmem:[%s2 + $0x14] sm:$0xf]
  %v1175 = vld [vmem:[%s2 + $0x18] sm:$0xf]
  %v1176 = vld [vmem:[%s2 + $0x1c] sm:$0xf]
  %v1177 = vld [vmem:[%s2 + $0x20] sm:$0xf]
  %v1178 = vld [vmem:[%s2 + $0x24] sm:$0xf]
  %v1179 = vld [vmem:[%s2 + $0x28] sm:$0xf]
  %v1180 = vld [vmem:[%s2 + $0x2c] sm:$0xf]
  %v1181 = vld [vmem:[%s2 + $0x30] sm:$0xf]
  %v1182 = vld [vmem:[%s2 + $0x34] sm:$0xf]
  %v1183 = vld [vmem:[%s2 + $0x38] sm:$0xf]
  %v1184 = vld [vmem:[%s2 + $0x3c] sm:$0xf]
  %v1185 = vld [vmem:[%s2 + $0x40] sm:$0xf]
  %v1186 = vld [vmem:[%s2 + $0x44] sm:$0xf]
  %v1187 = vld [vmem:[%s2 + $0x48] sm:$0xf]
  %v1188 = vld [vmem:[%s2 + $0x4c] sm:$0xf]
  %v1189 = vld [vmem:[%s2 + $0x50] sm:$0xf]
  %v1190 = vld [vmem:[%s2 + $0x54] sm:$0xf]
  %v1191 = vld [vmem:[%s2 + $0x58] sm:$0xf]
  %v1192 = vld [vmem:[%s2 + $0x5c] sm:$0xf]
  %v1193 = vld [vmem:[%s2 + $0x60] sm:$0xf]
  %v1194 = vld [vmem:[%s2 + $0x64] sm:$0xf]
  %v1195 = vld [vmem:[%s2 + $0x68] sm:$0xf]
  %v1196 = vld [vmem:[%s2 + $0x6c] sm:$0xf]
  %v1197 = vld [vmem:[%s2 + $0x70] sm:$0xf]
  %v1198 = vld [vmem:[%s2 + $0x74] sm:$0xf]
  %v1199 = vld [vmem:[%s2 + $0x78] sm:$0xf]
  %v1200 = vld [vmem:[%s2 + $0x7c] sm:$0xf]
  %v1201 = vpack.c.bf16 %v1169, %v1169
  %v1202 = vpack.c.bf16 %v1170, %v1170
  %v1203 = vpack.c.bf16 %v1171, %v1171
  %v1204 = vpack.c.bf16 %v1172, %v1172
  %v1205 = vpack.c.bf16 %v1173, %v1173
  %v1206 = vpack.c.bf16 %v1174, %v1174
  %v1207 = vpack.c.bf16 %v1175, %v1175
  %v1208 = vpack.c.bf16 %v1176, %v1176
  %v1209 = vpack.c.bf16 %v1177, %v1177
  %v1210 = vpack.c.bf16 %v1178, %v1178
  %v1211 = vpack.c.bf16 %v1179, %v1179
  %v1212 = vpack.c.bf16 %v1180, %v1180
  %v1213 = vpack.c.bf16 %v1181, %v1181
  %v1214 = vpack.c.bf16 %v1182, %v1182
  %v1215 = vpack.c.bf16 %v1183, %v1183
  %v1216 = vpack.c.bf16 %v1184, %v1184
  %v1217 = vpack.c.bf16 %v1185, %v1185
  %v1218 = vpack.c.bf16 %v1186, %v1186
  %v1219 = vpack.c.bf16 %v1187, %v1187
  %v1220 = vpack.c.bf16 %v1188, %v1188
  %v1221 = vpack.c.bf16 %v1189, %v1189
  %v1222 = vpack.c.bf16 %v1190, %v1190
  %v1223 = vpack.c.bf16 %v1191, %v1191
  %v1224 = vpack.c.bf16 %v1192, %v1192
  %v1225 = vpack.c.bf16 %v1193, %v1193
  %v1226 = vpack.c.bf16 %v1194, %v1194
  %v1227 = vpack.c.bf16 %v1195, %v1195
  %v1228 = vpack.c.bf16 %v1196, %v1196
  %v1229 = vpack.c.bf16 %v1197, %v1197
  %v1230 = vpack.c.bf16 %v1198, %v1198
  %v1231 = vpack.c.bf16 %v1199, %v1199
  %v1232 = vpack.c.bf16 %v1200, %v1200
  %vm1233 = vcmask 31744
  %v1235 = vsel %vm1233, %v1137, 0
  %vm1237 = vcmask 1041408
  %v1239 = vsel %vm1237, %v1201, 0
  %1241 = vmatpush.bf16.msra.mxu0 0
  %1242 = vmatpush.bf16.msra.mxu0 0
  %1243 = vmatpush.bf16.msra.mxu0 0
  %1244 = vmatpush.bf16.msra.mxu0 0
  %1245 = vmatpush.bf16.msra.mxu0 0
  %1246 = vmatpush.bf16.msra.mxu0 0
  %1247 = vmatpush.bf16.msra.mxu0 0
  %1248 = vmatpush.bf16.msra.mxu0 %v1239
  %1249 = vmatmul.bf16.gmra.mxu0 %v1235
  %v1250 = vpop.f32.mrf.mxu0
  %v1251 = vadd.f32 0.0, %v1250
  %v1252 = vpop.f32.mrf.mxu0
  %1253 = vdwg.mxu0
  %v1255 = vsel %vm1233, %v1138, 0
  %v1258 = vsel %vm1237, %v1202, 0
  %1260 = vmatpush.bf16.msra.mxu0 0
  %1261 = vmatpush.bf16.msra.mxu0 0
  %1262 = vmatpush.bf16.msra.mxu0 0
  %1263 = vmatpush.bf16.msra.mxu0 0
  %1264 = vmatpush.bf16.msra.mxu0 0
  %1265 = vmatpush.bf16.msra.mxu0 0
  %1266 = vmatpush.bf16.msra.mxu0 0
  %1267 = vmatpush.bf16.msra.mxu0 %v1258
  %1268 = vmatmul.bf16.gmra.mxu0 %v1255
  %v1269 = vpop.f32.mrf.mxu0
  %v1270 = vadd.f32 0.0, %v1269
  %v1271 = vpop.f32.mrf.mxu0
  %1272 = vdwg.mxu0
  %v1274 = vsel %vm1233, %v1139, 0
  %v1277 = vsel %vm1237, %v1203, 0
  %1279 = vmatpush.bf16.msra.mxu0 0
  %1280 = vmatpush.bf16.msra.mxu0 0
  %1281 = vmatpush.bf16.msra.mxu0 0
  %1282 = vmatpush.bf16.msra.mxu0 0
  %1283 = vmatpush.bf16.msra.mxu0 0
  %1284 = vmatpush.bf16.msra.mxu0 0
  %1285 = vmatpush.bf16.msra.mxu0 0
  %1286 = vmatpush.bf16.msra.mxu0 %v1277
  %1287 = vmatmul.bf16.gmra.mxu0 %v1274
  %v1288 = vpop.f32.mrf.mxu0
  %v1289 = vadd.f32 0.0, %v1288
  %v1290 = vpop.f32.mrf.mxu0
  %1291 = vdwg.mxu0
  %v1293 = vsel %vm1233, %v1140, 0
  %v1296 = vsel %vm1237, %v1204, 0
  %1298 = vmatpush.bf16.msra.mxu0 0
  %1299 = vmatpush.bf16.msra.mxu0 0
  %1300 = vmatpush.bf16.msra.mxu0 0
  %1301 = vmatpush.bf16.msra.mxu0 0
  %1302 = vmatpush.bf16.msra.mxu0 0
  %1303 = vmatpush.bf16.msra.mxu0 0
  %1304 = vmatpush.bf16.msra.mxu0 0
  %1305 = vmatpush.bf16.msra.mxu0 %v1296
  %1306 = vmatmul.bf16.gmra.mxu0 %v1293
  %v1307 = vpop.f32.mrf.mxu0
  %v1308 = vadd.f32 0.0, %v1307
  %v1309 = vpop.f32.mrf.mxu0
  %1310 = vdwg.mxu0
  %v1312 = vsel %vm1233, %v1141, 0
  %v1315 = vsel %vm1237, %v1205, 0
  %1317 = vmatpush.bf16.msra.mxu0 0
  %1318 = vmatpush.bf16.msra.mxu0 0
  %1319 = vmatpush.bf16.msra.mxu0 0
  %1320 = vmatpush.bf16.msra.mxu0 0
  %1321 = vmatpush.bf16.msra.mxu0 0
  %1322 = vmatpush.bf16.msra.mxu0 0
  %1323 = vmatpush.bf16.msra.mxu0 0
  %1324 = vmatpush.bf16.msra.mxu0 %v1315
  %1325 = vmatmul.bf16.gmra.mxu0 %v1312
  %v1326 = vpop.f32.mrf.mxu0
  %v1327 = vadd.f32 0.0, %v1326
  %v1328 = vpop.f32.mrf.mxu0
  %1329 = vdwg.mxu0
  %v1331 = vsel %vm1233, %v1142, 0
  %v1334 = vsel %vm1237, %v1206, 0
  %1336 = vmatpush.bf16.msra.mxu0 0
  %1337 = vmatpush.bf16.msra.mxu0 0
  %1338 = vmatpush.bf16.msra.mxu0 0
  %1339 = vmatpush.bf16.msra.mxu0 0
  %1340 = vmatpush.bf16.msra.mxu0 0
  %1341 = vmatpush.bf16.msra.mxu0 0
  %1342 = vmatpush.bf16.msra.mxu0 0
  %1343 = vmatpush.bf16.msra.mxu0 %v1334
  %1344 = vmatmul.bf16.gmra.mxu0 %v1331
  %v1345 = vpop.f32.mrf.mxu0
  %v1346 = vadd.f32 0.0, %v1345
  %v1347 = vpop.f32.mrf.mxu0
  %1348 = vdwg.mxu0
  %v1350 = vsel %vm1233, %v1143, 0
  %v1353 = vsel %vm1237, %v1207, 0
  %1355 = vmatpush.bf16.msra.mxu0 0
  %1356 = vmatpush.bf16.msra.mxu0 0
  %1357 = vmatpush.bf16.msra.mxu0 0
  %1358 = vmatpush.bf16.msra.mxu0 0
  %1359 = vmatpush.bf16.msra.mxu0 0
  %1360 = vmatpush.bf16.msra.mxu0 0
  %1361 = vmatpush.bf16.msra.mxu0 0
  %1362 = vmatpush.bf16.msra.mxu0 %v1353
  %1363 = vmatmul.bf16.gmra.mxu0 %v1350
  %v1364 = vpop.f32.mrf.mxu0
  %v1365 = vadd.f32 0.0, %v1364
  %v1366 = vpop.f32.mrf.mxu0
  %1367 = vdwg.mxu0
  %v1369 = vsel %vm1233, %v1144, 0
  %v1372 = vsel %vm1237, %v1208, 0
  %1374 = vmatpush.bf16.msra.mxu0 0
  %1375 = vmatpush.bf16.msra.mxu0 0
  %1376 = vmatpush.bf16.msra.mxu0 0
  %1377 = vmatpush.bf16.msra.mxu0 0
  %1378 = vmatpush.bf16.msra.mxu0 0
  %1379 = vmatpush.bf16.msra.mxu0 0
  %1380 = vmatpush.bf16.msra.mxu0 0
  %1381 = vmatpush.bf16.msra.mxu0 %v1372
  %1382 = vmatmul.bf16.gmra.mxu0 %v1369
  %v1383 = vpop.f32.mrf.mxu0
  %v1384 = vadd.f32 0.0, %v1383
  %v1385 = vpop.f32.mrf.mxu0
  %1386 = vdwg.mxu0
  %v1388 = vsel %vm1233, %v1145, 0
  %v1391 = vsel %vm1237, %v1209, 0
  %1393 = vmatpush.bf16.msra.mxu0 0
  %1394 = vmatpush.bf16.msra.mxu0 0
  %1395 = vmatpush.bf16.msra.mxu0 0
  %1396 = vmatpush.bf16.msra.mxu0 0
  %1397 = vmatpush.bf16.msra.mxu0 0
  %1398 = vmatpush.bf16.msra.mxu0 0
  %1399 = vmatpush.bf16.msra.mxu0 0
  %1400 = vmatpush.bf16.msra.mxu0 %v1391
  %1401 = vmatmul.bf16.gmra.mxu0 %v1388
  %v1402 = vpop.f32.mrf.mxu0
  %v1403 = vadd.f32 0.0, %v1402
  %v1404 = vpop.f32.mrf.mxu0
  %1405 = vdwg.mxu0
  %v1407 = vsel %vm1233, %v1146, 0
  %v1410 = vsel %vm1237, %v1210, 0
  %1412 = vmatpush.bf16.msra.mxu0 0
  %1413 = vmatpush.bf16.msra.mxu0 0
  %1414 = vmatpush.bf16.msra.mxu0 0
  %1415 = vmatpush.bf16.msra.mxu0 0
  %1416 = vmatpush.bf16.msra.mxu0 0
  %1417 = vmatpush.bf16.msra.mxu0 0
  %1418 = vmatpush.bf16.msra.mxu0 0
  %1419 = vmatpush.bf16.msra.mxu0 %v1410
  %1420 = vmatmul.bf16.gmra.mxu0 %v1407
  %v1421 = vpop.f32.mrf.mxu0
  %v1422 = vadd.f32 0.0, %v1421
  %v1423 = vpop.f32.mrf.mxu0
  %1424 = vdwg.mxu0
  %v1426 = vsel %vm1233, %v1147, 0
  %v1429 = vsel %vm1237, %v1211, 0
  %1431 = vmatpush.bf16.msra.mxu0 0
  %1432 = vmatpush.bf16.msra.mxu0 0
  %1433 = vmatpush.bf16.msra.mxu0 0
  %1434 = vmatpush.bf16.msra.mxu0 0
  %1435 = vmatpush.bf16.msra.mxu0 0
  %1436 = vmatpush.bf16.msra.mxu0 0
  %1437 = vmatpush.bf16.msra.mxu0 0
  %1438 = vmatpush.bf16.msra.mxu0 %v1429
  %1439 = vmatmul.bf16.gmra.mxu0 %v1426
  %v1440 = vpop.f32.mrf.mxu0
  %v1441 = vadd.f32 0.0, %v1440
  %v1442 = vpop.f32.mrf.mxu0
  %1443 = vdwg.mxu0
  %v1445 = vsel %vm1233, %v1148, 0
  %v1448 = vsel %vm1237, %v1212, 0
  %1450 = vmatpush.bf16.msra.mxu0 0
  %1451 = vmatpush.bf16.msra.mxu0 0
  %1452 = vmatpush.bf16.msra.mxu0 0
  %1453 = vmatpush.bf16.msra.mxu0 0
  %1454 = vmatpush.bf16.msra.mxu0 0
  %1455 = vmatpush.bf16.msra.mxu0 0
  %1456 = vmatpush.bf16.msra.mxu0 0
  %1457 = vmatpush.bf16.msra.mxu0 %v1448
  %1458 = vmatmul.bf16.gmra.mxu0 %v1445
  %v1459 = vpop.f32.mrf.mxu0
  %v1460 = vadd.f32 0.0, %v1459
  %v1461 = vpop.f32.mrf.mxu0
  %1462 = vdwg.mxu0
  %v1464 = vsel %vm1233, %v1149, 0
  %v1467 = vsel %vm1237, %v1213, 0
  %1469 = vmatpush.bf16.msra.mxu0 0
  %1470 = vmatpush.bf16.msra.mxu0 0
  %1471 = vmatpush.bf16.msra.mxu0 0
  %1472 = vmatpush.bf16.msra.mxu0 0
  %1473 = vmatpush.bf16.msra.mxu0 0
  %1474 = vmatpush.bf16.msra.mxu0 0
  %1475 = vmatpush.bf16.msra.mxu0 0
  %1476 = vmatpush.bf16.msra.mxu0 %v1467
  %1477 = vmatmul.bf16.gmra.mxu0 %v1464
  %v1478 = vpop.f32.mrf.mxu0
  %v1479 = vadd.f32 0.0, %v1478
  %v1480 = vpop.f32.mrf.mxu0
  %1481 = vdwg.mxu0
  %v1483 = vsel %vm1233, %v1150, 0
  %v1486 = vsel %vm1237, %v1214, 0
  %1488 = vmatpush.bf16.msra.mxu0 0
  %1489 = vmatpush.bf16.msra.mxu0 0
  %1490 = vmatpush.bf16.msra.mxu0 0
  %1491 = vmatpush.bf16.msra.mxu0 0
  %1492 = vmatpush.bf16.msra.mxu0 0
  %1493 = vmatpush.bf16.msra.mxu0 0
  %1494 = vmatpush.bf16.msra.mxu0 0
  %1495 = vmatpush.bf16.msra.mxu0 %v1486
  %1496 = vmatmul.bf16.gmra.mxu0 %v1483
  %v1497 = vpop.f32.mrf.mxu0
  %v1498 = vadd.f32 0.0, %v1497
  %v1499 = vpop.f32.mrf.mxu0
  %1500 = vdwg.mxu0
  %v1502 = vsel %vm1233, %v1151, 0
  %v1505 = vsel %vm1237, %v1215, 0
  %1507 = vmatpush.bf16.msra.mxu0 0
  %1508 = vmatpush.bf16.msra.mxu0 0
  %1509 = vmatpush.bf16.msra.mxu0 0
  %1510 = vmatpush.bf16.msra.mxu0 0
  %1511 = vmatpush.bf16.msra.mxu0 0
  %1512 = vmatpush.bf16.msra.mxu0 0
  %1513 = vmatpush.bf16.msra.mxu0 0
  %1514 = vmatpush.bf16.msra.mxu0 %v1505
  %1515 = vmatmul.bf16.gmra.mxu0 %v1502
  %v1516 = vpop.f32.mrf.mxu0
  %v1517 = vadd.f32 0.0, %v1516
  %v1518 = vpop.f32.mrf.mxu0
  %1519 = vdwg.mxu0
  %v1521 = vsel %vm1233, %v1152, 0
  %v1524 = vsel %vm1237, %v1216, 0
  %1526 = vmatpush.bf16.msra.mxu0 0
  %1527 = vmatpush.bf16.msra.mxu0 0
  %1528 = vmatpush.bf16.msra.mxu0 0
  %1529 = vmatpush.bf16.msra.mxu0 0
  %1530 = vmatpush.bf16.msra.mxu0 0
  %1531 = vmatpush.bf16.msra.mxu0 0
  %1532 = vmatpush.bf16.msra.mxu0 0
  %1533 = vmatpush.bf16.msra.mxu0 %v1524
  %1534 = vmatmul.bf16.gmra.mxu0 %v1521
  %v1535 = vpop.f32.mrf.mxu0
  %v1536 = vadd.f32 0.0, %v1535
  %v1537 = vpop.f32.mrf.mxu0
  %1538 = vdwg.mxu0
  %v1540 = vsel %vm1233, %v1153, 0
  %v1543 = vsel %vm1237, %v1217, 0
  %1545 = vmatpush.bf16.msra.mxu0 0
  %1546 = vmatpush.bf16.msra.mxu0 0
  %1547 = vmatpush.bf16.msra.mxu0 0
  %1548 = vmatpush.bf16.msra.mxu0 0
  %1549 = vmatpush.bf16.msra.mxu0 0
  %1550 = vmatpush.bf16.msra.mxu0 0
  %1551 = vmatpush.bf16.msra.mxu0 0
  %1552 = vmatpush.bf16.msra.mxu0 %v1543
  %1553 = vmatmul.bf16.gmra.mxu0 %v1540
  %v1554 = vpop.f32.mrf.mxu0
  %v1555 = vadd.f32 0.0, %v1554
  %v1556 = vpop.f32.mrf.mxu0
  %1557 = vdwg.mxu0
  %v1559 = vsel %vm1233, %v1154, 0
  %v1562 = vsel %vm1237, %v1218, 0
  %1564 = vmatpush.bf16.msra.mxu0 0
  %1565 = vmatpush.bf16.msra.mxu0 0
  %1566 = vmatpush.bf16.msra.mxu0 0
  %1567 = vmatpush.bf16.msra.mxu0 0
  %1568 = vmatpush.bf16.msra.mxu0 0
  %1569 = vmatpush.bf16.msra.mxu0 0
  %1570 = vmatpush.bf16.msra.mxu0 0
  %1571 = vmatpush.bf16.msra.mxu0 %v1562
  %1572 = vmatmul.bf16.gmra.mxu0 %v1559
  %v1573 = vpop.f32.mrf.mxu0
  %v1574 = vadd.f32 0.0, %v1573
  %v1575 = vpop.f32.mrf.mxu0
  %1576 = vdwg.mxu0
  %v1578 = vsel %vm1233, %v1155, 0
  %v1581 = vsel %vm1237, %v1219, 0
  %1583 = vmatpush.bf16.msra.mxu0 0
  %1584 = vmatpush.bf16.msra.mxu0 0
  %1585 = vmatpush.bf16.msra.mxu0 0
  %1586 = vmatpush.bf16.msra.mxu0 0
  %1587 = vmatpush.bf16.msra.mxu0 0
  %1588 = vmatpush.bf16.msra.mxu0 0
  %1589 = vmatpush.bf16.msra.mxu0 0
  %1590 = vmatpush.bf16.msra.mxu0 %v1581
  %1591 = vmatmul.bf16.gmra.mxu0 %v1578
  %v1592 = vpop.f32.mrf.mxu0
  %v1593 = vadd.f32 0.0, %v1592
  %v1594 = vpop.f32.mrf.mxu0
  %1595 = vdwg.mxu0
  %v1597 = vsel %vm1233, %v1156, 0
  %v1600 = vsel %vm1237, %v1220, 0
  %1602 = vmatpush.bf16.msra.mxu0 0
  %1603 = vmatpush.bf16.msra.mxu0 0
  %1604 = vmatpush.bf16.msra.mxu0 0
  %1605 = vmatpush.bf16.msra.mxu0 0
  %1606 = vmatpush.bf16.msra.mxu0 0
  %1607 = vmatpush.bf16.msra.mxu0 0
  %1608 = vmatpush.bf16.msra.mxu0 0
  %1609 = vmatpush.bf16.msra.mxu0 %v1600
  %1610 = vmatmul.bf16.gmra.mxu0 %v1597
  %v1611 = vpop.f32.mrf.mxu0
  %v1612 = vadd.f32 0.0, %v1611
  %v1613 = vpop.f32.mrf.mxu0
  %1614 = vdwg.mxu0
  %v1616 = vsel %vm1233, %v1157, 0
  %v1619 = vsel %vm1237, %v1221, 0
  %1621 = vmatpush.bf16.msra.mxu0 0
  %1622 = vmatpush.bf16.msra.mxu0 0
  %1623 = vmatpush.bf16.msra.mxu0 0
  %1624 = vmatpush.bf16.msra.mxu0 0
  %1625 = vmatpush.bf16.msra.mxu0 0
  %1626 = vmatpush.bf16.msra.mxu0 0
  %1627 = vmatpush.bf16.msra.mxu0 0
  %1628 = vmatpush.bf16.msra.mxu0 %v1619
  %1629 = vmatmul.bf16.gmra.mxu0 %v1616
  %v1630 = vpop.f32.mrf.mxu0
  %v1631 = vadd.f32 0.0, %v1630
  %v1632 = vpop.f32.mrf.mxu0
  %1633 = vdwg.mxu0
  %v1635 = vsel %vm1233, %v1158, 0
  %v1638 = vsel %vm1237, %v1222, 0
  %1640 = vmatpush.bf16.msra.mxu0 0
  %1641 = vmatpush.bf16.msra.mxu0 0
  %1642 = vmatpush.bf16.msra.mxu0 0
  %1643 = vmatpush.bf16.msra.mxu0 0
  %1644 = vmatpush.bf16.msra.mxu0 0
  %1645 = vmatpush.bf16.msra.mxu0 0
  %1646 = vmatpush.bf16.msra.mxu0 0
  %1647 = vmatpush.bf16.msra.mxu0 %v1638
  %1648 = vmatmul.bf16.gmra.mxu0 %v1635
  %v1649 = vpop.f32.mrf.mxu0
  %v1650 = vadd.f32 0.0, %v1649
  %v1651 = vpop.f32.mrf.mxu0
  %1652 = vdwg.mxu0
  %v1654 = vsel %vm1233, %v1159, 0
  %v1657 = vsel %vm1237, %v1223, 0
  %1659 = vmatpush.bf16.msra.mxu0 0
  %1660 = vmatpush.bf16.msra.mxu0 0
  %1661 = vmatpush.bf16.msra.mxu0 0
  %1662 = vmatpush.bf16.msra.mxu0 0
  %1663 = vmatpush.bf16.msra.mxu0 0
  %1664 = vmatpush.bf16.msra.mxu0 0
  %1665 = vmatpush.bf16.msra.mxu0 0
  %1666 = vmatpush.bf16.msra.mxu0 %v1657
  %1667 = vmatmul.bf16.gmra.mxu0 %v1654
  %v1668 = vpop.f32.mrf.mxu0
  %v1669 = vadd.f32 0.0, %v1668
  %v1670 = vpop.f32.mrf.mxu0
  %1671 = vdwg.mxu0
  %v1673 = vsel %vm1233, %v1160, 0
  %v1676 = vsel %vm1237, %v1224, 0
  %1678 = vmatpush.bf16.msra.mxu0 0
  %1679 = vmatpush.bf16.msra.mxu0 0
  %1680 = vmatpush.bf16.msra.mxu0 0
  %1681 = vmatpush.bf16.msra.mxu0 0
  %1682 = vmatpush.bf16.msra.mxu0 0
  %1683 = vmatpush.bf16.msra.mxu0 0
  %1684 = vmatpush.bf16.msra.mxu0 0
  %1685 = vmatpush.bf16.msra.mxu0 %v1676
  %1686 = vmatmul.bf16.gmra.mxu0 %v1673
  %v1687 = vpop.f32.mrf.mxu0
  %v1688 = vadd.f32 0.0, %v1687
  %v1689 = vpop.f32.mrf.mxu0
  %1690 = vdwg.mxu0
  %v1692 = vsel %vm1233, %v1161, 0
  %v1695 = vsel %vm1237, %v1225, 0
  %1697 = vmatpush.bf16.msra.mxu0 0
  %1698 = vmatpush.bf16.msra.mxu0 0
  %1699 = vmatpush.bf16.msra.mxu0 0
  %1700 = vmatpush.bf16.msra.mxu0 0
  %1701 = vmatpush.bf16.msra.mxu0 0
  %1702 = vmatpush.bf16.msra.mxu0 0
  %1703 = vmatpush.bf16.msra.mxu0 0
  %1704 = vmatpush.bf16.msra.mxu0 %v1695
  %1705 = vmatmul.bf16.gmra.mxu0 %v1692
  %v1706 = vpop.f32.mrf.mxu0
  %v1707 = vadd.f32 0.0, %v1706
  %v1708 = vpop.f32.mrf.mxu0
  %1709 = vdwg.mxu0
  %v1711 = vsel %vm1233, %v1162, 0
  %v1714 = vsel %vm1237, %v1226, 0
  %1716 = vmatpush.bf16.msra.mxu0 0
  %1717 = vmatpush.bf16.msra.mxu0 0
  %1718 = vmatpush.bf16.msra.mxu0 0
  %1719 = vmatpush.bf16.msra.mxu0 0
  %1720 = vmatpush.bf16.msra.mxu0 0
  %1721 = vmatpush.bf16.msra.mxu0 0
  %1722 = vmatpush.bf16.msra.mxu0 0
  %1723 = vmatpush.bf16.msra.mxu0 %v1714
  %1724 = vmatmul.bf16.gmra.mxu0 %v1711
  %v1725 = vpop.f32.mrf.mxu0
  %v1726 = vadd.f32 0.0, %v1725
  %v1727 = vpop.f32.mrf.mxu0
  %1728 = vdwg.mxu0
  %v1730 = vsel %vm1233, %v1163, 0
  %v1733 = vsel %vm1237, %v1227, 0
  %1735 = vmatpush.bf16.msra.mxu0 0
  %1736 = vmatpush.bf16.msra.mxu0 0
  %1737 = vmatpush.bf16.msra.mxu0 0
  %1738 = vmatpush.bf16.msra.mxu0 0
  %1739 = vmatpush.bf16.msra.mxu0 0
  %1740 = vmatpush.bf16.msra.mxu0 0
  %1741 = vmatpush.bf16.msra.mxu0 0
  %1742 = vmatpush.bf16.msra.mxu0 %v1733
  %1743 = vmatmul.bf16.gmra.mxu0 %v1730
  %v1744 = vpop.f32.mrf.mxu0
  %v1745 = vadd.f32 0.0, %v1744
  %v1746 = vpop.f32.mrf.mxu0
  %1747 = vdwg.mxu0
  %v1749 = vsel %vm1233, %v1164, 0
  %v1752 = vsel %vm1237, %v1228, 0
  %1754 = vmatpush.bf16.msra.mxu0 0
  %1755 = vmatpush.bf16.msra.mxu0 0
  %1756 = vmatpush.bf16.msra.mxu0 0
  %1757 = vmatpush.bf16.msra.mxu0 0
  %1758 = vmatpush.bf16.msra.mxu0 0
  %1759 = vmatpush.bf16.msra.mxu0 0
  %1760 = vmatpush.bf16.msra.mxu0 0
  %1761 = vmatpush.bf16.msra.mxu0 %v1752
  %1762 = vmatmul.bf16.gmra.mxu0 %v1749
  %v1763 = vpop.f32.mrf.mxu0
  %v1764 = vadd.f32 0.0, %v1763
  %v1765 = vpop.f32.mrf.mxu0
  %1766 = vdwg.mxu0
  %v1768 = vsel %vm1233, %v1165, 0
  %v1771 = vsel %vm1237, %v1229, 0
  %1773 = vmatpush.bf16.msra.mxu0 0
  %1774 = vmatpush.bf16.msra.mxu0 0
  %1775 = vmatpush.bf16.msra.mxu0 0
  %1776 = vmatpush.bf16.msra.mxu0 0
  %1777 = vmatpush.bf16.msra.mxu0 0
  %1778 = vmatpush.bf16.msra.mxu0 0
  %1779 = vmatpush.bf16.msra.mxu0 0
  %1780 = vmatpush.bf16.msra.mxu0 %v1771
  %1781 = vmatmul.bf16.gmra.mxu0 %v1768
  %v1782 = vpop.f32.mrf.mxu0
  %v1783 = vadd.f32 0.0, %v1782
  %v1784 = vpop.f32.mrf.mxu0
  %1785 = vdwg.mxu0
  %v1787 = vsel %vm1233, %v1166, 0
  %v1790 = vsel %vm1237, %v1230, 0
  %1792 = vmatpush.bf16.msra.mxu0 0
  %1793 = vmatpush.bf16.msra.mxu0 0
  %1794 = vmatpush.bf16.msra.mxu0 0
  %1795 = vmatpush.bf16.msra.mxu0 0
  %1796 = vmatpush.bf16.msra.mxu0 0
  %1797 = vmatpush.bf16.msra.mxu0 0
  %1798 = vmatpush.bf16.msra.mxu0 0
  %1799 = vmatpush.bf16.msra.mxu0 %v1790
  %1800 = vmatmul.bf16.gmra.mxu0 %v1787
  %v1801 = vpop.f32.mrf.mxu0
  %v1802 = vadd.f32 0.0, %v1801
  %v1803 = vpop.f32.mrf.mxu0
  %1804 = vdwg.mxu0
  %v1806 = vsel %vm1233, %v1167, 0
  %v1809 = vsel %vm1237, %v1231, 0
  %1811 = vmatpush.bf16.msra.mxu0 0
  %1812 = vmatpush.bf16.msra.mxu0 0
  %1813 = vmatpush.bf16.msra.mxu0 0
  %1814 = vmatpush.bf16.msra.mxu0 0
  %1815 = vmatpush.bf16.msra.mxu0 0
  %1816 = vmatpush.bf16.msra.mxu0 0
  %1817 = vmatpush.bf16.msra.mxu0 0
  %1818 = vmatpush.bf16.msra.mxu0 %v1809
  %1819 = vmatmul.bf16.gmra.mxu0 %v1806
  %v1820 = vpop.f32.mrf.mxu0
  %v1821 = vadd.f32 0.0, %v1820
  %v1822 = vpop.f32.mrf.mxu0
  %1823 = vdwg.mxu0
  %v1825 = vsel %vm1233, %v1168, 0
  %v1828 = vsel %vm1237, %v1232, 0
  %1830 = vmatpush.bf16.msra.mxu0 0
  %1831 = vmatpush.bf16.msra.mxu0 0
  %1832 = vmatpush.bf16.msra.mxu0 0
  %1833 = vmatpush.bf16.msra.mxu0 0
  %1834 = vmatpush.bf16.msra.mxu0 0
  %1835 = vmatpush.bf16.msra.mxu0 0
  %1836 = vmatpush.bf16.msra.mxu0 0
  %1837 = vmatpush.bf16.msra.mxu0 %v1828
  %1838 = vmatmul.bf16.gmra.mxu0 %v1825
  %v1839 = vpop.f32.mrf.mxu0
  %v1840 = vadd.f32 0.0, %v1839
  %v1841 = vpop.f32.mrf.mxu0
  %1842 = vdwg.mxu0
  %vm1843 = vcmask 125952
  %1844 = vst.msk [vmem:[%s3] sm:$0xf] %vm1843, %v1251
  %1845 = vst.msk [vmem:[%s3 + $0x4] sm:$0xf] %vm1843, %v1270
  %1846 = vst.msk [vmem:[%s3 + $0x8] sm:$0xf] %vm1843, %v1289
  %1847 = vst.msk [vmem:[%s3 + $0xc] sm:$0xf] %vm1843, %v1308
  %1848 = vst.msk [vmem:[%s3 + $0x10] sm:$0xf] %vm1843, %v1327
  %1849 = vst.msk [vmem:[%s3 + $0x14] sm:$0xf] %vm1843, %v1346
  %1850 = vst.msk [vmem:[%s3 + $0x18] sm:$0xf] %vm1843, %v1365
  %1851 = vst.msk [vmem:[%s3 + $0x1c] sm:$0xf] %vm1843, %v1384
  %1852 = vst.msk [vmem:[%s3 + $0x20] sm:$0xf] %vm1843, %v1403
  %1853 = vst.msk [vmem:[%s3 + $0x24] sm:$0xf] %vm1843, %v1422
  %1854 = vst.msk [vmem:[%s3 + $0x28] sm:$0xf] %vm1843, %v1441
  %1855 = vst.msk [vmem:[%s3 + $0x2c] sm:$0xf] %vm1843, %v1460
  %1856 = vst.msk [vmem:[%s3 + $0x30] sm:$0xf] %vm1843, %v1479
  %1857 = vst.msk [vmem:[%s3 + $0x34] sm:$0xf] %vm1843, %v1498
  %1858 = vst.msk [vmem:[%s3 + $0x38] sm:$0xf] %vm1843, %v1517
  %1859 = vst.msk [vmem:[%s3 + $0x3c] sm:$0xf] %vm1843, %v1536
  %1860 = vst.msk [vmem:[%s3 + $0x40] sm:$0xf] %vm1843, %v1555
  %1861 = vst.msk [vmem:[%s3 + $0x44] sm:$0xf] %vm1843, %v1574
  %1862 = vst.msk [vmem:[%s3 + $0x48] sm:$0xf] %vm1843, %v1593
  %1863 = vst.msk [vmem:[%s3 + $0x4c] sm:$0xf] %vm1843, %v1612
  %1864 = vst.msk [vmem:[%s3 + $0x50] sm:$0xf] %vm1843, %v1631
  %1865 = vst.msk [vmem:[%s3 + $0x54] sm:$0xf] %vm1843, %v1650
  %1866 = vst.msk [vmem:[%s3 + $0x58] sm:$0xf] %vm1843, %v1669
  %1867 = vst.msk [vmem:[%s3 + $0x5c] sm:$0xf] %vm1843, %v1688
  %1868 = vst.msk [vmem:[%s3 + $0x60] sm:$0xf] %vm1843, %v1707
  %1869 = vst.msk [vmem:[%s3 + $0x64] sm:$0xf] %vm1843, %v1726
  %1870 = vst.msk [vmem:[%s3 + $0x68] sm:$0xf] %vm1843, %v1745
  %1871 = vst.msk [vmem:[%s3 + $0x6c] sm:$0xf] %vm1843, %v1764
  %1872 = vst.msk [vmem:[%s3 + $0x70] sm:$0xf] %vm1843, %v1783
  %1873 = vst.msk [vmem:[%s3 + $0x74] sm:$0xf] %vm1843, %v1802
  %1874 = vst.msk [vmem:[%s3 + $0x78] sm:$0xf] %vm1843, %v1821
  %1875 = vst.msk [vmem:[%s3 + $0x7c] sm:$0xf] %vm1843, %v1840
  // Predicated region
  $region14: #{gconv_transformer_forward.32} parent=0 // pred_check
    _
  $region15: #{gconv_transformer_forward.32} parent=0 // pred_check_branch
    %1877 = sbr.rel (0) target = $region17
  $region16: #{gconv_transformer_forward.32} parent=0 // pred_region
    _
  $region17: #{gconv_transformer_forward.32} parent=0 // pred_fallthru
    _
  // Predicated region
  $region18: #{gconv_transformer_forward.32} parent=0 // pred_check
    _
  $region19: #{gconv_transformer_forward.32} parent=0 // pred_check_branch
    %1879 = sbr.rel (0) target = $region21
  $region20: #{gconv_transformer_forward.32} parent=0 // pred_region
    _
  $region21: #{gconv_transformer_forward.32} parent=0 // pred_fallthru
    _

</llo_original>
